<compile_context>
chip_gen: v7x
topology: tpu7x:2x2x1
jax: 0.10.0
libtpu: 0.0.40
codegen_flags: <defaults>
</compile_context>

<pallas_src>
import functools

import jax
import jax.numpy as jnp
from jax.experimental import pallas as pl
from jax.experimental.pallas import tpu as pltpu


def _cda_kernel(q_ref, kc_ref, kd_ref, v_ref, tile_ref, seg_ref, exp_ref, gat_ref,
                out_ref, logit_ref, *, inv_temp):
    f32 = jnp.float32
    # q pre-scaled by 1/temperature once per block (feeds both logit paths).
    q = q_ref[...].astype(f32) * inv_temp             # (Bb, D)
    kc = kc_ref[...].astype(f32)                       # (Bb, F)   F = L*D, flat
    kd = kd_ref[...].astype(f32)                       # (Bb, F)
    v = v_ref[...].astype(f32)                         # (Bb, F)

    tile_m = tile_ref[...]                             # (D, F): tile q over l
    seg_m = seg_ref[...]                               # (F, L): per-segment d-sum
    exp_m = exp_ref[...]                               # (L, F): broadcast over d
    gat_m = gat_ref[...]                               # (F, D): sum over l at fixed d

    # q_t[b, l*D+d] = q[b, d]  (MXU broadcast into the flat layout).
    q_t = jnp.dot(q, tile_m, preferred_element_type=f32)          # (Bb, F)

    # Collect logits: s[b, l] = sum_d q[b, d] * kc[b, l, d]  (MXU segment reduce).
    s = jnp.dot(kc * q_t, seg_m, preferred_element_type=f32)      # (Bb, L)
    logit_ref[...] = s.astype(logit_ref.dtype)

    # Softmax over L (dim=2 of the PyTorch module).
    m = jnp.max(s, axis=-1, keepdims=True)
    e = jnp.exp(s - m)
    p = e * pl.reciprocal(jnp.sum(e, axis=-1, keepdims=True), approx=True)
    # TODO(synk): dropout_c treated as identity (inference mode).

    # attn[b, d] = sum_l p[b, l] * v[b, l, d]
    p_t = jnp.dot(p, exp_m, preferred_element_type=f32)            # (Bb, F)
    attn = jnp.dot(p_t * v, gat_m, preferred_element_type=f32)     # (Bb, D)

    # Diffuse gate: sigmoid(sum_d kd[b,l,d] * q[b,d] / T)  (q already carries 1/T).
    dif_logit = jnp.dot(kd * q_t, seg_m, preferred_element_type=f32)   # (Bb, L)
    dif = pl.reciprocal(1.0 + jnp.exp(-dif_logit), approx=True)
    # TODO(synk): dropout_d treated as identity (inference mode).

    # out[b, l*D+d] = dif[b, l] * attn[b, d]  — built directly in the flat layout.
    out_ref[...] = (jnp.dot(dif, exp_m, preferred_element_type=f32) *
                    jnp.dot(attn, tile_m, preferred_element_type=f32)).astype(out_ref.dtype)


def _tpu_vmem_base_and_cores():
    """Best-effort (VMEM budget base, TensorCores-per-chip) query; safe fallbacks."""
    vmem_bytes = 64 * 1024 * 1024            # conservative default (v7x per-TC VMEM)
    n_cores = 1
    try:
        v = getattr(pltpu.get_tpu_info(), "vmem_capacity_bytes", None)
        if v:
            vmem_bytes = int(v)
    except Exception:
        pass
    try:
        if "v7" in jax.devices()[0].device_kind.lower():
            n_cores = 2
    except Exception:
        pass
    base = min(vmem_bytes, 96 * 1024 * 1024)
    if n_cores > 1:
        base = min(base, 56 * 1024 * 1024)    # 64 MiB VMEM per v7x TensorCore
    return base, n_cores


def _choose_block_b(B, L, D, itemsize, vmem_base, n_cores):
    """Largest batch tile that fits the per-generation VMEM budget."""
    F = L * D
    # Per batch row: double-buffered (3 input + 1 output) flat blocks in the I/O
    # dtype, q/logits rows (lane-padded to 128), plus ~6 live f32 temporaries.
    per_row = 2 * (4 * F * itemsize + 2 * 128 * itemsize) + 6 * F * 4
    # Four 0/1 routing matrices (lane-padded), double-buffered.
    const_bytes = 2 * 4 * F * (D + L + 2 * 128)
    budget = max(int(vmem_base * 0.45) - const_bytes, 1 << 20)
    bblk = max(1, budget // per_row)
    if n_cores > 1 and B > 8:
        bblk = min(bblk, -(-B // n_cores))    # keep >= n_cores grid steps on v7x
    if bblk >= B or B <= 8:
        return B                               # single block spanning the full batch
    return max(8, (bblk // 8) * 8)             # sublane-aligned partial tiles


def collect_diffuse_attention(q, kc, kd, v, temperature, *, block_b=None):
    """q: (B,1,D), kc/kd/v: (B,L,D) -> (output (B,L,D), attn_col_logit (B,L)).

    Dropout is treated as identity (inference / eval mode).
    """
    B, one, D = q.shape
    assert one == 1
    _, L, D2 = kc.shape
    assert D2 == D and kd.shape == kc.shape and v.shape == kc.shape
    F = L * D
    io_dtype = q.dtype
    itemsize = jnp.dtype(io_dtype).itemsize

    vmem_base, n_cores = _tpu_vmem_base_and_cores()
    if block_b is None:
        block_b = _choose_block_b(B, L, D, itemsize, vmem_base, n_cores)
    assert block_b == B or block_b % 8 == 0, "block_b must be 8-aligned or the full batch"
    grid = (pl.cdiv(B, block_b),)

    # Lane-dense flat views (contiguous reshapes: no HBM copies, no padding).
    q2 = q.reshape(B, D)
    kc_f = kc.reshape(B, F)
    kd_f = kd.reshape(B, F)
    v_f = v.reshape(B, F)

    # Constant 0/1 routing matrices for the MXU:
    #   tile_m[d, l*D+d'] = (d == d')   : (Bb,D) @ tile_m -> broadcast over l (flat)
    #   seg_m [l'*D+d, l] = (l' == l)   : (Bb,F) @ seg_m  -> per-segment sum over d
    #   exp_m = seg_m.T                 : (Bb,L) @ exp_m  -> broadcast over d (flat)
    #   gat_m = tile_m.T                : (Bb,F) @ gat_m  -> sum over l at fixed d
    jf = jnp.arange(F, dtype=jnp.int32)
    tile_m = (jf[None, :] % D == jnp.arange(D, dtype=jnp.int32)[:, None]).astype(jnp.float32)
    seg_m = (jf[:, None] // D == jnp.arange(L, dtype=jnp.int32)[None, :]).astype(jnp.float32)
    exp_m = seg_m.T
    gat_m = tile_m.T

    kernel = functools.partial(_cda_kernel, inv_temp=1.0 / float(temperature))

    cost = pl.CostEstimate(
        flops=B * (2 * F * (3 * D + 4 * L) + 4 * F),
        transcendentals=B * (2 * L + 1),
        bytes_accessed=itemsize * B * (4 * F + D + L) + 4 * F * (2 * D + 2 * L),
    )

    out_f, logits = pl.pallas_call(
        kernel,
        out_shape=(
            jax.ShapeDtypeStruct((B, F), io_dtype),
            jax.ShapeDtypeStruct((B, L), io_dtype),
        ),
        grid=grid,
        in_specs=[
            pl.BlockSpec((block_b, D), lambda i: (i, 0)),
            pl.BlockSpec((block_b, F), lambda i: (i, 0)),
            pl.BlockSpec((block_b, F), lambda i: (i, 0)),
            pl.BlockSpec((block_b, F), lambda i: (i, 0)),
            # Routing constants: same block every step -> DMA'd once, then reused.
            pl.BlockSpec((D, F), lambda i: (0, 0)),
            pl.BlockSpec((F, L), lambda i: (0, 0)),
            pl.BlockSpec((L, F), lambda i: (0, 0)),
            pl.BlockSpec((F, D), lambda i: (0, 0)),
        ],
        out_specs=(
            pl.BlockSpec((block_b, F), lambda i: (i, 0)),
            pl.BlockSpec((block_b, L), lambda i: (i, 0)),
        ),
        compiler_params=pltpu.CompilerParams(
            dimension_semantics=("parallel",),
            vmem_limit_bytes=int(vmem_base * 0.85),
        ),
        cost_estimate=cost,
    )(q2, kc_f, kd_f, v_f, tile_m, seg_m, exp_m, gat_m)

    return out_f.reshape(B, L, D), logits


def _reference(q, kc, kd, v, temperature):
    attn_col_logit = jnp.einsum("bqd,bkd->bqk", q, kc) / temperature
    attn_col = jax.nn.softmax(attn_col_logit, axis=2)
    attn = jnp.einsum("bqk,bkd->bqd", attn_col, v)
    attn_dif = jax.nn.sigmoid(jnp.einsum("bkd,bqd->bkq", kd, q) / temperature)
    output = jnp.einsum("bkq,bqd->bkd", attn_dif, attn)
    return output, attn_col_logit.squeeze(1)


def _run_case(key, B, L, D, temperature, block_b=None):
    kq, kkc, kkd, kv = jax.random.split(key, 4)
    q = jax.random.normal(kq, (B, 1, D), dtype=jnp.float32)
    kc = jax.random.normal(kkc, (B, L, D), dtype=jnp.float32)
    kd = jax.random.normal(kkd, (B, L, D), dtype=jnp.float32)
    v = jax.random.normal(kv, (B, L, D), dtype=jnp.float32)

    out, logits = collect_diffuse_attention(q, kc, kd, v, temperature, block_b=block_b)
    jax.block_until_ready((out, logits))

    ref_out, ref_logits = _reference(q, kc, kd, v, temperature)
    assert out.shape == (B, L, D) and logits.shape == (B, L)
    # MXU f32 matmuls may run with bf16 passes and the softmax/sigmoid use the
    # EUP approximate reciprocal, so compare at a correspondingly loose tolerance.
    assert jnp.allclose(out, ref_out, atol=1e-2, rtol=1e-2), \
        float(jnp.max(jnp.abs(out - ref_out)))
    assert jnp.allclose(logits, ref_logits, atol=1e-2, rtol=1e-2), \
        float(jnp.max(jnp.abs(logits - ref_logits)))


if __name__ == "__main__":
    key = jax.random.PRNGKey(0)
    L, D = 64, 32                      # L = h*w (e.g. 8*8), D = d_o
    temperature = float(D) ** 0.5

    k1, k2, k3 = jax.random.split(key, 3)
    # Small case: single block spanning the full batch.
    _run_case(k1, 8, L, D, temperature)
    # Larger case: auto block selection (1 block on v5e/v6e, >=2 steps on v7x).
    _run_case(k2, 24, L, D, temperature)
    # Forced batch tiling: 3 grid steps, exercises constant-block reuse + parallel grid.
    _run_case(k3, 24, L, D, temperature, block_b=8)

    print("KERNEL_OK")
</pallas_src>

<mosaic_0001>
module attributes {stable_mosaic.version = 11 : i64} {
  func.func @_cda_kernel(%arg0: i32, %arg1: memref<8x32xf32, #tpu.memory_space<vmem>>, %arg2: memref<8x2048xf32, #tpu.memory_space<vmem>>, %arg3: memref<8x2048xf32, #tpu.memory_space<vmem>>, %arg4: memref<8x2048xf32, #tpu.memory_space<vmem>>, %arg5: memref<32x2048xf32, #tpu.memory_space<vmem>>, %arg6: memref<2048x64xf32, #tpu.memory_space<vmem>>, %arg7: memref<64x2048xf32, #tpu.memory_space<vmem>>, %arg8: memref<2048x32xf32, #tpu.memory_space<vmem>>, %arg9: memref<8x2048xf32, #tpu.memory_space<vmem>>, %arg10: memref<8x64xf32, #tpu.memory_space<vmem>>) attributes {dimension_semantics = [#tpu.dimension_semantics<parallel>], iteration_bounds = array<i64: 1>, scalar_prefetch = 0 : i64, scratch_operands = 0 : i64, tpu.core_type = #tpu.core_type<tc>, window_params = [{transform_indices = @transform_0, window_bounds = array<i64: 8, 32>}, {transform_indices = @transform_1, window_bounds = array<i64: 8, 2048>}, {transform_indices = @transform_2, window_bounds = array<i64: 8, 2048>}, {transform_indices = @transform_3, window_bounds = array<i64: 8, 2048>}, {pipeline_mode = #tpu.pipeline_mode<synchronous>, transform_indices = @transform_4, window_bounds = array<i64: 32, 2048>}, {pipeline_mode = #tpu.pipeline_mode<synchronous>, transform_indices = @transform_5, window_bounds = array<i64: 2048, 64>}, {pipeline_mode = #tpu.pipeline_mode<synchronous>, transform_indices = @transform_6, window_bounds = array<i64: 64, 2048>}, {pipeline_mode = #tpu.pipeline_mode<synchronous>, transform_indices = @transform_7, window_bounds = array<i64: 2048, 32>}, {transform_indices = @transform_8, window_bounds = array<i64: 8, 2048>}, {transform_indices = @transform_9, window_bounds = array<i64: 8, 64>}]} {
    %c0 = arith.constant 0 : index
    %c0_0 = arith.constant 0 : index
    %0 = vector.load %arg1[%c0, %c0_0] : memref<8x32xf32, #tpu.memory_space<vmem>>, vector<8x32xf32>
    %cst = arith.constant 0.176776692 : f32
    %1 = vector.broadcast %cst : f32 to vector<8x32xf32>
    %2 = arith.mulf %0, %1 : vector<8x32xf32>
    %c0_1 = arith.constant 0 : index
    %c0_2 = arith.constant 0 : index
    %3 = vector.load %arg2[%c0_1, %c0_2] : memref<8x2048xf32, #tpu.memory_space<vmem>>, vector<8x2048xf32>
    %c0_3 = arith.constant 0 : index
    %c0_4 = arith.constant 0 : index
    %4 = vector.load %arg3[%c0_3, %c0_4] : memref<8x2048xf32, #tpu.memory_space<vmem>>, vector<8x2048xf32>
    %c0_5 = arith.constant 0 : index
    %c0_6 = arith.constant 0 : index
    %5 = vector.load %arg4[%c0_5, %c0_6] : memref<8x2048xf32, #tpu.memory_space<vmem>>, vector<8x2048xf32>
    %c0_7 = arith.constant 0 : index
    %c0_8 = arith.constant 0 : index
    %6 = vector.load %arg5[%c0_7, %c0_8] : memref<32x2048xf32, #tpu.memory_space<vmem>>, vector<32x2048xf32>
    %c0_9 = arith.constant 0 : index
    %c0_10 = arith.constant 0 : index
    %7 = vector.load %arg6[%c0_9, %c0_10] : memref<2048x64xf32, #tpu.memory_space<vmem>>, vector<2048x64xf32>
    %c0_11 = arith.constant 0 : index
    %c0_12 = arith.constant 0 : index
    %8 = vector.load %arg7[%c0_11, %c0_12] : memref<64x2048xf32, #tpu.memory_space<vmem>>, vector<64x2048xf32>
    %c0_13 = arith.constant 0 : index
    %c0_14 = arith.constant 0 : index
    %9 = vector.load %arg8[%c0_13, %c0_14] : memref<2048x32xf32, #tpu.memory_space<vmem>>, vector<2048x32xf32>
    %cst_15 = arith.constant dense<0.000000e+00> : vector<8x2048xf32>
    %10 = tpu.matmul %2, %6, %cst_15 {dimension_numbers = #tpu.dot_dimension_numbers<[1], [0], [0], [1], [0, 0, 1, 1], [], []>} : vector<8x32xf32>, vector<32x2048xf32>, vector<8x2048xf32> -> vector<8x2048xf32>
    %11 = arith.mulf %3, %10 : vector<8x2048xf32>
    %cst_16 = arith.constant dense<0.000000e+00> : vector<8x64xf32>
    %12 = tpu.matmul %11, %7, %cst_16 {dimension_numbers = #tpu.dot_dimension_numbers<[1], [0], [0], [1], [0, 0, 1, 1], [], []>} : vector<8x2048xf32>, vector<2048x64xf32>, vector<8x64xf32> -> vector<8x64xf32>
    %c0_17 = arith.constant 0 : index
    %c0_18 = arith.constant 0 : index
    %13 = vector.load %arg10[%c0_17, %c0_18] : memref<8x64xf32, #tpu.memory_space<vmem>>, vector<8x64xf32>
    tpu.vector_store %arg10[%c0_17, %c0_18], %12 {strides = array<i32>} : memref<8x64xf32, #tpu.memory_space<vmem>>, vector<8x64xf32>,
    %cst_19 = arith.constant dense<0xFF800000> : vector<8xf32>
    %14 = vector.multi_reduction <maximumf>, %12, %cst_19 [1] : vector<8x64xf32> to vector<8xf32>
    %15 = vector.shape_cast %14 : vector<8xf32> to vector<8x1xf32>
    %16 = vector.broadcast %15 : vector<8x1xf32> to vector<8x64xf32>
    %17 = arith.subf %12, %16 : vector<8x64xf32>
    %18 = math.exp %17 : vector<8x64xf32>
    %cst_20 = arith.constant dense<0.000000e+00> : vector<8xf32>
    %19 = vector.multi_reduction <add>, %18, %cst_20 [1] : vector<8x64xf32> to vector<8xf32>
    %20 = vector.shape_cast %19 : vector<8xf32> to vector<8x1xf32>
    %21 = tpu.reciprocal %20 {approx = true} : vector<8x1xf32> -> vector<8x1xf32>
    %22 = vector.broadcast %21 : vector<8x1xf32> to vector<8x64xf32>
    %23 = arith.mulf %18, %22 : vector<8x64xf32>
    %cst_21 = arith.constant dense<0.000000e+00> : vector<8x2048xf32>
    %24 = tpu.matmul %23, %8, %cst_21 {dimension_numbers = #tpu.dot_dimension_numbers<[1], [0], [0], [1], [0, 0, 1, 1], [], []>} : vector<8x64xf32>, vector<64x2048xf32>, vector<8x2048xf32> -> vector<8x2048xf32>
    %25 = arith.mulf %24, %5 : vector<8x2048xf32>
    %cst_22 = arith.constant dense<0.000000e+00> : vector<8x32xf32>
    %26 = tpu.matmul %25, %9, %cst_22 {dimension_numbers = #tpu.dot_dimension_numbers<[1], [0], [0], [1], [0, 0, 1, 1], [], []>} : vector<8x2048xf32>, vector<2048x32xf32>, vector<8x32xf32> -> vector<8x32xf32>
    %27 = arith.mulf %4, %10 : vector<8x2048xf32>
    %cst_23 = arith.constant dense<0.000000e+00> : vector<8x64xf32>
    %28 = tpu.matmul %27, %7, %cst_23 {dimension_numbers = #tpu.dot_dimension_numbers<[1], [0], [0], [1], [0, 0, 1, 1], [], []>} : vector<8x2048xf32>, vector<2048x64xf32>, vector<8x64xf32> -> vector<8x64xf32>
    %cst_24 = arith.constant 0.000000e+00 : f32
    %29 = vector.broadcast %cst_24 : f32 to vector<8x64xf32>
    %30 = arith.subf %29, %28 : vector<8x64xf32>
    %31 = math.exp %30 : vector<8x64xf32>
    %cst_25 = arith.constant 1.000000e+00 : f32
    %32 = vector.broadcast %cst_25 : f32 to vector<8x64xf32>
    %33 = arith.addf %32, %31 : vector<8x64xf32>
    %34 = tpu.reciprocal %33 {approx = true} : vector<8x64xf32> -> vector<8x64xf32>
    %cst_26 = arith.constant dense<0.000000e+00> : vector<8x2048xf32>
    %35 = tpu.matmul %34, %8, %cst_26 {dimension_numbers = #tpu.dot_dimension_numbers<[1], [0], [0], [1], [0, 0, 1, 1], [], []>} : vector<8x64xf32>, vector<64x2048xf32>, vector<8x2048xf32> -> vector<8x2048xf32>
    %cst_27 = arith.constant dense<0.000000e+00> : vector<8x2048xf32>
    %36 = tpu.matmul %26, %6, %cst_27 {dimension_numbers = #tpu.dot_dimension_numbers<[1], [0], [0], [1], [0, 0, 1, 1], [], []>} : vector<8x32xf32>, vector<32x2048xf32>, vector<8x2048xf32> -> vector<8x2048xf32>
    %37 = arith.mulf %35, %36 : vector<8x2048xf32>
    %c0_28 = arith.constant 0 : index
    %c0_29 = arith.constant 0 : index
    %38 = vector.load %arg9[%c0_28, %c0_29] : memref<8x2048xf32, #tpu.memory_space<vmem>>, vector<8x2048xf32>
    tpu.vector_store %arg9[%c0_28, %c0_29], %37 {strides = array<i32>} : memref<8x2048xf32, #tpu.memory_space<vmem>>, vector<8x2048xf32>,
    return
  }
  func.func @transform_0(%arg0: i32) -> (i32, i32) {
    %c0_i32 = arith.constant 0 : i32
    %c0_i32_0 = arith.constant 0 : i32
    return %arg0, %c0_i32 : i32, i32
  }
  func.func @transform_1(%arg0: i32) -> (i32, i32) {
    %c0_i32 = arith.constant 0 : i32
    %c0_i32_0 = arith.constant 0 : i32
    return %arg0, %c0_i32 : i32, i32
  }
  func.func @transform_2(%arg0: i32) -> (i32, i32) {
    %c0_i32 = arith.constant 0 : i32
    %c0_i32_0 = arith.constant 0 : i32
    return %arg0, %c0_i32 : i32, i32
  }
  func.func @transform_3(%arg0: i32) -> (i32, i32) {
    %c0_i32 = arith.constant 0 : i32
    %c0_i32_0 = arith.constant 0 : i32
    return %arg0, %c0_i32 : i32, i32
  }
  func.func @transform_4(%arg0: i32) -> (i32, i32) {
    %c0_i32 = arith.constant 0 : i32
    %c0_i32_0 = arith.constant 0 : i32
    %c0_i32_1 = arith.constant 0 : i32
    return %c0_i32, %c0_i32_0 : i32, i32
  }
  func.func @transform_5(%arg0: i32) -> (i32, i32) {
    %c0_i32 = arith.constant 0 : i32
    %c0_i32_0 = arith.constant 0 : i32
    %c0_i32_1 = arith.constant 0 : i32
    return %c0_i32, %c0_i32_0 : i32, i32
  }
  func.func @transform_6(%arg0: i32) -> (i32, i32) {
    %c0_i32 = arith.constant 0 : i32
    %c0_i32_0 = arith.constant 0 : i32
    %c0_i32_1 = arith.constant 0 : i32
    return %c0_i32, %c0_i32_0 : i32, i32
  }
  func.func @transform_7(%arg0: i32) -> (i32, i32) {
    %c0_i32 = arith.constant 0 : i32
    %c0_i32_0 = arith.constant 0 : i32
    %c0_i32_1 = arith.constant 0 : i32
    return %c0_i32, %c0_i32_0 : i32, i32
  }
  func.func @transform_8(%arg0: i32) -> (i32, i32) {
    %c0_i32 = arith.constant 0 : i32
    %c0_i32_0 = arith.constant 0 : i32
    return %arg0, %c0_i32 : i32, i32
  }
  func.func @transform_9(%arg0: i32) -> (i32, i32) {
    %c0_i32 = arith.constant 0 : i32
    %c0_i32_0 = arith.constant 0 : i32
    return %arg0, %c0_i32 : i32, i32
  }
}

</mosaic_0001>

<llo_original>
// kernel: tpu_custom_call.1
$region0: #{tpu_custom_call.1}
  #allocation0 [shape = 'u32[]', space=smem, size = 0x4, offset = 0x4, fixed_abs, tag = 'smem constant byte address 0x4 - core index']
  #allocation1 [shape = 'u32[144,128]{1,0:T(1,128)}', space=vmem, size = 0x12000, scoped, tag = 'internal scratch']
  %s0 = inlined_call_operand.vmem [shape: f32[8,32], index: 0, kind: input, shape index: {}]
  %s1 = inlined_call_operand.vmem [shape: f32[8,2048], index: 1, kind: input, shape index: {}]
  %s2 = inlined_call_operand.vmem [shape: f32[8,2048], index: 2, kind: input, shape index: {}]
  %s3 = inlined_call_operand.vmem [shape: f32[8,2048], index: 3, kind: input, shape index: {}]
  %s4 = inlined_call_operand.vmem [shape: f32[32,2048], index: 4, kind: input, shape index: {}]
  %s5 = inlined_call_operand.vmem [shape: f32[2048,64], index: 5, kind: input, shape index: {}]
  %s6 = inlined_call_operand.vmem [shape: f32[64,2048], index: 6, kind: input, shape index: {}]
  %s7 = inlined_call_operand.vmem [shape: f32[2048,32], index: 7, kind: input, shape index: {}]
  %s8 = inlined_call_operand.hbm [shape: f32[8,2048], index: 8, kind: output, shape index: {0}]
  %s9 = inlined_call_operand.hbm [shape: f32[8,64], index: 9, kind: output, shape index: {1}]
  %10 = xla_tuple %s8, %s9
  %s11 = sld [smem:[#allocation0]]
  $region50: #{tpu_custom_call.1} parent=0
    _
  %s13 = ssub.s32 1, %s11
  %s14 = scalar_select 0, %s13, %s11
  $region1: #{tpu_custom_call.1} parent=0
    #allocation2 [shape = 'u8[65536]{0}', space=vmem, size = 0x10000, scoped, tag = 'output window, operand 0, single buffered']
    #allocation3 [shape = 's32[1]{0}', space=sflag, size = 0x4, scoped, tag = 'scoped memory for tpu_custom_call.1']
    #allocation4 [shape = 'u8[4096]{0}', space=vmem, size = 0x1000, scoped, tag = 'output window, operand 1, single buffered']
    #allocation5 [shape = 's32[1]{0}', space=sflag, size = 0x4, scoped, tag = 'scoped memory for tpu_custom_call.1']
    %15 = vsyncpa [#allocation3], 0
    %16 = vsyncpa [#allocation5], 0
    // Predicated region
    $region2: #{tpu_custom_call.1} parent=1 // pred_check
      _
    $region3: #{tpu_custom_call.1} parent=1 // pred_check_branch
      %18 = sbr.rel (0) target = $region5
    $region4: #{tpu_custom_call.1} parent=1 // pred_region
      _
    $region5: #{tpu_custom_call.1} parent=1 // pred_fallthru
      _
    // Predicated region
    $region6: #{tpu_custom_call.1} parent=1 // pred_check
      _
    $region7: #{tpu_custom_call.1} parent=1 // pred_check_branch
      %20 = sbr.rel (0) target = $region9
    $region8: #{tpu_custom_call.1} parent=1 // pred_region
      _
    $region9: #{tpu_custom_call.1} parent=1 // pred_fallthru
      _
    // Predicated region
    $region10: #{tpu_custom_call.1} parent=1 // pred_check
      _
    $region11: #{tpu_custom_call.1} parent=1 // pred_check_branch
      %22 = sbr.rel (0) target = $region13
    $region12: #{tpu_custom_call.1} parent=1 // pred_region
      _
    $region13: #{tpu_custom_call.1} parent=1 // pred_fallthru
      _
    // Predicated region
    $region14: #{tpu_custom_call.1} parent=1 // pred_check
      _
    $region15: #{tpu_custom_call.1} parent=1 // pred_check_branch
      %24 = sbr.rel (0) target = $region17
    $region16: #{tpu_custom_call.1} parent=1 // pred_region
      _
    $region17: #{tpu_custom_call.1} parent=1 // pred_fallthru
      _
    // Predicated region
    $region18: #{tpu_custom_call.1} parent=1 // pred_check
      _
    $region19: #{tpu_custom_call.1} parent=1 // pred_check_branch
      %26 = sbr.rel (0) target = $region21
    $region20: #{tpu_custom_call.1} parent=1 // pred_region
      _
    $region21: #{tpu_custom_call.1} parent=1 // pred_fallthru
      _
    // Predicated region
    $region22: #{tpu_custom_call.1} parent=1 // pred_check
      _
    $region23: #{tpu_custom_call.1} parent=1 // pred_check_branch
      %28 = sbr.rel (0) target = $region25
    $region24: #{tpu_custom_call.1} parent=1 // pred_region
      _
    $region25: #{tpu_custom_call.1} parent=1 // pred_fallthru
      _
    // Predicated region
    $region26: #{tpu_custom_call.1} parent=1 // pred_check
      _
    $region27: #{tpu_custom_call.1} parent=1 // pred_check_branch
      %30 = sbr.rel (0) target = $region29
    $region28: #{tpu_custom_call.1} parent=1 // pred_region
      _
    $region29: #{tpu_custom_call.1} parent=1 // pred_fallthru
      _
    // Predicated region
    $region30: #{tpu_custom_call.1} parent=1 // pred_check
      _
    $region31: #{tpu_custom_call.1} parent=1 // pred_check_branch
      %32 = sbr.rel (0) target = $region33
    $region32: #{tpu_custom_call.1} parent=1 // pred_region
      _
    $region33: #{tpu_custom_call.1} parent=1 // pred_fallthru
      _
    %v33 = vld [vmem:[%s0] sm:$0xff]
    %v34 = vmul.f32 %v33, 0.17677669
    %v35 = vld [vmem:[%s1] sm:$0xff]
    %v36 = vld [vmem:[%s1 + $0x8] sm:$0xff]
    %v37 = vld [vmem:[%s1 + $0x10] sm:$0xff]
    %v38 = vld [vmem:[%s1 + $0x18] sm:$0xff]
    %v39 = vld [vmem:[%s1 + $0x20] sm:$0xff]
    %v40 = vld [vmem:[%s1 + $0x28] sm:$0xff]
    %v41 = vld [vmem:[%s1 + $0x30] sm:$0xff]
    %v42 = vld [vmem:[%s1 + $0x38] sm:$0xff]
    %v43 = vld [vmem:[%s1 + $0x40] sm:$0xff]
    %v44 = vld [vmem:[%s1 + $0x48] sm:$0xff]
    %v45 = vld [vmem:[%s1 + $0x50] sm:$0xff]
    %v46 = vld [vmem:[%s1 + $0x58] sm:$0xff]
    %v47 = vld [vmem:[%s1 + $0x60] sm:$0xff]
    %v48 = vld [vmem:[%s1 + $0x68] sm:$0xff]
    %v49 = vld [vmem:[%s1 + $0x70] sm:$0xff]
    %v50 = vld [vmem:[%s1 + $0x78] sm:$0xff]
    %v51 = vld [vmem:[%s2] sm:$0xff]
    %v52 = vld [vmem:[%s2 + $0x8] sm:$0xff]
    %v53 = vld [vmem:[%s2 + $0x10] sm:$0xff]
    %v54 = vld [vmem:[%s2 + $0x18] sm:$0xff]
    %v55 = vld [vmem:[%s2 + $0x20] sm:$0xff]
    %v56 = vld [vmem:[%s2 + $0x28] sm:$0xff]
    %v57 = vld [vmem:[%s2 + $0x30] sm:$0xff]
    %v58 = vld [vmem:[%s2 + $0x38] sm:$0xff]
    %v59 = vld [vmem:[%s2 + $0x40] sm:$0xff]
    %v60 = vld [vmem:[%s2 + $0x48] sm:$0xff]
    %v61 = vld [vmem:[%s2 + $0x50] sm:$0xff]
    %v62 = vld [vmem:[%s2 + $0x58] sm:$0xff]
    %v63 = vld [vmem:[%s2 + $0x60] sm:$0xff]
    %v64 = vld [vmem:[%s2 + $0x68] sm:$0xff]
    %v65 = vld [vmem:[%s2 + $0x70] sm:$0xff]
    %v66 = vld [vmem:[%s2 + $0x78] sm:$0xff]
    %v67 = vld [vmem:[%s3] sm:$0xff]
    %v68 = vld [vmem:[%s3 + $0x8] sm:$0xff]
    %v69 = vld [vmem:[%s3 + $0x10] sm:$0xff]
    %v70 = vld [vmem:[%s3 + $0x18] sm:$0xff]
    %v71 = vld [vmem:[%s3 + $0x20] sm:$0xff]
    %v72 = vld [vmem:[%s3 + $0x28] sm:$0xff]
    %v73 = vld [vmem:[%s3 + $0x30] sm:$0xff]
    %v74 = vld [vmem:[%s3 + $0x38] sm:$0xff]
    %v75 = vld [vmem:[%s3 + $0x40] sm:$0xff]
    %v76 = vld [vmem:[%s3 + $0x48] sm:$0xff]
    %v77 = vld [vmem:[%s3 + $0x50] sm:$0xff]
    %v78 = vld [vmem:[%s3 + $0x58] sm:$0xff]
    %v79 = vld [vmem:[%s3 + $0x60] sm:$0xff]
    %v80 = vld [vmem:[%s3 + $0x68] sm:$0xff]
    %v81 = vld [vmem:[%s3 + $0x70] sm:$0xff]
    %v82 = vld [vmem:[%s3 + $0x78] sm:$0xff]
    %v83 = vld [vmem:[%s4] sm:$0xff]
    %v84 = vld [vmem:[%s4 + $0x8] sm:$0xff]
    %v85 = vld [vmem:[%s4 + $0x10] sm:$0xff]
    %v86 = vld [vmem:[%s4 + $0x18] sm:$0xff]
    %v87 = vld [vmem:[%s4 + $0x20] sm:$0xff]
    %v88 = vld [vmem:[%s4 + $0x28] sm:$0xff]
    %v89 = vld [vmem:[%s4 + $0x30] sm:$0xff]
    %v90 = vld [vmem:[%s4 + $0x38] sm:$0xff]
    %v91 = vld [vmem:[%s4 + $0x40] sm:$0xff]
    %v92 = vld [vmem:[%s4 + $0x48] sm:$0xff]
    %v93 = vld [vmem:[%s4 + $0x50] sm:$0xff]
    %v94 = vld [vmem:[%s4 + $0x58] sm:$0xff]
    %v95 = vld [vmem:[%s4 + $0x60] sm:$0xff]
    %v96 = vld [vmem:[%s4 + $0x68] sm:$0xff]
    %v97 = vld [vmem:[%s4 + $0x70] sm:$0xff]
    %v98 = vld [vmem:[%s4 + $0x78] sm:$0xff]
    %v99 = vld [vmem:[%s4 + $0x80] sm:$0xff]
    %v100 = vld [vmem:[%s4 + $0x88] sm:$0xff]
    %v101 = vld [vmem:[%s4 + $0x90] sm:$0xff]
    %v102 = vld [vmem:[%s4 + $0x98] sm:$0xff]
    %v103 = vld [vmem:[%s4 + $0xa0] sm:$0xff]
    %v104 = vld [vmem:[%s4 + $0xa8] sm:$0xff]
    %v105 = vld [vmem:[%s4 + $0xb0] sm:$0xff]
    %v106 = vld [vmem:[%s4 + $0xb8] sm:$0xff]
    %v107 = vld [vmem:[%s4 + $0xc0] sm:$0xff]
    %v108 = vld [vmem:[%s4 + $0xc8] sm:$0xff]
    %v109 = vld [vmem:[%s4 + $0xd0] sm:$0xff]
    %v110 = vld [vmem:[%s4 + $0xd8] sm:$0xff]
    %v111 = vld [vmem:[%s4 + $0xe0] sm:$0xff]
    %v112 = vld [vmem:[%s4 + $0xe8] sm:$0xff]
    %v113 = vld [vmem:[%s4 + $0xf0] sm:$0xff]
    %v114 = vld [vmem:[%s4 + $0xf8] sm:$0xff]
    %v115 = vld [vmem:[%s4 + $0x100] sm:$0xff]
    %v116 = vld [vmem:[%s4 + $0x108] sm:$0xff]
    %v117 = vld [vmem:[%s4 + $0x110] sm:$0xff]
    %v118 = vld [vmem:[%s4 + $0x118] sm:$0xff]
    %v119 = vld [vmem:[%s4 + $0x120] sm:$0xff]
    %v120 = vld [vmem:[%s4 + $0x128] sm:$0xff]
    %v121 = vld [vmem:[%s4 + $0x130] sm:$0xff]
    %v122 = vld [vmem:[%s4 + $0x138] sm:$0xff]
    %v123 = vld [vmem:[%s4 + $0x140] sm:$0xff]
    %v124 = vld [vmem:[%s4 + $0x148] sm:$0xff]
    %v125 = vld [vmem:[%s4 + $0x150] sm:$0xff]
    %v126 = vld [vmem:[%s4 + $0x158] sm:$0xff]
    %v127 = vld [vmem:[%s4 + $0x160] sm:$0xff]
    %v128 = vld [vmem:[%s4 + $0x168] sm:$0xff]
    %v129 = vld [vmem:[%s4 + $0x170] sm:$0xff]
    %v130 = vld [vmem:[%s4 + $0x178] sm:$0xff]
    %v131 = vld [vmem:[%s4 + $0x180] sm:$0xff]
    %v132 = vld [vmem:[%s4 + $0x188] sm:$0xff]
    %v133 = vld [vmem:[%s4 + $0x190] sm:$0xff]
    %v134 = vld [vmem:[%s4 + $0x198] sm:$0xff]
    %v135 = vld [vmem:[%s4 + $0x1a0] sm:$0xff]
    %v136 = vld [vmem:[%s4 + $0x1a8] sm:$0xff]
    %v137 = vld [vmem:[%s4 + $0x1b0] sm:$0xff]
    %v138 = vld [vmem:[%s4 + $0x1b8] sm:$0xff]
    %v139 = vld [vmem:[%s4 + $0x1c0] sm:$0xff]
    %v140 = vld [vmem:[%s4 + $0x1c8] sm:$0xff]
    %v141 = vld [vmem:[%s4 + $0x1d0] sm:$0xff]
    %v142 = vld [vmem:[%s4 + $0x1d8] sm:$0xff]
    %v143 = vld [vmem:[%s4 + $0x1e0] sm:$0xff]
    %v144 = vld [vmem:[%s4 + $0x1e8] sm:$0xff]
    %v145 = vld [vmem:[%s4 + $0x1f0] sm:$0xff]
    %v146 = vld [vmem:[%s4 + $0x1f8] sm:$0xff]
    %v147 = vld [vmem:[%s5] sm:$0xff]
    %v148 = vld [vmem:[%s5 + $0x8] sm:$0xff]
    %v149 = vld [vmem:[%s5 + $0x10] sm:$0xff]
    %v150 = vld [vmem:[%s5 + $0x18] sm:$0xff]
    %v151 = vld [vmem:[%s5 + $0x20] sm:$0xff]
    %v152 = vld [vmem:[%s5 + $0x28] sm:$0xff]
    %v153 = vld [vmem:[%s5 + $0x30] sm:$0xff]
    %v154 = vld [vmem:[%s5 + $0x38] sm:$0xff]
    %v155 = vld [vmem:[%s5 + $0x40] sm:$0xff]
    %v156 = vld [vmem:[%s5 + $0x48] sm:$0xff]
    %v157 = vld [vmem:[%s5 + $0x50] sm:$0xff]
    %v158 = vld [vmem:[%s5 + $0x58] sm:$0xff]
    %v159 = vld [vmem:[%s5 + $0x60] sm:$0xff]
    %v160 = vld [vmem:[%s5 + $0x68] sm:$0xff]
    %v161 = vld [vmem:[%s5 + $0x70] sm:$0xff]
    %v162 = vld [vmem:[%s5 + $0x78] sm:$0xff]
    %v163 = vld [vmem:[%s5 + $0x80] sm:$0xff]
    %v164 = vld [vmem:[%s5 + $0x88] sm:$0xff]
    %v165 = vld [vmem:[%s5 + $0x90] sm:$0xff]
    %v166 = vld [vmem:[%s5 + $0x98] sm:$0xff]
    %v167 = vld [vmem:[%s5 + $0xa0] sm:$0xff]
    %v168 = vld [vmem:[%s5 + $0xa8] sm:$0xff]
    %v169 = vld [vmem:[%s5 + $0xb0] sm:$0xff]
    %v170 = vld [vmem:[%s5 + $0xb8] sm:$0xff]
    %v171 = vld [vmem:[%s5 + $0xc0] sm:$0xff]
    %v172 = vld [vmem:[%s5 + $0xc8] sm:$0xff]
    %v173 = vld [vmem:[%s5 + $0xd0] sm:$0xff]
    %v174 = vld [vmem:[%s5 + $0xd8] sm:$0xff]
    %v175 = vld [vmem:[%s5 + $0xe0] sm:$0xff]
    %v176 = vld [vmem:[%s5 + $0xe8] sm:$0xff]
    %v177 = vld [vmem:[%s5 + $0xf0] sm:$0xff]
    %v178 = vld [vmem:[%s5 + $0xf8] sm:$0xff]
    %v179 = vld [vmem:[%s5 + $0x100] sm:$0xff]
    %v180 = vld [vmem:[%s5 + $0x108] sm:$0xff]
    %v181 = vld [vmem:[%s5 + $0x110] sm:$0xff]
    %v182 = vld [vmem:[%s5 + $0x118] sm:$0xff]
    %v183 = vld [vmem:[%s5 + $0x120] sm:$0xff]
    %v184 = vld [vmem:[%s5 + $0x128] sm:$0xff]
    %v185 = vld [vmem:[%s5 + $0x130] sm:$0xff]
    %v186 = vld [vmem:[%s5 + $0x138] sm:$0xff]
    %v187 = vld [vmem:[%s5 + $0x140] sm:$0xff]
    %v188 = vld [vmem:[%s5 + $0x148] sm:$0xff]
    %v189 = vld [vmem:[%s5 + $0x150] sm:$0xff]
    %v190 = vld [vmem:[%s5 + $0x158] sm:$0xff]
    %v191 = vld [vmem:[%s5 + $0x160] sm:$0xff]
    %v192 = vld [vmem:[%s5 + $0x168] sm:$0xff]
    %v193 = vld [vmem:[%s5 + $0x170] sm:$0xff]
    %v194 = vld [vmem:[%s5 + $0x178] sm:$0xff]
    %v195 = vld [vmem:[%s5 + $0x180] sm:$0xff]
    %v196 = vld [vmem:[%s5 + $0x188] sm:$0xff]
    %v197 = vld [vmem:[%s5 + $0x190] sm:$0xff]
    %v198 = vld [vmem:[%s5 + $0x198] sm:$0xff]
    %v199 = vld [vmem:[%s5 + $0x1a0] sm:$0xff]
    %v200 = vld [vmem:[%s5 + $0x1a8] sm:$0xff]
    %v201 = vld [vmem:[%s5 + $0x1b0] sm:$0xff]
    %v202 = vld [vmem:[%s5 + $0x1b8] sm:$0xff]
    %v203 = vld [vmem:[%s5 + $0x1c0] sm:$0xff]
    %v204 = vld [vmem:[%s5 + $0x1c8] sm:$0xff]
    %v205 = vld [vmem:[%s5 + $0x1d0] sm:$0xff]
    %v206 = vld [vmem:[%s5 + $0x1d8] sm:$0xff]
    %v207 = vld [vmem:[%s5 + $0x1e0] sm:$0xff]
    %v208 = vld [vmem:[%s5 + $0x1e8] sm:$0xff]
    %v209 = vld [vmem:[%s5 + $0x1f0] sm:$0xff]
    %v210 = vld [vmem:[%s5 + $0x1f8] sm:$0xff]
    %v211 = vld [vmem:[%s5 + $0x200] sm:$0xff]
    %v212 = vld [vmem:[%s5 + $0x208] sm:$0xff]
    %v213 = vld [vmem:[%s5 + $0x210] sm:$0xff]
    %v214 = vld [vmem:[%s5 + $0x218] sm:$0xff]
    %v215 = vld [vmem:[%s5 + $0x220] sm:$0xff]
    %v216 = vld [vmem:[%s5 + $0x228] sm:$0xff]
    %v217 = vld [vmem:[%s5 + $0x230] sm:$0xff]
    %v218 = vld [vmem:[%s5 + $0x238] sm:$0xff]
    %v219 = vld [vmem:[%s5 + $0x240] sm:$0xff]
    %v220 = vld [vmem:[%s5 + $0x248] sm:$0xff]
    %v221 = vld [vmem:[%s5 + $0x250] sm:$0xff]
    %v222 = vld [vmem:[%s5 + $0x258] sm:$0xff]
    %v223 = vld [vmem:[%s5 + $0x260] sm:$0xff]
    %v224 = vld [vmem:[%s5 + $0x268] sm:$0xff]
    %v225 = vld [vmem:[%s5 + $0x270] sm:$0xff]
    %v226 = vld [vmem:[%s5 + $0x278] sm:$0xff]
    %v227 = vld [vmem:[%s5 + $0x280] sm:$0xff]
    %v228 = vld [vmem:[%s5 + $0x288] sm:$0xff]
    %v229 = vld [vmem:[%s5 + $0x290] sm:$0xff]
    %v230 = vld [vmem:[%s5 + $0x298] sm:$0xff]
    %v231 = vld [vmem:[%s5 + $0x2a0] sm:$0xff]
    %v232 = vld [vmem:[%s5 + $0x2a8] sm:$0xff]
    %v233 = vld [vmem:[%s5 + $0x2b0] sm:$0xff]
    %v234 = vld [vmem:[%s5 + $0x2b8] sm:$0xff]
    %v235 = vld [vmem:[%s5 + $0x2c0] sm:$0xff]
    %v236 = vld [vmem:[%s5 + $0x2c8] sm:$0xff]
    %v237 = vld [vmem:[%s5 + $0x2d0] sm:$0xff]
    %v238 = vld [vmem:[%s5 + $0x2d8] sm:$0xff]
    %v239 = vld [vmem:[%s5 + $0x2e0] sm:$0xff]
    %v240 = vld [vmem:[%s5 + $0x2e8] sm:$0xff]
    %v241 = vld [vmem:[%s5 + $0x2f0] sm:$0xff]
    %v242 = vld [vmem:[%s5 + $0x2f8] sm:$0xff]
    %v243 = vld [vmem:[%s5 + $0x300] sm:$0xff]
    %v244 = vld [vmem:[%s5 + $0x308] sm:$0xff]
    %v245 = vld [vmem:[%s5 + $0x310] sm:$0xff]
    %v246 = vld [vmem:[%s5 + $0x318] sm:$0xff]
    %v247 = vld [vmem:[%s5 + $0x320] sm:$0xff]
    %v248 = vld [vmem:[%s5 + $0x328] sm:$0xff]
    %v249 = vld [vmem:[%s5 + $0x330] sm:$0xff]
    %v250 = vld [vmem:[%s5 + $0x338] sm:$0xff]
    %v251 = vld [vmem:[%s5 + $0x340] sm:$0xff]
    %v252 = vld [vmem:[%s5 + $0x348] sm:$0xff]
    %v253 = vld [vmem:[%s5 + $0x350] sm:$0xff]
    %v254 = vld [vmem:[%s5 + $0x358] sm:$0xff]
    %v255 = vld [vmem:[%s5 + $0x360] sm:$0xff]
    %v256 = vld [vmem:[%s5 + $0x368] sm:$0xff]
    %v257 = vld [vmem:[%s5 + $0x370] sm:$0xff]
    %v258 = vld [vmem:[%s5 + $0x378] sm:$0xff]
    %v259 = vld [vmem:[%s5 + $0x380] sm:$0xff]
    %v260 = vld [vmem:[%s5 + $0x388] sm:$0xff]
    %v261 = vld [vmem:[%s5 + $0x390] sm:$0xff]
    %v262 = vld [vmem:[%s5 + $0x398] sm:$0xff]
    %v263 = vld [vmem:[%s5 + $0x3a0] sm:$0xff]
    %v264 = vld [vmem:[%s5 + $0x3a8] sm:$0xff]
    %v265 = vld [vmem:[%s5 + $0x3b0] sm:$0xff]
    %v266 = vld [vmem:[%s5 + $0x3b8] sm:$0xff]
    %v267 = vld [vmem:[%s5 + $0x3c0] sm:$0xff]
    %v268 = vld [vmem:[%s5 + $0x3c8] sm:$0xff]
    %v269 = vld [vmem:[%s5 + $0x3d0] sm:$0xff]
    %v270 = vld [vmem:[%s5 + $0x3d8] sm:$0xff]
    %v271 = vld [vmem:[%s5 + $0x3e0] sm:$0xff]
    %v272 = vld [vmem:[%s5 + $0x3e8] sm:$0xff]
    %v273 = vld [vmem:[%s5 + $0x3f0] sm:$0xff]
    %v274 = vld [vmem:[%s5 + $0x3f8] sm:$0xff]
    %v275 = vld [vmem:[%s5 + $0x400] sm:$0xff]
    %v276 = vld [vmem:[%s5 + $0x408] sm:$0xff]
    %v277 = vld [vmem:[%s5 + $0x410] sm:$0xff]
    %v278 = vld [vmem:[%s5 + $0x418] sm:$0xff]
    %v279 = vld [vmem:[%s5 + $0x420] sm:$0xff]
    %v280 = vld [vmem:[%s5 + $0x428] sm:$0xff]
    %v281 = vld [vmem:[%s5 + $0x430] sm:$0xff]
    %v282 = vld [vmem:[%s5 + $0x438] sm:$0xff]
    %v283 = vld [vmem:[%s5 + $0x440] sm:$0xff]
    %v284 = vld [vmem:[%s5 + $0x448] sm:$0xff]
    %v285 = vld [vmem:[%s5 + $0x450] sm:$0xff]
    %v286 = vld [vmem:[%s5 + $0x458] sm:$0xff]
    %v287 = vld [vmem:[%s5 + $0x460] sm:$0xff]
    %v288 = vld [vmem:[%s5 + $0x468] sm:$0xff]
    %v289 = vld [vmem:[%s5 + $0x470] sm:$0xff]
    %v290 = vld [vmem:[%s5 + $0x478] sm:$0xff]
    %v291 = vld [vmem:[%s5 + $0x480] sm:$0xff]
    %v292 = vld [vmem:[%s5 + $0x488] sm:$0xff]
    %v293 = vld [vmem:[%s5 + $0x490] sm:$0xff]
    %v294 = vld [vmem:[%s5 + $0x498] sm:$0xff]
    %v295 = vld [vmem:[%s5 + $0x4a0] sm:$0xff]
    %v296 = vld [vmem:[%s5 + $0x4a8] sm:$0xff]
    %v297 = vld [vmem:[%s5 + $0x4b0] sm:$0xff]
    %v298 = vld [vmem:[%s5 + $0x4b8] sm:$0xff]
    %v299 = vld [vmem:[%s5 + $0x4c0] sm:$0xff]
    %v300 = vld [vmem:[%s5 + $0x4c8] sm:$0xff]
    %v301 = vld [vmem:[%s5 + $0x4d0] sm:$0xff]
    %v302 = vld [vmem:[%s5 + $0x4d8] sm:$0xff]
    %v303 = vld [vmem:[%s5 + $0x4e0] sm:$0xff]
    %v304 = vld [vmem:[%s5 + $0x4e8] sm:$0xff]
    %v305 = vld [vmem:[%s5 + $0x4f0] sm:$0xff]
    %v306 = vld [vmem:[%s5 + $0x4f8] sm:$0xff]
    %v307 = vld [vmem:[%s5 + $0x500] sm:$0xff]
    %v308 = vld [vmem:[%s5 + $0x508] sm:$0xff]
    %v309 = vld [vmem:[%s5 + $0x510] sm:$0xff]
    %v310 = vld [vmem:[%s5 + $0x518] sm:$0xff]
    %v311 = vld [vmem:[%s5 + $0x520] sm:$0xff]
    %v312 = vld [vmem:[%s5 + $0x528] sm:$0xff]
    %v313 = vld [vmem:[%s5 + $0x530] sm:$0xff]
    %v314 = vld [vmem:[%s5 + $0x538] sm:$0xff]
    %v315 = vld [vmem:[%s5 + $0x540] sm:$0xff]
    %v316 = vld [vmem:[%s5 + $0x548] sm:$0xff]
    %v317 = vld [vmem:[%s5 + $0x550] sm:$0xff]
    %v318 = vld [vmem:[%s5 + $0x558] sm:$0xff]
    %v319 = vld [vmem:[%s5 + $0x560] sm:$0xff]
    %v320 = vld [vmem:[%s5 + $0x568] sm:$0xff]
    %v321 = vld [vmem:[%s5 + $0x570] sm:$0xff]
    %v322 = vld [vmem:[%s5 + $0x578] sm:$0xff]
    %v323 = vld [vmem:[%s5 + $0x580] sm:$0xff]
    %v324 = vld [vmem:[%s5 + $0x588] sm:$0xff]
    %v325 = vld [vmem:[%s5 + $0x590] sm:$0xff]
    %v326 = vld [vmem:[%s5 + $0x598] sm:$0xff]
    %v327 = vld [vmem:[%s5 + $0x5a0] sm:$0xff]
    %v328 = vld [vmem:[%s5 + $0x5a8] sm:$0xff]
    %v329 = vld [vmem:[%s5 + $0x5b0] sm:$0xff]
    %v330 = vld [vmem:[%s5 + $0x5b8] sm:$0xff]
    %v331 = vld [vmem:[%s5 + $0x5c0] sm:$0xff]
    %v332 = vld [vmem:[%s5 + $0x5c8] sm:$0xff]
    %v333 = vld [vmem:[%s5 + $0x5d0] sm:$0xff]
    %v334 = vld [vmem:[%s5 + $0x5d8] sm:$0xff]
    %v335 = vld [vmem:[%s5 + $0x5e0] sm:$0xff]
    %v336 = vld [vmem:[%s5 + $0x5e8] sm:$0xff]
    %v337 = vld [vmem:[%s5 + $0x5f0] sm:$0xff]
    %v338 = vld [vmem:[%s5 + $0x5f8] sm:$0xff]
    %v339 = vld [vmem:[%s5 + $0x600] sm:$0xff]
    %v340 = vld [vmem:[%s5 + $0x608] sm:$0xff]
    %v341 = vld [vmem:[%s5 + $0x610] sm:$0xff]
    %v342 = vld [vmem:[%s5 + $0x618] sm:$0xff]
    %v343 = vld [vmem:[%s5 + $0x620] sm:$0xff]
    %v344 = vld [vmem:[%s5 + $0x628] sm:$0xff]
    %v345 = vld [vmem:[%s5 + $0x630] sm:$0xff]
    %v346 = vld [vmem:[%s5 + $0x638] sm:$0xff]
    %v347 = vld [vmem:[%s5 + $0x640] sm:$0xff]
    %v348 = vld [vmem:[%s5 + $0x648] sm:$0xff]
    %v349 = vld [vmem:[%s5 + $0x650] sm:$0xff]
    %v350 = vld [vmem:[%s5 + $0x658] sm:$0xff]
    %v351 = vld [vmem:[%s5 + $0x660] sm:$0xff]
    %v352 = vld [vmem:[%s5 + $0x668] sm:$0xff]
    %v353 = vld [vmem:[%s5 + $0x670] sm:$0xff]
    %v354 = vld [vmem:[%s5 + $0x678] sm:$0xff]
    %v355 = vld [vmem:[%s5 + $0x680] sm:$0xff]
    %v356 = vld [vmem:[%s5 + $0x688] sm:$0xff]
    %v357 = vld [vmem:[%s5 + $0x690] sm:$0xff]
    %v358 = vld [vmem:[%s5 + $0x698] sm:$0xff]
    %v359 = vld [vmem:[%s5 + $0x6a0] sm:$0xff]
    %v360 = vld [vmem:[%s5 + $0x6a8] sm:$0xff]
    %v361 = vld [vmem:[%s5 + $0x6b0] sm:$0xff]
    %v362 = vld [vmem:[%s5 + $0x6b8] sm:$0xff]
    %v363 = vld [vmem:[%s5 + $0x6c0] sm:$0xff]
    %v364 = vld [vmem:[%s5 + $0x6c8] sm:$0xff]
    %v365 = vld [vmem:[%s5 + $0x6d0] sm:$0xff]
    %v366 = vld [vmem:[%s5 + $0x6d8] sm:$0xff]
    %v367 = vld [vmem:[%s5 + $0x6e0] sm:$0xff]
    %v368 = vld [vmem:[%s5 + $0x6e8] sm:$0xff]
    %v369 = vld [vmem:[%s5 + $0x6f0] sm:$0xff]
    %v370 = vld [vmem:[%s5 + $0x6f8] sm:$0xff]
    %v371 = vld [vmem:[%s5 + $0x700] sm:$0xff]
    %v372 = vld [vmem:[%s5 + $0x708] sm:$0xff]
    %v373 = vld [vmem:[%s5 + $0x710] sm:$0xff]
    %v374 = vld [vmem:[%s5 + $0x718] sm:$0xff]
    %v375 = vld [vmem:[%s5 + $0x720] sm:$0xff]
    %v376 = vld [vmem:[%s5 + $0x728] sm:$0xff]
    %v377 = vld [vmem:[%s5 + $0x730] sm:$0xff]
    %v378 = vld [vmem:[%s5 + $0x738] sm:$0xff]
    %v379 = vld [vmem:[%s5 + $0x740] sm:$0xff]
    %v380 = vld [vmem:[%s5 + $0x748] sm:$0xff]
    %v381 = vld [vmem:[%s5 + $0x750] sm:$0xff]
    %v382 = vld [vmem:[%s5 + $0x758] sm:$0xff]
    %v383 = vld [vmem:[%s5 + $0x760] sm:$0xff]
    %v384 = vld [vmem:[%s5 + $0x768] sm:$0xff]
    %v385 = vld [vmem:[%s5 + $0x770] sm:$0xff]
    %v386 = vld [vmem:[%s5 + $0x778] sm:$0xff]
    %v387 = vld [vmem:[%s5 + $0x780] sm:$0xff]
    %v388 = vld [vmem:[%s5 + $0x788] sm:$0xff]
    %v389 = vld [vmem:[%s5 + $0x790] sm:$0xff]
    %v390 = vld [vmem:[%s5 + $0x798] sm:$0xff]
    %v391 = vld [vmem:[%s5 + $0x7a0] sm:$0xff]
    %v392 = vld [vmem:[%s5 + $0x7a8] sm:$0xff]
    %v393 = vld [vmem:[%s5 + $0x7b0] sm:$0xff]
    %v394 = vld [vmem:[%s5 + $0x7b8] sm:$0xff]
    %v395 = vld [vmem:[%s5 + $0x7c0] sm:$0xff]
    %v396 = vld [vmem:[%s5 + $0x7c8] sm:$0xff]
    %v397 = vld [vmem:[%s5 + $0x7d0] sm:$0xff]
    %v398 = vld [vmem:[%s5 + $0x7d8] sm:$0xff]
    %v399 = vld [vmem:[%s5 + $0x7e0] sm:$0xff]
    %v400 = vld [vmem:[%s5 + $0x7e8] sm:$0xff]
    %v401 = vld [vmem:[%s5 + $0x7f0] sm:$0xff]
    %v402 = vld [vmem:[%s5 + $0x7f8] sm:$0xff]
    %v403 = vld [vmem:[%s6] sm:$0xff]
    %v404 = vld [vmem:[%s6 + $0x8] sm:$0xff]
    %v405 = vld [vmem:[%s6 + $0x10] sm:$0xff]
    %v406 = vld [vmem:[%s6 + $0x18] sm:$0xff]
    %v407 = vld [vmem:[%s6 + $0x20] sm:$0xff]
    %v408 = vld [vmem:[%s6 + $0x28] sm:$0xff]
    %v409 = vld [vmem:[%s6 + $0x30] sm:$0xff]
    %v410 = vld [vmem:[%s6 + $0x38] sm:$0xff]
    %v411 = vld [vmem:[%s6 + $0x40] sm:$0xff]
    %v412 = vld [vmem:[%s6 + $0x48] sm:$0xff]
    %v413 = vld [vmem:[%s6 + $0x50] sm:$0xff]
    %v414 = vld [vmem:[%s6 + $0x58] sm:$0xff]
    %v415 = vld [vmem:[%s6 + $0x60] sm:$0xff]
    %v416 = vld [vmem:[%s6 + $0x68] sm:$0xff]
    %v417 = vld [vmem:[%s6 + $0x70] sm:$0xff]
    %v418 = vld [vmem:[%s6 + $0x78] sm:$0xff]
    %v419 = vld [vmem:[%s6 + $0x80] sm:$0xff]
    %v420 = vld [vmem:[%s6 + $0x88] sm:$0xff]
    %v421 = vld [vmem:[%s6 + $0x90] sm:$0xff]
    %v422 = vld [vmem:[%s6 + $0x98] sm:$0xff]
    %v423 = vld [vmem:[%s6 + $0xa0] sm:$0xff]
    %v424 = vld [vmem:[%s6 + $0xa8] sm:$0xff]
    %v425 = vld [vmem:[%s6 + $0xb0] sm:$0xff]
    %v426 = vld [vmem:[%s6 + $0xb8] sm:$0xff]
    %v427 = vld [vmem:[%s6 + $0xc0] sm:$0xff]
    %v428 = vld [vmem:[%s6 + $0xc8] sm:$0xff]
    %v429 = vld [vmem:[%s6 + $0xd0] sm:$0xff]
    %v430 = vld [vmem:[%s6 + $0xd8] sm:$0xff]
    %v431 = vld [vmem:[%s6 + $0xe0] sm:$0xff]
    %v432 = vld [vmem:[%s6 + $0xe8] sm:$0xff]
    %v433 = vld [vmem:[%s6 + $0xf0] sm:$0xff]
    %v434 = vld [vmem:[%s6 + $0xf8] sm:$0xff]
    %v435 = vld [vmem:[%s6 + $0x100] sm:$0xff]
    %v436 = vld [vmem:[%s6 + $0x108] sm:$0xff]
    %v437 = vld [vmem:[%s6 + $0x110] sm:$0xff]
    %v438 = vld [vmem:[%s6 + $0x118] sm:$0xff]
    %v439 = vld [vmem:[%s6 + $0x120] sm:$0xff]
    %v440 = vld [vmem:[%s6 + $0x128] sm:$0xff]
    %v441 = vld [vmem:[%s6 + $0x130] sm:$0xff]
    %v442 = vld [vmem:[%s6 + $0x138] sm:$0xff]
    %v443 = vld [vmem:[%s6 + $0x140] sm:$0xff]
    %v444 = vld [vmem:[%s6 + $0x148] sm:$0xff]
    %v445 = vld [vmem:[%s6 + $0x150] sm:$0xff]
    %v446 = vld [vmem:[%s6 + $0x158] sm:$0xff]
    %v447 = vld [vmem:[%s6 + $0x160] sm:$0xff]
    %v448 = vld [vmem:[%s6 + $0x168] sm:$0xff]
    %v449 = vld [vmem:[%s6 + $0x170] sm:$0xff]
    %v450 = vld [vmem:[%s6 + $0x178] sm:$0xff]
    %v451 = vld [vmem:[%s6 + $0x180] sm:$0xff]
    %v452 = vld [vmem:[%s6 + $0x188] sm:$0xff]
    %v453 = vld [vmem:[%s6 + $0x190] sm:$0xff]
    %v454 = vld [vmem:[%s6 + $0x198] sm:$0xff]
    %v455 = vld [vmem:[%s6 + $0x1a0] sm:$0xff]
    %v456 = vld [vmem:[%s6 + $0x1a8] sm:$0xff]
    %v457 = vld [vmem:[%s6 + $0x1b0] sm:$0xff]
    %v458 = vld [vmem:[%s6 + $0x1b8] sm:$0xff]
    %v459 = vld [vmem:[%s6 + $0x1c0] sm:$0xff]
    %v460 = vld [vmem:[%s6 + $0x1c8] sm:$0xff]
    %v461 = vld [vmem:[%s6 + $0x1d0] sm:$0xff]
    %v462 = vld [vmem:[%s6 + $0x1d8] sm:$0xff]
    %v463 = vld [vmem:[%s6 + $0x1e0] sm:$0xff]
    %v464 = vld [vmem:[%s6 + $0x1e8] sm:$0xff]
    %v465 = vld [vmem:[%s6 + $0x1f0] sm:$0xff]
    %v466 = vld [vmem:[%s6 + $0x1f8] sm:$0xff]
    %v467 = vld [vmem:[%s6 + $0x200] sm:$0xff]
    %v468 = vld [vmem:[%s6 + $0x208] sm:$0xff]
    %v469 = vld [vmem:[%s6 + $0x210] sm:$0xff]
    %v470 = vld [vmem:[%s6 + $0x218] sm:$0xff]
    %v471 = vld [vmem:[%s6 + $0x220] sm:$0xff]
    %v472 = vld [vmem:[%s6 + $0x228] sm:$0xff]
    %v473 = vld [vmem:[%s6 + $0x230] sm:$0xff]
    %v474 = vld [vmem:[%s6 + $0x238] sm:$0xff]
    %v475 = vld [vmem:[%s6 + $0x240] sm:$0xff]
    %v476 = vld [vmem:[%s6 + $0x248] sm:$0xff]
    %v477 = vld [vmem:[%s6 + $0x250] sm:$0xff]
    %v478 = vld [vmem:[%s6 + $0x258] sm:$0xff]
    %v479 = vld [vmem:[%s6 + $0x260] sm:$0xff]
    %v480 = vld [vmem:[%s6 + $0x268] sm:$0xff]
    %v481 = vld [vmem:[%s6 + $0x270] sm:$0xff]
    %v482 = vld [vmem:[%s6 + $0x278] sm:$0xff]
    %v483 = vld [vmem:[%s6 + $0x280] sm:$0xff]
    %v484 = vld [vmem:[%s6 + $0x288] sm:$0xff]
    %v485 = vld [vmem:[%s6 + $0x290] sm:$0xff]
    %v486 = vld [vmem:[%s6 + $0x298] sm:$0xff]
    %v487 = vld [vmem:[%s6 + $0x2a0] sm:$0xff]
    %v488 = vld [vmem:[%s6 + $0x2a8] sm:$0xff]
    %v489 = vld [vmem:[%s6 + $0x2b0] sm:$0xff]
    %v490 = vld [vmem:[%s6 + $0x2b8] sm:$0xff]
    %v491 = vld [vmem:[%s6 + $0x2c0] sm:$0xff]
    %v492 = vld [vmem:[%s6 + $0x2c8] sm:$0xff]
    %v493 = vld [vmem:[%s6 + $0x2d0] sm:$0xff]
    %v494 = vld [vmem:[%s6 + $0x2d8] sm:$0xff]
    %v495 = vld [vmem:[%s6 + $0x2e0] sm:$0xff]
    %v496 = vld [vmem:[%s6 + $0x2e8] sm:$0xff]
    %v497 = vld [vmem:[%s6 + $0x2f0] sm:$0xff]
    %v498 = vld [vmem:[%s6 + $0x2f8] sm:$0xff]
    %v499 = vld [vmem:[%s6 + $0x300] sm:$0xff]
    %v500 = vld [vmem:[%s6 + $0x308] sm:$0xff]
    %v501 = vld [vmem:[%s6 + $0x310] sm:$0xff]
    %v502 = vld [vmem:[%s6 + $0x318] sm:$0xff]
    %v503 = vld [vmem:[%s6 + $0x320] sm:$0xff]
    %v504 = vld [vmem:[%s6 + $0x328] sm:$0xff]
    %v505 = vld [vmem:[%s6 + $0x330] sm:$0xff]
    %v506 = vld [vmem:[%s6 + $0x338] sm:$0xff]
    %v507 = vld [vmem:[%s6 + $0x340] sm:$0xff]
    %v508 = vld [vmem:[%s6 + $0x348] sm:$0xff]
    %v509 = vld [vmem:[%s6 + $0x350] sm:$0xff]
    %v510 = vld [vmem:[%s6 + $0x358] sm:$0xff]
    %v511 = vld [vmem:[%s6 + $0x360] sm:$0xff]
    %v512 = vld [vmem:[%s6 + $0x368] sm:$0xff]
    %v513 = vld [vmem:[%s6 + $0x370] sm:$0xff]
    %v514 = vld [vmem:[%s6 + $0x378] sm:$0xff]
    %v515 = vld [vmem:[%s6 + $0x380] sm:$0xff]
    %v516 = vld [vmem:[%s6 + $0x388] sm:$0xff]
    %v517 = vld [vmem:[%s6 + $0x390] sm:$0xff]
    %v518 = vld [vmem:[%s6 + $0x398] sm:$0xff]
    %v519 = vld [vmem:[%s6 + $0x3a0] sm:$0xff]
    %v520 = vld [vmem:[%s6 + $0x3a8] sm:$0xff]
    %v521 = vld [vmem:[%s6 + $0x3b0] sm:$0xff]
    %v522 = vld [vmem:[%s6 + $0x3b8] sm:$0xff]
    %v523 = vld [vmem:[%s6 + $0x3c0] sm:$0xff]
    %v524 = vld [vmem:[%s6 + $0x3c8] sm:$0xff]
    %v525 = vld [vmem:[%s6 + $0x3d0] sm:$0xff]
    %v526 = vld [vmem:[%s6 + $0x3d8] sm:$0xff]
    %v527 = vld [vmem:[%s6 + $0x3e0] sm:$0xff]
    %v528 = vld [vmem:[%s6 + $0x3e8] sm:$0xff]
    %v529 = vld [vmem:[%s6 + $0x3f0] sm:$0xff]
    %v530 = vld [vmem:[%s6 + $0x3f8] sm:$0xff]
    %v531 = vld [vmem:[%s7] sm:$0xff]
    %v532 = vld [vmem:[%s7 + $0x8] sm:$0xff]
    %v533 = vld [vmem:[%s7 + $0x10] sm:$0xff]
    %v534 = vld [vmem:[%s7 + $0x18] sm:$0xff]
    %v535 = vld [vmem:[%s7 + $0x20] sm:$0xff]
    %v536 = vld [vmem:[%s7 + $0x28] sm:$0xff]
    %v537 = vld [vmem:[%s7 + $0x30] sm:$0xff]
    %v538 = vld [vmem:[%s7 + $0x38] sm:$0xff]
    %v539 = vld [vmem:[%s7 + $0x40] sm:$0xff]
    %v540 = vld [vmem:[%s7 + $0x48] sm:$0xff]
    %v541 = vld [vmem:[%s7 + $0x50] sm:$0xff]
    %v542 = vld [vmem:[%s7 + $0x58] sm:$0xff]
    %v543 = vld [vmem:[%s7 + $0x60] sm:$0xff]
    %v544 = vld [vmem:[%s7 + $0x68] sm:$0xff]
    %v545 = vld [vmem:[%s7 + $0x70] sm:$0xff]
    %v546 = vld [vmem:[%s7 + $0x78] sm:$0xff]
    %v547 = vld [vmem:[%s7 + $0x80] sm:$0xff]
    %v548 = vld [vmem:[%s7 + $0x88] sm:$0xff]
    %v549 = vld [vmem:[%s7 + $0x90] sm:$0xff]
    %v550 = vld [vmem:[%s7 + $0x98] sm:$0xff]
    %v551 = vld [vmem:[%s7 + $0xa0] sm:$0xff]
    %v552 = vld [vmem:[%s7 + $0xa8] sm:$0xff]
    %v553 = vld [vmem:[%s7 + $0xb0] sm:$0xff]
    %v554 = vld [vmem:[%s7 + $0xb8] sm:$0xff]
    %v555 = vld [vmem:[%s7 + $0xc0] sm:$0xff]
    %v556 = vld [vmem:[%s7 + $0xc8] sm:$0xff]
    %v557 = vld [vmem:[%s7 + $0xd0] sm:$0xff]
    %v558 = vld [vmem:[%s7 + $0xd8] sm:$0xff]
    %v559 = vld [vmem:[%s7 + $0xe0] sm:$0xff]
    %v560 = vld [vmem:[%s7 + $0xe8] sm:$0xff]
    %v561 = vld [vmem:[%s7 + $0xf0] sm:$0xff]
    %v562 = vld [vmem:[%s7 + $0xf8] sm:$0xff]
    %v563 = vld [vmem:[%s7 + $0x100] sm:$0xff]
    %v564 = vld [vmem:[%s7 + $0x108] sm:$0xff]
    %v565 = vld [vmem:[%s7 + $0x110] sm:$0xff]
    %v566 = vld [vmem:[%s7 + $0x118] sm:$0xff]
    %v567 = vld [vmem:[%s7 + $0x120] sm:$0xff]
    %v568 = vld [vmem:[%s7 + $0x128] sm:$0xff]
    %v569 = vld [vmem:[%s7 + $0x130] sm:$0xff]
    %v570 = vld [vmem:[%s7 + $0x138] sm:$0xff]
    %v571 = vld [vmem:[%s7 + $0x140] sm:$0xff]
    %v572 = vld [vmem:[%s7 + $0x148] sm:$0xff]
    %v573 = vld [vmem:[%s7 + $0x150] sm:$0xff]
    %v574 = vld [vmem:[%s7 + $0x158] sm:$0xff]
    %v575 = vld [vmem:[%s7 + $0x160] sm:$0xff]
    %v576 = vld [vmem:[%s7 + $0x168] sm:$0xff]
    %v577 = vld [vmem:[%s7 + $0x170] sm:$0xff]
    %v578 = vld [vmem:[%s7 + $0x178] sm:$0xff]
    %v579 = vld [vmem:[%s7 + $0x180] sm:$0xff]
    %v580 = vld [vmem:[%s7 + $0x188] sm:$0xff]
    %v581 = vld [vmem:[%s7 + $0x190] sm:$0xff]
    %v582 = vld [vmem:[%s7 + $0x198] sm:$0xff]
    %v583 = vld [vmem:[%s7 + $0x1a0] sm:$0xff]
    %v584 = vld [vmem:[%s7 + $0x1a8] sm:$0xff]
    %v585 = vld [vmem:[%s7 + $0x1b0] sm:$0xff]
    %v586 = vld [vmem:[%s7 + $0x1b8] sm:$0xff]
    %v587 = vld [vmem:[%s7 + $0x1c0] sm:$0xff]
    %v588 = vld [vmem:[%s7 + $0x1c8] sm:$0xff]
    %v589 = vld [vmem:[%s7 + $0x1d0] sm:$0xff]
    %v590 = vld [vmem:[%s7 + $0x1d8] sm:$0xff]
    %v591 = vld [vmem:[%s7 + $0x1e0] sm:$0xff]
    %v592 = vld [vmem:[%s7 + $0x1e8] sm:$0xff]
    %v593 = vld [vmem:[%s7 + $0x1f0] sm:$0xff]
    %v594 = vld [vmem:[%s7 + $0x1f8] sm:$0xff]
    %v595 = vld [vmem:[%s7 + $0x200] sm:$0xff]
    %v596 = vld [vmem:[%s7 + $0x208] sm:$0xff]
    %v597 = vld [vmem:[%s7 + $0x210] sm:$0xff]
    %v598 = vld [vmem:[%s7 + $0x218] sm:$0xff]
    %v599 = vld [vmem:[%s7 + $0x220] sm:$0xff]
    %v600 = vld [vmem:[%s7 + $0x228] sm:$0xff]
    %v601 = vld [vmem:[%s7 + $0x230] sm:$0xff]
    %v602 = vld [vmem:[%s7 + $0x238] sm:$0xff]
    %v603 = vld [vmem:[%s7 + $0x240] sm:$0xff]
    %v604 = vld [vmem:[%s7 + $0x248] sm:$0xff]
    %v605 = vld [vmem:[%s7 + $0x250] sm:$0xff]
    %v606 = vld [vmem:[%s7 + $0x258] sm:$0xff]
    %v607 = vld [vmem:[%s7 + $0x260] sm:$0xff]
    %v608 = vld [vmem:[%s7 + $0x268] sm:$0xff]
    %v609 = vld [vmem:[%s7 + $0x270] sm:$0xff]
    %v610 = vld [vmem:[%s7 + $0x278] sm:$0xff]
    %v611 = vld [vmem:[%s7 + $0x280] sm:$0xff]
    %v612 = vld [vmem:[%s7 + $0x288] sm:$0xff]
    %v613 = vld [vmem:[%s7 + $0x290] sm:$0xff]
    %v614 = vld [vmem:[%s7 + $0x298] sm:$0xff]
    %v615 = vld [vmem:[%s7 + $0x2a0] sm:$0xff]
    %v616 = vld [vmem:[%s7 + $0x2a8] sm:$0xff]
    %v617 = vld [vmem:[%s7 + $0x2b0] sm:$0xff]
    %v618 = vld [vmem:[%s7 + $0x2b8] sm:$0xff]
    %v619 = vld [vmem:[%s7 + $0x2c0] sm:$0xff]
    %v620 = vld [vmem:[%s7 + $0x2c8] sm:$0xff]
    %v621 = vld [vmem:[%s7 + $0x2d0] sm:$0xff]
    %v622 = vld [vmem:[%s7 + $0x2d8] sm:$0xff]
    %v623 = vld [vmem:[%s7 + $0x2e0] sm:$0xff]
    %v624 = vld [vmem:[%s7 + $0x2e8] sm:$0xff]
    %v625 = vld [vmem:[%s7 + $0x2f0] sm:$0xff]
    %v626 = vld [vmem:[%s7 + $0x2f8] sm:$0xff]
    %v627 = vld [vmem:[%s7 + $0x300] sm:$0xff]
    %v628 = vld [vmem:[%s7 + $0x308] sm:$0xff]
    %v629 = vld [vmem:[%s7 + $0x310] sm:$0xff]
    %v630 = vld [vmem:[%s7 + $0x318] sm:$0xff]
    %v631 = vld [vmem:[%s7 + $0x320] sm:$0xff]
    %v632 = vld [vmem:[%s7 + $0x328] sm:$0xff]
    %v633 = vld [vmem:[%s7 + $0x330] sm:$0xff]
    %v634 = vld [vmem:[%s7 + $0x338] sm:$0xff]
    %v635 = vld [vmem:[%s7 + $0x340] sm:$0xff]
    %v636 = vld [vmem:[%s7 + $0x348] sm:$0xff]
    %v637 = vld [vmem:[%s7 + $0x350] sm:$0xff]
    %v638 = vld [vmem:[%s7 + $0x358] sm:$0xff]
    %v639 = vld [vmem:[%s7 + $0x360] sm:$0xff]
    %v640 = vld [vmem:[%s7 + $0x368] sm:$0xff]
    %v641 = vld [vmem:[%s7 + $0x370] sm:$0xff]
    %v642 = vld [vmem:[%s7 + $0x378] sm:$0xff]
    %v643 = vld [vmem:[%s7 + $0x380] sm:$0xff]
    %v644 = vld [vmem:[%s7 + $0x388] sm:$0xff]
    %v645 = vld [vmem:[%s7 + $0x390] sm:$0xff]
    %v646 = vld [vmem:[%s7 + $0x398] sm:$0xff]
    %v647 = vld [vmem:[%s7 + $0x3a0] sm:$0xff]
    %v648 = vld [vmem:[%s7 + $0x3a8] sm:$0xff]
    %v649 = vld [vmem:[%s7 + $0x3b0] sm:$0xff]
    %v650 = vld [vmem:[%s7 + $0x3b8] sm:$0xff]
    %v651 = vld [vmem:[%s7 + $0x3c0] sm:$0xff]
    %v652 = vld [vmem:[%s7 + $0x3c8] sm:$0xff]
    %v653 = vld [vmem:[%s7 + $0x3d0] sm:$0xff]
    %v654 = vld [vmem:[%s7 + $0x3d8] sm:$0xff]
    %v655 = vld [vmem:[%s7 + $0x3e0] sm:$0xff]
    %v656 = vld [vmem:[%s7 + $0x3e8] sm:$0xff]
    %v657 = vld [vmem:[%s7 + $0x3f0] sm:$0xff]
    %v658 = vld [vmem:[%s7 + $0x3f8] sm:$0xff]
    %v659 = vld [vmem:[%s7 + $0x400] sm:$0xff]
    %v660 = vld [vmem:[%s7 + $0x408] sm:$0xff]
    %v661 = vld [vmem:[%s7 + $0x410] sm:$0xff]
    %v662 = vld [vmem:[%s7 + $0x418] sm:$0xff]
    %v663 = vld [vmem:[%s7 + $0x420] sm:$0xff]
    %v664 = vld [vmem:[%s7 + $0x428] sm:$0xff]
    %v665 = vld [vmem:[%s7 + $0x430] sm:$0xff]
    %v666 = vld [vmem:[%s7 + $0x438] sm:$0xff]
    %v667 = vld [vmem:[%s7 + $0x440] sm:$0xff]
    %v668 = vld [vmem:[%s7 + $0x448] sm:$0xff]
    %v669 = vld [vmem:[%s7 + $0x450] sm:$0xff]
    %v670 = vld [vmem:[%s7 + $0x458] sm:$0xff]
    %v671 = vld [vmem:[%s7 + $0x460] sm:$0xff]
    %v672 = vld [vmem:[%s7 + $0x468] sm:$0xff]
    %v673 = vld [vmem:[%s7 + $0x470] sm:$0xff]
    %v674 = vld [vmem:[%s7 + $0x478] sm:$0xff]
    %v675 = vld [vmem:[%s7 + $0x480] sm:$0xff]
    %v676 = vld [vmem:[%s7 + $0x488] sm:$0xff]
    %v677 = vld [vmem:[%s7 + $0x490] sm:$0xff]
    %v678 = vld [vmem:[%s7 + $0x498] sm:$0xff]
    %v679 = vld [vmem:[%s7 + $0x4a0] sm:$0xff]
    %v680 = vld [vmem:[%s7 + $0x4a8] sm:$0xff]
    %v681 = vld [vmem:[%s7 + $0x4b0] sm:$0xff]
    %v682 = vld [vmem:[%s7 + $0x4b8] sm:$0xff]
    %v683 = vld [vmem:[%s7 + $0x4c0] sm:$0xff]
    %v684 = vld [vmem:[%s7 + $0x4c8] sm:$0xff]
    %v685 = vld [vmem:[%s7 + $0x4d0] sm:$0xff]
    %v686 = vld [vmem:[%s7 + $0x4d8] sm:$0xff]
    %v687 = vld [vmem:[%s7 + $0x4e0] sm:$0xff]
    %v688 = vld [vmem:[%s7 + $0x4e8] sm:$0xff]
    %v689 = vld [vmem:[%s7 + $0x4f0] sm:$0xff]
    %v690 = vld [vmem:[%s7 + $0x4f8] sm:$0xff]
    %v691 = vld [vmem:[%s7 + $0x500] sm:$0xff]
    %v692 = vld [vmem:[%s7 + $0x508] sm:$0xff]
    %v693 = vld [vmem:[%s7 + $0x510] sm:$0xff]
    %v694 = vld [vmem:[%s7 + $0x518] sm:$0xff]
    %v695 = vld [vmem:[%s7 + $0x520] sm:$0xff]
    %v696 = vld [vmem:[%s7 + $0x528] sm:$0xff]
    %v697 = vld [vmem:[%s7 + $0x530] sm:$0xff]
    %v698 = vld [vmem:[%s7 + $0x538] sm:$0xff]
    %v699 = vld [vmem:[%s7 + $0x540] sm:$0xff]
    %v700 = vld [vmem:[%s7 + $0x548] sm:$0xff]
    %v701 = vld [vmem:[%s7 + $0x550] sm:$0xff]
    %v702 = vld [vmem:[%s7 + $0x558] sm:$0xff]
    %v703 = vld [vmem:[%s7 + $0x560] sm:$0xff]
    %v704 = vld [vmem:[%s7 + $0x568] sm:$0xff]
    %v705 = vld [vmem:[%s7 + $0x570] sm:$0xff]
    %v706 = vld [vmem:[%s7 + $0x578] sm:$0xff]
    %v707 = vld [vmem:[%s7 + $0x580] sm:$0xff]
    %v708 = vld [vmem:[%s7 + $0x588] sm:$0xff]
    %v709 = vld [vmem:[%s7 + $0x590] sm:$0xff]
    %v710 = vld [vmem:[%s7 + $0x598] sm:$0xff]
    %v711 = vld [vmem:[%s7 + $0x5a0] sm:$0xff]
    %v712 = vld [vmem:[%s7 + $0x5a8] sm:$0xff]
    %v713 = vld [vmem:[%s7 + $0x5b0] sm:$0xff]
    %v714 = vld [vmem:[%s7 + $0x5b8] sm:$0xff]
    %v715 = vld [vmem:[%s7 + $0x5c0] sm:$0xff]
    %v716 = vld [vmem:[%s7 + $0x5c8] sm:$0xff]
    %v717 = vld [vmem:[%s7 + $0x5d0] sm:$0xff]
    %v718 = vld [vmem:[%s7 + $0x5d8] sm:$0xff]
    %v719 = vld [vmem:[%s7 + $0x5e0] sm:$0xff]
    %v720 = vld [vmem:[%s7 + $0x5e8] sm:$0xff]
    %v721 = vld [vmem:[%s7 + $0x5f0] sm:$0xff]
    %v722 = vld [vmem:[%s7 + $0x5f8] sm:$0xff]
    %v723 = vld [vmem:[%s7 + $0x600] sm:$0xff]
    %v724 = vld [vmem:[%s7 + $0x608] sm:$0xff]
    %v725 = vld [vmem:[%s7 + $0x610] sm:$0xff]
    %v726 = vld [vmem:[%s7 + $0x618] sm:$0xff]
    %v727 = vld [vmem:[%s7 + $0x620] sm:$0xff]
    %v728 = vld [vmem:[%s7 + $0x628] sm:$0xff]
    %v729 = vld [vmem:[%s7 + $0x630] sm:$0xff]
    %v730 = vld [vmem:[%s7 + $0x638] sm:$0xff]
    %v731 = vld [vmem:[%s7 + $0x640] sm:$0xff]
    %v732 = vld [vmem:[%s7 + $0x648] sm:$0xff]
    %v733 = vld [vmem:[%s7 + $0x650] sm:$0xff]
    %v734 = vld [vmem:[%s7 + $0x658] sm:$0xff]
    %v735 = vld [vmem:[%s7 + $0x660] sm:$0xff]
    %v736 = vld [vmem:[%s7 + $0x668] sm:$0xff]
    %v737 = vld [vmem:[%s7 + $0x670] sm:$0xff]
    %v738 = vld [vmem:[%s7 + $0x678] sm:$0xff]
    %v739 = vld [vmem:[%s7 + $0x680] sm:$0xff]
    %v740 = vld [vmem:[%s7 + $0x688] sm:$0xff]
    %v741 = vld [vmem:[%s7 + $0x690] sm:$0xff]
    %v742 = vld [vmem:[%s7 + $0x698] sm:$0xff]
    %v743 = vld [vmem:[%s7 + $0x6a0] sm:$0xff]
    %v744 = vld [vmem:[%s7 + $0x6a8] sm:$0xff]
    %v745 = vld [vmem:[%s7 + $0x6b0] sm:$0xff]
    %v746 = vld [vmem:[%s7 + $0x6b8] sm:$0xff]
    %v747 = vld [vmem:[%s7 + $0x6c0] sm:$0xff]
    %v748 = vld [vmem:[%s7 + $0x6c8] sm:$0xff]
    %v749 = vld [vmem:[%s7 + $0x6d0] sm:$0xff]
    %v750 = vld [vmem:[%s7 + $0x6d8] sm:$0xff]
    %v751 = vld [vmem:[%s7 + $0x6e0] sm:$0xff]
    %v752 = vld [vmem:[%s7 + $0x6e8] sm:$0xff]
    %v753 = vld [vmem:[%s7 + $0x6f0] sm:$0xff]
    %v754 = vld [vmem:[%s7 + $0x6f8] sm:$0xff]
    %v755 = vld [vmem:[%s7 + $0x700] sm:$0xff]
    %v756 = vld [vmem:[%s7 + $0x708] sm:$0xff]
    %v757 = vld [vmem:[%s7 + $0x710] sm:$0xff]
    %v758 = vld [vmem:[%s7 + $0x718] sm:$0xff]
    %v759 = vld [vmem:[%s7 + $0x720] sm:$0xff]
    %v760 = vld [vmem:[%s7 + $0x728] sm:$0xff]
    %v761 = vld [vmem:[%s7 + $0x730] sm:$0xff]
    %v762 = vld [vmem:[%s7 + $0x738] sm:$0xff]
    %v763 = vld [vmem:[%s7 + $0x740] sm:$0xff]
    %v764 = vld [vmem:[%s7 + $0x748] sm:$0xff]
    %v765 = vld [vmem:[%s7 + $0x750] sm:$0xff]
    %v766 = vld [vmem:[%s7 + $0x758] sm:$0xff]
    %v767 = vld [vmem:[%s7 + $0x760] sm:$0xff]
    %v768 = vld [vmem:[%s7 + $0x768] sm:$0xff]
    %v769 = vld [vmem:[%s7 + $0x770] sm:$0xff]
    %v770 = vld [vmem:[%s7 + $0x778] sm:$0xff]
    %v771 = vld [vmem:[%s7 + $0x780] sm:$0xff]
    %v772 = vld [vmem:[%s7 + $0x788] sm:$0xff]
    %v773 = vld [vmem:[%s7 + $0x790] sm:$0xff]
    %v774 = vld [vmem:[%s7 + $0x798] sm:$0xff]
    %v775 = vld [vmem:[%s7 + $0x7a0] sm:$0xff]
    %v776 = vld [vmem:[%s7 + $0x7a8] sm:$0xff]
    %v777 = vld [vmem:[%s7 + $0x7b0] sm:$0xff]
    %v778 = vld [vmem:[%s7 + $0x7b8] sm:$0xff]
    %v779 = vld [vmem:[%s7 + $0x7c0] sm:$0xff]
    %v780 = vld [vmem:[%s7 + $0x7c8] sm:$0xff]
    %v781 = vld [vmem:[%s7 + $0x7d0] sm:$0xff]
    %v782 = vld [vmem:[%s7 + $0x7d8] sm:$0xff]
    %v783 = vld [vmem:[%s7 + $0x7e0] sm:$0xff]
    %v784 = vld [vmem:[%s7 + $0x7e8] sm:$0xff]
    %v785 = vld [vmem:[%s7 + $0x7f0] sm:$0xff]
    %v786 = vld [vmem:[%s7 + $0x7f8] sm:$0xff]
    %vm787 = vcmask 261120
    %v789 = vsel %vm787, %v34, 0
    %791 = vmatprep.subr.mxu0 %v84
    %792 = vmatpush1.msra.mxu0 %v83
    %793 = vmatprep.subr.mxu0 %v100
    %794 = vmatpush1.msra.mxu0 %v99
    %795 = vmatprep.subr.mxu0 %v116
    %796 = vmatpush1.msra.mxu0 %v115
    %797 = vmatprep.subr.mxu0 %v132
    %798 = vmatpush1.msra.mxu0 %v131
    %799 = vmatprep.subr.mxu0 0.0
    %800 = vmatpush1.msra.mxu0 0.0
    %801 = vmatprep.subr.mxu0 0.0
    %802 = vmatpush1.msra.mxu0 0.0
    %803 = vmatprep.subr.mxu0 0.0
    %804 = vmatpush1.msra.mxu0 0.0
    %805 = vmatprep.subr.mxu0 0.0
    %806 = vmatpush1.msra.mxu0 0.0
    %807 = vmatprep.subr.mxu0 0.0
    %808 = vmatpush1.msra.mxu0 0.0
    %809 = vmatprep.subr.mxu0 0.0
    %810 = vmatpush1.msra.mxu0 0.0
    %811 = vmatprep.subr.mxu0 0.0
    %812 = vmatpush1.msra.mxu0 0.0
    %813 = vmatprep.subr.mxu0 0.0
    %814 = vmatpush1.msra.mxu0 0.0
    %815 = vmatprep.subr.mxu0 0.0
    %816 = vmatpush1.msra.mxu0 0.0
    %817 = vmatprep.subr.mxu0 0.0
    %818 = vmatpush1.msra.mxu0 0.0
    %819 = vmatprep.subr.mxu0 0.0
    %820 = vmatpush1.msra.mxu0 0.0
    %821 = vmatprep.subr.mxu0 0.0
    %822 = vmatpush1.msra.mxu0 0.0
    %823 = vmatprep.subr.mxu0 0.0
    %824 = vmatpush1.msra.mxu0 0.0
    %825 = vmatprep.subr.mxu0 0.0
    %826 = vmatpush1.msra.mxu0 0.0
    %827 = vmatprep.subr.mxu0 0.0
    %828 = vmatpush1.msra.mxu0 0.0
    %829 = vmatprep.subr.mxu0 0.0
    %830 = vmatpush1.msra.mxu0 0.0
    %831 = vmatprep.subr.mxu0 0.0
    %832 = vmatpush1.msra.mxu0 0.0
    %833 = vmatprep.subr.mxu0 0.0
    %834 = vmatpush1.msra.mxu0 0.0
    %835 = vmatprep.subr.mxu0 0.0
    %836 = vmatpush1.msra.mxu0 0.0
    %837 = vmatprep.subr.mxu0 0.0
    %838 = vmatpush1.msra.mxu0 0.0
    %839 = vmatprep.subr.mxu0 0.0
    %840 = vmatpush1.msra.mxu0 0.0
    %841 = vmatprep.subr.mxu0 0.0
    %842 = vmatpush1.msra.mxu0 0.0
    %843 = vmatprep.subr.mxu0 0.0
    %844 = vmatpush1.msra.mxu0 0.0
    %845 = vmatprep.subr.mxu0 0.0
    %846 = vmatpush1.msra.mxu0 0.0
    %847 = vmatprep.subr.mxu0 0.0
    %848 = vmatpush1.msra.mxu0 0.0
    %849 = vmatprep.subr.mxu0 0.0
    %850 = vmatpush1.msra.mxu0 0.0
    %851 = vmatprep.subr.mxu0 0.0
    %852 = vmatpush1.msra.mxu0 0.0
    %853 = vmatprep.subr.mxu0 0.0
    %854 = vmatpush1.msra.mxu0 0.0
    %855 = vmatprep.mubr.f32.mxu0 0.0
    %856 = vmatmul.mubr.f32.gmra.mrb[0].mxu0 %v789
    %v857 = vpop.f32.mrb[0].mxu0
    %v858 = vadd.f32 0.0, %v857
    %v859 = vpop.f32.mrb[0].mxu0
    %v860 = vadd.f32 0.0, %v859
    %861 = vdwg.mxu0
    %862 = vmatprep.subr.mxu0 %v86
    %863 = vmatpush1.msra.mxu0 %v85
    %864 = vmatprep.subr.mxu0 %v102
    %865 = vmatpush1.msra.mxu0 %v101
    %866 = vmatprep.subr.mxu0 %v118
    %867 = vmatpush1.msra.mxu0 %v117
    %868 = vmatprep.subr.mxu0 %v134
    %869 = vmatpush1.msra.mxu0 %v133
    %870 = vmatprep.subr.mxu0 0.0
    %871 = vmatpush1.msra.mxu0 0.0
    %872 = vmatprep.subr.mxu0 0.0
    %873 = vmatpush1.msra.mxu0 0.0
    %874 = vmatprep.subr.mxu0 0.0
    %875 = vmatpush1.msra.mxu0 0.0
    %876 = vmatprep.subr.mxu0 0.0
    %877 = vmatpush1.msra.mxu0 0.0
    %878 = vmatprep.subr.mxu0 0.0
    %879 = vmatpush1.msra.mxu0 0.0
    %880 = vmatprep.subr.mxu0 0.0
    %881 = vmatpush1.msra.mxu0 0.0
    %882 = vmatprep.subr.mxu0 0.0
    %883 = vmatpush1.msra.mxu0 0.0
    %884 = vmatprep.subr.mxu0 0.0
    %885 = vmatpush1.msra.mxu0 0.0
    %886 = vmatprep.subr.mxu0 0.0
    %887 = vmatpush1.msra.mxu0 0.0
    %888 = vmatprep.subr.mxu0 0.0
    %889 = vmatpush1.msra.mxu0 0.0
    %890 = vmatprep.subr.mxu0 0.0
    %891 = vmatpush1.msra.mxu0 0.0
    %892 = vmatprep.subr.mxu0 0.0
    %893 = vmatpush1.msra.mxu0 0.0
    %894 = vmatprep.subr.mxu0 0.0
    %895 = vmatpush1.msra.mxu0 0.0
    %896 = vmatprep.subr.mxu0 0.0
    %897 = vmatpush1.msra.mxu0 0.0
    %898 = vmatprep.subr.mxu0 0.0
    %899 = vmatpush1.msra.mxu0 0.0
    %900 = vmatprep.subr.mxu0 0.0
    %901 = vmatpush1.msra.mxu0 0.0
    %902 = vmatprep.subr.mxu0 0.0
    %903 = vmatpush1.msra.mxu0 0.0
    %904 = vmatprep.subr.mxu0 0.0
    %905 = vmatpush1.msra.mxu0 0.0
    %906 = vmatprep.subr.mxu0 0.0
    %907 = vmatpush1.msra.mxu0 0.0
    %908 = vmatprep.subr.mxu0 0.0
    %909 = vmatpush1.msra.mxu0 0.0
    %910 = vmatprep.subr.mxu0 0.0
    %911 = vmatpush1.msra.mxu0 0.0
    %912 = vmatprep.subr.mxu0 0.0
    %913 = vmatpush1.msra.mxu0 0.0
    %914 = vmatprep.subr.mxu0 0.0
    %915 = vmatpush1.msra.mxu0 0.0
    %916 = vmatprep.subr.mxu0 0.0
    %917 = vmatpush1.msra.mxu0 0.0
    %918 = vmatprep.subr.mxu0 0.0
    %919 = vmatpush1.msra.mxu0 0.0
    %920 = vmatprep.subr.mxu0 0.0
    %921 = vmatpush1.msra.mxu0 0.0
    %922 = vmatprep.subr.mxu0 0.0
    %923 = vmatpush1.msra.mxu0 0.0
    %924 = vmatprep.subr.mxu0 0.0
    %925 = vmatpush1.msra.mxu0 0.0
    %926 = vmatprep.mubr.f32.mxu0 0.0
    %927 = vmatmul.mubr.f32.gmra.mrb[0].mxu0 %v789
    %v928 = vpop.f32.mrb[0].mxu0
    %v929 = vadd.f32 0.0, %v928
    %v930 = vpop.f32.mrb[0].mxu0
    %v931 = vadd.f32 0.0, %v930
    %932 = vdwg.mxu0
    %933 = vmatprep.subr.mxu0 %v88
    %934 = vmatpush1.msra.mxu0 %v87
    %935 = vmatprep.subr.mxu0 %v104
    %936 = vmatpush1.msra.mxu0 %v103
    %937 = vmatprep.subr.mxu0 %v120
    %938 = vmatpush1.msra.mxu0 %v119
    %939 = vmatprep.subr.mxu0 %v136
    %940 = vmatpush1.msra.mxu0 %v135
    %941 = vmatprep.subr.mxu0 0.0
    %942 = vmatpush1.msra.mxu0 0.0
    %943 = vmatprep.subr.mxu0 0.0
    %944 = vmatpush1.msra.mxu0 0.0
    %945 = vmatprep.subr.mxu0 0.0
    %946 = vmatpush1.msra.mxu0 0.0
    %947 = vmatprep.subr.mxu0 0.0
    %948 = vmatpush1.msra.mxu0 0.0
    %949 = vmatprep.subr.mxu0 0.0
    %950 = vmatpush1.msra.mxu0 0.0
    %951 = vmatprep.subr.mxu0 0.0
    %952 = vmatpush1.msra.mxu0 0.0
    %953 = vmatprep.subr.mxu0 0.0
    %954 = vmatpush1.msra.mxu0 0.0
    %955 = vmatprep.subr.mxu0 0.0
    %956 = vmatpush1.msra.mxu0 0.0
    %957 = vmatprep.subr.mxu0 0.0
    %958 = vmatpush1.msra.mxu0 0.0
    %959 = vmatprep.subr.mxu0 0.0
    %960 = vmatpush1.msra.mxu0 0.0
    %961 = vmatprep.subr.mxu0 0.0
    %962 = vmatpush1.msra.mxu0 0.0
    %963 = vmatprep.subr.mxu0 0.0
    %964 = vmatpush1.msra.mxu0 0.0
    %965 = vmatprep.subr.mxu0 0.0
    %966 = vmatpush1.msra.mxu0 0.0
    %967 = vmatprep.subr.mxu0 0.0
    %968 = vmatpush1.msra.mxu0 0.0
    %969 = vmatprep.subr.mxu0 0.0
    %970 = vmatpush1.msra.mxu0 0.0
    %971 = vmatprep.subr.mxu0 0.0
    %972 = vmatpush1.msra.mxu0 0.0
    %973 = vmatprep.subr.mxu0 0.0
    %974 = vmatpush1.msra.mxu0 0.0
    %975 = vmatprep.subr.mxu0 0.0
    %976 = vmatpush1.msra.mxu0 0.0
    %977 = vmatprep.subr.mxu0 0.0
    %978 = vmatpush1.msra.mxu0 0.0
    %979 = vmatprep.subr.mxu0 0.0
    %980 = vmatpush1.msra.mxu0 0.0
    %981 = vmatprep.subr.mxu0 0.0
    %982 = vmatpush1.msra.mxu0 0.0
    %983 = vmatprep.subr.mxu0 0.0
    %984 = vmatpush1.msra.mxu0 0.0
    %985 = vmatprep.subr.mxu0 0.0
    %986 = vmatpush1.msra.mxu0 0.0
    %987 = vmatprep.subr.mxu0 0.0
    %988 = vmatpush1.msra.mxu0 0.0
    %989 = vmatprep.subr.mxu0 0.0
    %990 = vmatpush1.msra.mxu0 0.0
    %991 = vmatprep.subr.mxu0 0.0
    %992 = vmatpush1.msra.mxu0 0.0
    %993 = vmatprep.subr.mxu0 0.0
    %994 = vmatpush1.msra.mxu0 0.0
    %995 = vmatprep.subr.mxu0 0.0
    %996 = vmatpush1.msra.mxu0 0.0
    %997 = vmatprep.mubr.f32.mxu0 0.0
    %998 = vmatmul.mubr.f32.gmra.mrb[0].mxu0 %v789
    %v999 = vpop.f32.mrb[0].mxu0
    %v1000 = vadd.f32 0.0, %v999
    %v1001 = vpop.f32.mrb[0].mxu0
    %v1002 = vadd.f32 0.0, %v1001
    %1003 = vdwg.mxu0
    %1004 = vmatprep.subr.mxu0 %v90
    %1005 = vmatpush1.msra.mxu0 %v89
    %1006 = vmatprep.subr.mxu0 %v106
    %1007 = vmatpush1.msra.mxu0 %v105
    %1008 = vmatprep.subr.mxu0 %v122
    %1009 = vmatpush1.msra.mxu0 %v121
    %1010 = vmatprep.subr.mxu0 %v138
    %1011 = vmatpush1.msra.mxu0 %v137
    %1012 = vmatprep.subr.mxu0 0.0
    %1013 = vmatpush1.msra.mxu0 0.0
    %1014 = vmatprep.subr.mxu0 0.0
    %1015 = vmatpush1.msra.mxu0 0.0
    %1016 = vmatprep.subr.mxu0 0.0
    %1017 = vmatpush1.msra.mxu0 0.0
    %1018 = vmatprep.subr.mxu0 0.0
    %1019 = vmatpush1.msra.mxu0 0.0
    %1020 = vmatprep.subr.mxu0 0.0
    %1021 = vmatpush1.msra.mxu0 0.0
    %1022 = vmatprep.subr.mxu0 0.0
    %1023 = vmatpush1.msra.mxu0 0.0
    %1024 = vmatprep.subr.mxu0 0.0
    %1025 = vmatpush1.msra.mxu0 0.0
    %1026 = vmatprep.subr.mxu0 0.0
    %1027 = vmatpush1.msra.mxu0 0.0
    %1028 = vmatprep.subr.mxu0 0.0
    %1029 = vmatpush1.msra.mxu0 0.0
    %1030 = vmatprep.subr.mxu0 0.0
    %1031 = vmatpush1.msra.mxu0 0.0
    %1032 = vmatprep.subr.mxu0 0.0
    %1033 = vmatpush1.msra.mxu0 0.0
    %1034 = vmatprep.subr.mxu0 0.0
    %1035 = vmatpush1.msra.mxu0 0.0
    %1036 = vmatprep.subr.mxu0 0.0
    %1037 = vmatpush1.msra.mxu0 0.0
    %1038 = vmatprep.subr.mxu0 0.0
    %1039 = vmatpush1.msra.mxu0 0.0
    %1040 = vmatprep.subr.mxu0 0.0
    %1041 = vmatpush1.msra.mxu0 0.0
    %1042 = vmatprep.subr.mxu0 0.0
    %1043 = vmatpush1.msra.mxu0 0.0
    %1044 = vmatprep.subr.mxu0 0.0
    %1045 = vmatpush1.msra.mxu0 0.0
    %1046 = vmatprep.subr.mxu0 0.0
    %1047 = vmatpush1.msra.mxu0 0.0
    %1048 = vmatprep.subr.mxu0 0.0
    %1049 = vmatpush1.msra.mxu0 0.0
    %1050 = vmatprep.subr.mxu0 0.0
    %1051 = vmatpush1.msra.mxu0 0.0
    %1052 = vmatprep.subr.mxu0 0.0
    %1053 = vmatpush1.msra.mxu0 0.0
    %1054 = vmatprep.subr.mxu0 0.0
    %1055 = vmatpush1.msra.mxu0 0.0
    %1056 = vmatprep.subr.mxu0 0.0
    %1057 = vmatpush1.msra.mxu0 0.0
    %1058 = vmatprep.subr.mxu0 0.0
    %1059 = vmatpush1.msra.mxu0 0.0
    %1060 = vmatprep.subr.mxu0 0.0
    %1061 = vmatpush1.msra.mxu0 0.0
    %1062 = vmatprep.subr.mxu0 0.0
    %1063 = vmatpush1.msra.mxu0 0.0
    %1064 = vmatprep.subr.mxu0 0.0
    %1065 = vmatpush1.msra.mxu0 0.0
    %1066 = vmatprep.subr.mxu0 0.0
    %1067 = vmatpush1.msra.mxu0 0.0
    %1068 = vmatprep.mubr.f32.mxu0 0.0
    %1069 = vmatmul.mubr.f32.gmra.mrb[0].mxu0 %v789
    %v1070 = vpop.f32.mrb[0].mxu0
    %v1071 = vadd.f32 0.0, %v1070
    %v1072 = vpop.f32.mrb[0].mxu0
    %v1073 = vadd.f32 0.0, %v1072
    %1074 = vdwg.mxu0
    %1075 = vmatprep.subr.mxu0 %v92
    %1076 = vmatpush1.msra.mxu0 %v91
    %1077 = vmatprep.subr.mxu0 %v108
    %1078 = vmatpush1.msra.mxu0 %v107
    %1079 = vmatprep.subr.mxu0 %v124
    %1080 = vmatpush1.msra.mxu0 %v123
    %1081 = vmatprep.subr.mxu0 %v140
    %1082 = vmatpush1.msra.mxu0 %v139
    %1083 = vmatprep.subr.mxu0 0.0
    %1084 = vmatpush1.msra.mxu0 0.0
    %1085 = vmatprep.subr.mxu0 0.0
    %1086 = vmatpush1.msra.mxu0 0.0
    %1087 = vmatprep.subr.mxu0 0.0
    %1088 = vmatpush1.msra.mxu0 0.0
    %1089 = vmatprep.subr.mxu0 0.0
    %1090 = vmatpush1.msra.mxu0 0.0
    %1091 = vmatprep.subr.mxu0 0.0
    %1092 = vmatpush1.msra.mxu0 0.0
    %1093 = vmatprep.subr.mxu0 0.0
    %1094 = vmatpush1.msra.mxu0 0.0
    %1095 = vmatprep.subr.mxu0 0.0
    %1096 = vmatpush1.msra.mxu0 0.0
    %1097 = vmatprep.subr.mxu0 0.0
    %1098 = vmatpush1.msra.mxu0 0.0
    %1099 = vmatprep.subr.mxu0 0.0
    %1100 = vmatpush1.msra.mxu0 0.0
    %1101 = vmatprep.subr.mxu0 0.0
    %1102 = vmatpush1.msra.mxu0 0.0
    %1103 = vmatprep.subr.mxu0 0.0
    %1104 = vmatpush1.msra.mxu0 0.0
    %1105 = vmatprep.subr.mxu0 0.0
    %1106 = vmatpush1.msra.mxu0 0.0
    %1107 = vmatprep.subr.mxu0 0.0
    %1108 = vmatpush1.msra.mxu0 0.0
    %1109 = vmatprep.subr.mxu0 0.0
    %1110 = vmatpush1.msra.mxu0 0.0
    %1111 = vmatprep.subr.mxu0 0.0
    %1112 = vmatpush1.msra.mxu0 0.0
    %1113 = vmatprep.subr.mxu0 0.0
    %1114 = vmatpush1.msra.mxu0 0.0
    %1115 = vmatprep.subr.mxu0 0.0
    %1116 = vmatpush1.msra.mxu0 0.0
    %1117 = vmatprep.subr.mxu0 0.0
    %1118 = vmatpush1.msra.mxu0 0.0
    %1119 = vmatprep.subr.mxu0 0.0
    %1120 = vmatpush1.msra.mxu0 0.0
    %1121 = vmatprep.subr.mxu0 0.0
    %1122 = vmatpush1.msra.mxu0 0.0
    %1123 = vmatprep.subr.mxu0 0.0
    %1124 = vmatpush1.msra.mxu0 0.0
    %1125 = vmatprep.subr.mxu0 0.0
    %1126 = vmatpush1.msra.mxu0 0.0
    %1127 = vmatprep.subr.mxu0 0.0
    %1128 = vmatpush1.msra.mxu0 0.0
    %1129 = vmatprep.subr.mxu0 0.0
    %1130 = vmatpush1.msra.mxu0 0.0
    %1131 = vmatprep.subr.mxu0 0.0
    %1132 = vmatpush1.msra.mxu0 0.0
    %1133 = vmatprep.subr.mxu0 0.0
    %1134 = vmatpush1.msra.mxu0 0.0
    %1135 = vmatprep.subr.mxu0 0.0
    %1136 = vmatpush1.msra.mxu0 0.0
    %1137 = vmatprep.subr.mxu0 0.0
    %1138 = vmatpush1.msra.mxu0 0.0
    %1139 = vmatprep.mubr.f32.mxu0 0.0
    %1140 = vmatmul.mubr.f32.gmra.mrb[0].mxu0 %v789
    %v1141 = vpop.f32.mrb[0].mxu0
    %v1142 = vadd.f32 0.0, %v1141
    %v1143 = vpop.f32.mrb[0].mxu0
    %v1144 = vadd.f32 0.0, %v1143
    %1145 = vdwg.mxu0
    %1146 = vmatprep.subr.mxu0 %v94
    %1147 = vmatpush1.msra.mxu0 %v93
    %1148 = vmatprep.subr.mxu0 %v110
    %1149 = vmatpush1.msra.mxu0 %v109
    %1150 = vmatprep.subr.mxu0 %v126
    %1151 = vmatpush1.msra.mxu0 %v125
    %1152 = vmatprep.subr.mxu0 %v142
    %1153 = vmatpush1.msra.mxu0 %v141
    %1154 = vmatprep.subr.mxu0 0.0
    %1155 = vmatpush1.msra.mxu0 0.0
    %1156 = vmatprep.subr.mxu0 0.0
    %1157 = vmatpush1.msra.mxu0 0.0
    %1158 = vmatprep.subr.mxu0 0.0
    %1159 = vmatpush1.msra.mxu0 0.0
    %1160 = vmatprep.subr.mxu0 0.0
    %1161 = vmatpush1.msra.mxu0 0.0
    %1162 = vmatprep.subr.mxu0 0.0
    %1163 = vmatpush1.msra.mxu0 0.0
    %1164 = vmatprep.subr.mxu0 0.0
    %1165 = vmatpush1.msra.mxu0 0.0
    %1166 = vmatprep.subr.mxu0 0.0
    %1167 = vmatpush1.msra.mxu0 0.0
    %1168 = vmatprep.subr.mxu0 0.0
    %1169 = vmatpush1.msra.mxu0 0.0
    %1170 = vmatprep.subr.mxu0 0.0
    %1171 = vmatpush1.msra.mxu0 0.0
    %1172 = vmatprep.subr.mxu0 0.0
    %1173 = vmatpush1.msra.mxu0 0.0
    %1174 = vmatprep.subr.mxu0 0.0
    %1175 = vmatpush1.msra.mxu0 0.0
    %1176 = vmatprep.subr.mxu0 0.0
    %1177 = vmatpush1.msra.mxu0 0.0
    %1178 = vmatprep.subr.mxu0 0.0
    %1179 = vmatpush1.msra.mxu0 0.0
    %1180 = vmatprep.subr.mxu0 0.0
    %1181 = vmatpush1.msra.mxu0 0.0
    %1182 = vmatprep.subr.mxu0 0.0
    %1183 = vmatpush1.msra.mxu0 0.0
    %1184 = vmatprep.subr.mxu0 0.0
    %1185 = vmatpush1.msra.mxu0 0.0
    %1186 = vmatprep.subr.mxu0 0.0
    %1187 = vmatpush1.msra.mxu0 0.0
    %1188 = vmatprep.subr.mxu0 0.0
    %1189 = vmatpush1.msra.mxu0 0.0
    %1190 = vmatprep.subr.mxu0 0.0
    %1191 = vmatpush1.msra.mxu0 0.0
    %1192 = vmatprep.subr.mxu0 0.0
    %1193 = vmatpush1.msra.mxu0 0.0
    %1194 = vmatprep.subr.mxu0 0.0
    %1195 = vmatpush1.msra.mxu0 0.0
    %1196 = vmatprep.subr.mxu0 0.0
    %1197 = vmatpush1.msra.mxu0 0.0
    %1198 = vmatprep.subr.mxu0 0.0
    %1199 = vmatpush1.msra.mxu0 0.0
    %1200 = vmatprep.subr.mxu0 0.0
    %1201 = vmatpush1.msra.mxu0 0.0
    %1202 = vmatprep.subr.mxu0 0.0
    %1203 = vmatpush1.msra.mxu0 0.0
    %1204 = vmatprep.subr.mxu0 0.0
    %1205 = vmatpush1.msra.mxu0 0.0
    %1206 = vmatprep.subr.mxu0 0.0
    %1207 = vmatpush1.msra.mxu0 0.0
    %1208 = vmatprep.subr.mxu0 0.0
    %1209 = vmatpush1.msra.mxu0 0.0
    %1210 = vmatprep.mubr.f32.mxu0 0.0
    %1211 = vmatmul.mubr.f32.gmra.mrb[0].mxu0 %v789
    %v1212 = vpop.f32.mrb[0].mxu0
    %v1213 = vadd.f32 0.0, %v1212
    %v1214 = vpop.f32.mrb[0].mxu0
    %v1215 = vadd.f32 0.0, %v1214
    %1216 = vdwg.mxu0
    %1217 = vmatprep.subr.mxu0 %v96
    %1218 = vmatpush1.msra.mxu0 %v95
    %1219 = vmatprep.subr.mxu0 %v112
    %1220 = vmatpush1.msra.mxu0 %v111
    %1221 = vmatprep.subr.mxu0 %v128
    %1222 = vmatpush1.msra.mxu0 %v127
    %1223 = vmatprep.subr.mxu0 %v144
    %1224 = vmatpush1.msra.mxu0 %v143
    %1225 = vmatprep.subr.mxu0 0.0
    %1226 = vmatpush1.msra.mxu0 0.0
    %1227 = vmatprep.subr.mxu0 0.0
    %1228 = vmatpush1.msra.mxu0 0.0
    %1229 = vmatprep.subr.mxu0 0.0
    %1230 = vmatpush1.msra.mxu0 0.0
    %1231 = vmatprep.subr.mxu0 0.0
    %1232 = vmatpush1.msra.mxu0 0.0
    %1233 = vmatprep.subr.mxu0 0.0
    %1234 = vmatpush1.msra.mxu0 0.0
    %1235 = vmatprep.subr.mxu0 0.0
    %1236 = vmatpush1.msra.mxu0 0.0
    %1237 = vmatprep.subr.mxu0 0.0
    %1238 = vmatpush1.msra.mxu0 0.0
    %1239 = vmatprep.subr.mxu0 0.0
    %1240 = vmatpush1.msra.mxu0 0.0
    %1241 = vmatprep.subr.mxu0 0.0
    %1242 = vmatpush1.msra.mxu0 0.0
    %1243 = vmatprep.subr.mxu0 0.0
    %1244 = vmatpush1.msra.mxu0 0.0
    %1245 = vmatprep.subr.mxu0 0.0
    %1246 = vmatpush1.msra.mxu0 0.0
    %1247 = vmatprep.subr.mxu0 0.0
    %1248 = vmatpush1.msra.mxu0 0.0
    %1249 = vmatprep.subr.mxu0 0.0
    %1250 = vmatpush1.msra.mxu0 0.0
    %1251 = vmatprep.subr.mxu0 0.0
    %1252 = vmatpush1.msra.mxu0 0.0
    %1253 = vmatprep.subr.mxu0 0.0
    %1254 = vmatpush1.msra.mxu0 0.0
    %1255 = vmatprep.subr.mxu0 0.0
    %1256 = vmatpush1.msra.mxu0 0.0
    %1257 = vmatprep.subr.mxu0 0.0
    %1258 = vmatpush1.msra.mxu0 0.0
    %1259 = vmatprep.subr.mxu0 0.0
    %1260 = vmatpush1.msra.mxu0 0.0
    %1261 = vmatprep.subr.mxu0 0.0
    %1262 = vmatpush1.msra.mxu0 0.0
    %1263 = vmatprep.subr.mxu0 0.0
    %1264 = vmatpush1.msra.mxu0 0.0
    %1265 = vmatprep.subr.mxu0 0.0
    %1266 = vmatpush1.msra.mxu0 0.0
    %1267 = vmatprep.subr.mxu0 0.0
    %1268 = vmatpush1.msra.mxu0 0.0
    %1269 = vmatprep.subr.mxu0 0.0
    %1270 = vmatpush1.msra.mxu0 0.0
    %1271 = vmatprep.subr.mxu0 0.0
    %1272 = vmatpush1.msra.mxu0 0.0
    %1273 = vmatprep.subr.mxu0 0.0
    %1274 = vmatpush1.msra.mxu0 0.0
    %1275 = vmatprep.subr.mxu0 0.0
    %1276 = vmatpush1.msra.mxu0 0.0
    %1277 = vmatprep.subr.mxu0 0.0
    %1278 = vmatpush1.msra.mxu0 0.0
    %1279 = vmatprep.subr.mxu0 0.0
    %1280 = vmatpush1.msra.mxu0 0.0
    %1281 = vmatprep.mubr.f32.mxu0 0.0
    %1282 = vmatmul.mubr.f32.gmra.mrb[0].mxu0 %v789
    %v1283 = vpop.f32.mrb[0].mxu0
    %v1284 = vadd.f32 0.0, %v1283
    %v1285 = vpop.f32.mrb[0].mxu0
    %v1286 = vadd.f32 0.0, %v1285
    %1287 = vdwg.mxu0
    %1288 = vmatprep.subr.mxu0 %v98
    %1289 = vmatpush1.msra.mxu0 %v97
    %1290 = vmatprep.subr.mxu0 %v114
    %1291 = vmatpush1.msra.mxu0 %v113
    %1292 = vmatprep.subr.mxu0 %v130
    %1293 = vmatpush1.msra.mxu0 %v129
    %1294 = vmatprep.subr.mxu0 %v146
    %1295 = vmatpush1.msra.mxu0 %v145
    %1296 = vmatprep.subr.mxu0 0.0
    %1297 = vmatpush1.msra.mxu0 0.0
    %1298 = vmatprep.subr.mxu0 0.0
    %1299 = vmatpush1.msra.mxu0 0.0
    %1300 = vmatprep.subr.mxu0 0.0
    %1301 = vmatpush1.msra.mxu0 0.0
    %1302 = vmatprep.subr.mxu0 0.0
    %1303 = vmatpush1.msra.mxu0 0.0
    %1304 = vmatprep.subr.mxu0 0.0
    %1305 = vmatpush1.msra.mxu0 0.0
    %1306 = vmatprep.subr.mxu0 0.0
    %1307 = vmatpush1.msra.mxu0 0.0
    %1308 = vmatprep.subr.mxu0 0.0
    %1309 = vmatpush1.msra.mxu0 0.0
    %1310 = vmatprep.subr.mxu0 0.0
    %1311 = vmatpush1.msra.mxu0 0.0
    %1312 = vmatprep.subr.mxu0 0.0
    %1313 = vmatpush1.msra.mxu0 0.0
    %1314 = vmatprep.subr.mxu0 0.0
    %1315 = vmatpush1.msra.mxu0 0.0
    %1316 = vmatprep.subr.mxu0 0.0
    %1317 = vmatpush1.msra.mxu0 0.0
    %1318 = vmatprep.subr.mxu0 0.0
    %1319 = vmatpush1.msra.mxu0 0.0
    %1320 = vmatprep.subr.mxu0 0.0
    %1321 = vmatpush1.msra.mxu0 0.0
    %1322 = vmatprep.subr.mxu0 0.0
    %1323 = vmatpush1.msra.mxu0 0.0
    %1324 = vmatprep.subr.mxu0 0.0
    %1325 = vmatpush1.msra.mxu0 0.0
    %1326 = vmatprep.subr.mxu0 0.0
    %1327 = vmatpush1.msra.mxu0 0.0
    %1328 = vmatprep.subr.mxu0 0.0
    %1329 = vmatpush1.msra.mxu0 0.0
    %1330 = vmatprep.subr.mxu0 0.0
    %1331 = vmatpush1.msra.mxu0 0.0
    %1332 = vmatprep.subr.mxu0 0.0
    %1333 = vmatpush1.msra.mxu0 0.0
    %1334 = vmatprep.subr.mxu0 0.0
    %1335 = vmatpush1.msra.mxu0 0.0
    %1336 = vmatprep.subr.mxu0 0.0
    %1337 = vmatpush1.msra.mxu0 0.0
    %1338 = vmatprep.subr.mxu0 0.0
    %1339 = vmatpush1.msra.mxu0 0.0
    %1340 = vmatprep.subr.mxu0 0.0
    %1341 = vmatpush1.msra.mxu0 0.0
    %1342 = vmatprep.subr.mxu0 0.0
    %1343 = vmatpush1.msra.mxu0 0.0
    %1344 = vmatprep.subr.mxu0 0.0
    %1345 = vmatpush1.msra.mxu0 0.0
    %1346 = vmatprep.subr.mxu0 0.0
    %1347 = vmatpush1.msra.mxu0 0.0
    %1348 = vmatprep.subr.mxu0 0.0
    %1349 = vmatpush1.msra.mxu0 0.0
    %1350 = vmatprep.subr.mxu0 0.0
    %1351 = vmatpush1.msra.mxu0 0.0
    %1352 = vmatprep.mubr.f32.mxu0 0.0
    %1353 = vmatmul.mubr.f32.gmra.mrb[0].mxu0 %v789
    %v1354 = vpop.f32.mrb[0].mxu0
    %v1355 = vadd.f32 0.0, %v1354
    %v1356 = vpop.f32.mrb[0].mxu0
    %v1357 = vadd.f32 0.0, %v1356
    %1358 = vdwg.mxu0
    %v1359 = vmul.f32 %v35, %v858
    %v1360 = vmul.f32 %v36, %v860
    %v1361 = vmul.f32 %v37, %v929
    %v1362 = vmul.f32 %v38, %v931
    %v1363 = vmul.f32 %v39, %v1000
    %v1364 = vmul.f32 %v40, %v1002
    %v1365 = vmul.f32 %v41, %v1071
    %v1366 = vmul.f32 %v42, %v1073
    %v1367 = vmul.f32 %v43, %v1142
    %v1368 = vmul.f32 %v44, %v1144
    %v1369 = vmul.f32 %v45, %v1213
    %v1370 = vmul.f32 %v46, %v1215
    %v1371 = vmul.f32 %v47, %v1284
    %v1372 = vmul.f32 %v48, %v1286
    %v1373 = vmul.f32 %v49, %v1355
    %v1374 = vmul.f32 %v50, %v1357
    %1375 = vmatprep.subr.mxu0 0.0
    %1376 = vmatpush1.msra.mxu0 %v147
    %1377 = vmatprep.subr.mxu0 0.0
    %1378 = vmatpush1.msra.mxu0 %v148
    %1379 = vmatprep.subr.mxu0 0.0
    %1380 = vmatpush1.msra.mxu0 %v149
    %1381 = vmatprep.subr.mxu0 0.0
    %1382 = vmatpush1.msra.mxu0 %v150
    %1383 = vmatprep.subr.mxu0 0.0
    %1384 = vmatpush1.msra.mxu0 %v151
    %1385 = vmatprep.subr.mxu0 0.0
    %1386 = vmatpush1.msra.mxu0 %v152
    %1387 = vmatprep.subr.mxu0 0.0
    %1388 = vmatpush1.msra.mxu0 %v153
    %1389 = vmatprep.subr.mxu0 0.0
    %1390 = vmatpush1.msra.mxu0 %v154
    %1391 = vmatprep.subr.mxu0 0.0
    %1392 = vmatpush1.msra.mxu0 %v155
    %1393 = vmatprep.subr.mxu0 0.0
    %1394 = vmatpush1.msra.mxu0 %v156
    %1395 = vmatprep.subr.mxu0 0.0
    %1396 = vmatpush1.msra.mxu0 %v157
    %1397 = vmatprep.subr.mxu0 0.0
    %1398 = vmatpush1.msra.mxu0 %v158
    %1399 = vmatprep.subr.mxu0 0.0
    %1400 = vmatpush1.msra.mxu0 %v159
    %1401 = vmatprep.subr.mxu0 0.0
    %1402 = vmatpush1.msra.mxu0 %v160
    %1403 = vmatprep.subr.mxu0 0.0
    %1404 = vmatpush1.msra.mxu0 %v161
    %1405 = vmatprep.subr.mxu0 0.0
    %1406 = vmatpush1.msra.mxu0 %v162
    %1407 = vmatprep.subr.mxu0 0.0
    %1408 = vmatpush1.msra.mxu0 %v163
    %1409 = vmatprep.subr.mxu0 0.0
    %1410 = vmatpush1.msra.mxu0 %v164
    %1411 = vmatprep.subr.mxu0 0.0
    %1412 = vmatpush1.msra.mxu0 %v165
    %1413 = vmatprep.subr.mxu0 0.0
    %1414 = vmatpush1.msra.mxu0 %v166
    %1415 = vmatprep.subr.mxu0 0.0
    %1416 = vmatpush1.msra.mxu0 %v167
    %1417 = vmatprep.subr.mxu0 0.0
    %1418 = vmatpush1.msra.mxu0 %v168
    %1419 = vmatprep.subr.mxu0 0.0
    %1420 = vmatpush1.msra.mxu0 %v169
    %1421 = vmatprep.subr.mxu0 0.0
    %1422 = vmatpush1.msra.mxu0 %v170
    %1423 = vmatprep.subr.mxu0 0.0
    %1424 = vmatpush1.msra.mxu0 %v171
    %1425 = vmatprep.subr.mxu0 0.0
    %1426 = vmatpush1.msra.mxu0 %v172
    %1427 = vmatprep.subr.mxu0 0.0
    %1428 = vmatpush1.msra.mxu0 %v173
    %1429 = vmatprep.subr.mxu0 0.0
    %1430 = vmatpush1.msra.mxu0 %v174
    %1431 = vmatprep.subr.mxu0 0.0
    %1432 = vmatpush1.msra.mxu0 %v175
    %1433 = vmatprep.subr.mxu0 0.0
    %1434 = vmatpush1.msra.mxu0 %v176
    %1435 = vmatprep.subr.mxu0 0.0
    %1436 = vmatpush1.msra.mxu0 %v177
    %1437 = vmatprep.subr.mxu0 0.0
    %1438 = vmatpush1.msra.mxu0 %v178
    %1439 = vmatprep.mubr.f32.mxu0 %v1360
    %1440 = vmatmul.mubr.f32.gmra.mrb[0].mxu0 %v1359
    %v1441 = vpop.f32.mrb[0].mxu0
    %v1442 = vadd.f32 0.0, %v1441
    %v1443 = vpop.f32.mrb[0].mxu0
    %1444 = vdwg.mxu0
    %1445 = vmatprep.subr.mxu0 0.0
    %1446 = vmatpush1.msra.mxu0 %v179
    %1447 = vmatprep.subr.mxu0 0.0
    %1448 = vmatpush1.msra.mxu0 %v180
    %1449 = vmatprep.subr.mxu0 0.0
    %1450 = vmatpush1.msra.mxu0 %v181
    %1451 = vmatprep.subr.mxu0 0.0
    %1452 = vmatpush1.msra.mxu0 %v182
    %1453 = vmatprep.subr.mxu0 0.0
    %1454 = vmatpush1.msra.mxu0 %v183
    %1455 = vmatprep.subr.mxu0 0.0
    %1456 = vmatpush1.msra.mxu0 %v184
    %1457 = vmatprep.subr.mxu0 0.0
    %1458 = vmatpush1.msra.mxu0 %v185
    %1459 = vmatprep.subr.mxu0 0.0
    %1460 = vmatpush1.msra.mxu0 %v186
    %1461 = vmatprep.subr.mxu0 0.0
    %1462 = vmatpush1.msra.mxu0 %v187
    %1463 = vmatprep.subr.mxu0 0.0
    %1464 = vmatpush1.msra.mxu0 %v188
    %1465 = vmatprep.subr.mxu0 0.0
    %1466 = vmatpush1.msra.mxu0 %v189
    %1467 = vmatprep.subr.mxu0 0.0
    %1468 = vmatpush1.msra.mxu0 %v190
    %1469 = vmatprep.subr.mxu0 0.0
    %1470 = vmatpush1.msra.mxu0 %v191
    %1471 = vmatprep.subr.mxu0 0.0
    %1472 = vmatpush1.msra.mxu0 %v192
    %1473 = vmatprep.subr.mxu0 0.0
    %1474 = vmatpush1.msra.mxu0 %v193
    %1475 = vmatprep.subr.mxu0 0.0
    %1476 = vmatpush1.msra.mxu0 %v194
    %1477 = vmatprep.subr.mxu0 0.0
    %1478 = vmatpush1.msra.mxu0 %v195
    %1479 = vmatprep.subr.mxu0 0.0
    %1480 = vmatpush1.msra.mxu0 %v196
    %1481 = vmatprep.subr.mxu0 0.0
    %1482 = vmatpush1.msra.mxu0 %v197
    %1483 = vmatprep.subr.mxu0 0.0
    %1484 = vmatpush1.msra.mxu0 %v198
    %1485 = vmatprep.subr.mxu0 0.0
    %1486 = vmatpush1.msra.mxu0 %v199
    %1487 = vmatprep.subr.mxu0 0.0
    %1488 = vmatpush1.msra.mxu0 %v200
    %1489 = vmatprep.subr.mxu0 0.0
    %1490 = vmatpush1.msra.mxu0 %v201
    %1491 = vmatprep.subr.mxu0 0.0
    %1492 = vmatpush1.msra.mxu0 %v202
    %1493 = vmatprep.subr.mxu0 0.0
    %1494 = vmatpush1.msra.mxu0 %v203
    %1495 = vmatprep.subr.mxu0 0.0
    %1496 = vmatpush1.msra.mxu0 %v204
    %1497 = vmatprep.subr.mxu0 0.0
    %1498 = vmatpush1.msra.mxu0 %v205
    %1499 = vmatprep.subr.mxu0 0.0
    %1500 = vmatpush1.msra.mxu0 %v206
    %1501 = vmatprep.subr.mxu0 0.0
    %1502 = vmatpush1.msra.mxu0 %v207
    %1503 = vmatprep.subr.mxu0 0.0
    %1504 = vmatpush1.msra.mxu0 %v208
    %1505 = vmatprep.subr.mxu0 0.0
    %1506 = vmatpush1.msra.mxu0 %v209
    %1507 = vmatprep.subr.mxu0 0.0
    %1508 = vmatpush1.msra.mxu0 %v210
    %1509 = vmatprep.mubr.f32.mxu0 %v1362
    %1510 = vmatmul.mubr.f32.gmra.mrb[0].mxu0 %v1361
    %v1511 = vpop.f32.mrb[0].mxu0
    %v1512 = vadd.f32 %v1442, %v1511
    %v1513 = vpop.f32.mrb[0].mxu0
    %1514 = vdwg.mxu0
    %1515 = vmatprep.subr.mxu0 0.0
    %1516 = vmatpush1.msra.mxu0 %v211
    %1517 = vmatprep.subr.mxu0 0.0
    %1518 = vmatpush1.msra.mxu0 %v212
    %1519 = vmatprep.subr.mxu0 0.0
    %1520 = vmatpush1.msra.mxu0 %v213
    %1521 = vmatprep.subr.mxu0 0.0
    %1522 = vmatpush1.msra.mxu0 %v214
    %1523 = vmatprep.subr.mxu0 0.0
    %1524 = vmatpush1.msra.mxu0 %v215
    %1525 = vmatprep.subr.mxu0 0.0
    %1526 = vmatpush1.msra.mxu0 %v216
    %1527 = vmatprep.subr.mxu0 0.0
    %1528 = vmatpush1.msra.mxu0 %v217
    %1529 = vmatprep.subr.mxu0 0.0
    %1530 = vmatpush1.msra.mxu0 %v218
    %1531 = vmatprep.subr.mxu0 0.0
    %1532 = vmatpush1.msra.mxu0 %v219
    %1533 = vmatprep.subr.mxu0 0.0
    %1534 = vmatpush1.msra.mxu0 %v220
    %1535 = vmatprep.subr.mxu0 0.0
    %1536 = vmatpush1.msra.mxu0 %v221
    %1537 = vmatprep.subr.mxu0 0.0
    %1538 = vmatpush1.msra.mxu0 %v222
    %1539 = vmatprep.subr.mxu0 0.0
    %1540 = vmatpush1.msra.mxu0 %v223
    %1541 = vmatprep.subr.mxu0 0.0
    %1542 = vmatpush1.msra.mxu0 %v224
    %1543 = vmatprep.subr.mxu0 0.0
    %1544 = vmatpush1.msra.mxu0 %v225
    %1545 = vmatprep.subr.mxu0 0.0
    %1546 = vmatpush1.msra.mxu0 %v226
    %1547 = vmatprep.subr.mxu0 0.0
    %1548 = vmatpush1.msra.mxu0 %v227
    %1549 = vmatprep.subr.mxu0 0.0
    %1550 = vmatpush1.msra.mxu0 %v228
    %1551 = vmatprep.subr.mxu0 0.0
    %1552 = vmatpush1.msra.mxu0 %v229
    %1553 = vmatprep.subr.mxu0 0.0
    %1554 = vmatpush1.msra.mxu0 %v230
    %1555 = vmatprep.subr.mxu0 0.0
    %1556 = vmatpush1.msra.mxu0 %v231
    %1557 = vmatprep.subr.mxu0 0.0
    %1558 = vmatpush1.msra.mxu0 %v232
    %1559 = vmatprep.subr.mxu0 0.0
    %1560 = vmatpush1.msra.mxu0 %v233
    %1561 = vmatprep.subr.mxu0 0.0
    %1562 = vmatpush1.msra.mxu0 %v234
    %1563 = vmatprep.subr.mxu0 0.0
    %1564 = vmatpush1.msra.mxu0 %v235
    %1565 = vmatprep.subr.mxu0 0.0
    %1566 = vmatpush1.msra.mxu0 %v236
    %1567 = vmatprep.subr.mxu0 0.0
    %1568 = vmatpush1.msra.mxu0 %v237
    %1569 = vmatprep.subr.mxu0 0.0
    %1570 = vmatpush1.msra.mxu0 %v238
    %1571 = vmatprep.subr.mxu0 0.0
    %1572 = vmatpush1.msra.mxu0 %v239
    %1573 = vmatprep.subr.mxu0 0.0
    %1574 = vmatpush1.msra.mxu0 %v240
    %1575 = vmatprep.subr.mxu0 0.0
    %1576 = vmatpush1.msra.mxu0 %v241
    %1577 = vmatprep.subr.mxu0 0.0
    %1578 = vmatpush1.msra.mxu0 %v242
    %1579 = vmatprep.mubr.f32.mxu0 %v1364
    %1580 = vmatmul.mubr.f32.gmra.mrb[0].mxu0 %v1363
    %v1581 = vpop.f32.mrb[0].mxu0
    %v1582 = vadd.f32 %v1512, %v1581
    %v1583 = vpop.f32.mrb[0].mxu0
    %1584 = vdwg.mxu0
    %1585 = vmatprep.subr.mxu0 0.0
    %1586 = vmatpush1.msra.mxu0 %v243
    %1587 = vmatprep.subr.mxu0 0.0
    %1588 = vmatpush1.msra.mxu0 %v244
    %1589 = vmatprep.subr.mxu0 0.0
    %1590 = vmatpush1.msra.mxu0 %v245
    %1591 = vmatprep.subr.mxu0 0.0
    %1592 = vmatpush1.msra.mxu0 %v246
    %1593 = vmatprep.subr.mxu0 0.0
    %1594 = vmatpush1.msra.mxu0 %v247
    %1595 = vmatprep.subr.mxu0 0.0
    %1596 = vmatpush1.msra.mxu0 %v248
    %1597 = vmatprep.subr.mxu0 0.0
    %1598 = vmatpush1.msra.mxu0 %v249
    %1599 = vmatprep.subr.mxu0 0.0
    %1600 = vmatpush1.msra.mxu0 %v250
    %1601 = vmatprep.subr.mxu0 0.0
    %1602 = vmatpush1.msra.mxu0 %v251
    %1603 = vmatprep.subr.mxu0 0.0
    %1604 = vmatpush1.msra.mxu0 %v252
    %1605 = vmatprep.subr.mxu0 0.0
    %1606 = vmatpush1.msra.mxu0 %v253
    %1607 = vmatprep.subr.mxu0 0.0
    %1608 = vmatpush1.msra.mxu0 %v254
    %1609 = vmatprep.subr.mxu0 0.0
    %1610 = vmatpush1.msra.mxu0 %v255
    %1611 = vmatprep.subr.mxu0 0.0
    %1612 = vmatpush1.msra.mxu0 %v256
    %1613 = vmatprep.subr.mxu0 0.0
    %1614 = vmatpush1.msra.mxu0 %v257
    %1615 = vmatprep.subr.mxu0 0.0
    %1616 = vmatpush1.msra.mxu0 %v258
    %1617 = vmatprep.subr.mxu0 0.0
    %1618 = vmatpush1.msra.mxu0 %v259
    %1619 = vmatprep.subr.mxu0 0.0
    %1620 = vmatpush1.msra.mxu0 %v260
    %1621 = vmatprep.subr.mxu0 0.0
    %1622 = vmatpush1.msra.mxu0 %v261
    %1623 = vmatprep.subr.mxu0 0.0
    %1624 = vmatpush1.msra.mxu0 %v262
    %1625 = vmatprep.subr.mxu0 0.0
    %1626 = vmatpush1.msra.mxu0 %v263
    %1627 = vmatprep.subr.mxu0 0.0
    %1628 = vmatpush1.msra.mxu0 %v264
    %1629 = vmatprep.subr.mxu0 0.0
    %1630 = vmatpush1.msra.mxu0 %v265
    %1631 = vmatprep.subr.mxu0 0.0
    %1632 = vmatpush1.msra.mxu0 %v266
    %1633 = vmatprep.subr.mxu0 0.0
    %1634 = vmatpush1.msra.mxu0 %v267
    %1635 = vmatprep.subr.mxu0 0.0
    %1636 = vmatpush1.msra.mxu0 %v268
    %1637 = vmatprep.subr.mxu0 0.0
    %1638 = vmatpush1.msra.mxu0 %v269
    %1639 = vmatprep.subr.mxu0 0.0
    %1640 = vmatpush1.msra.mxu0 %v270
    %1641 = vmatprep.subr.mxu0 0.0
    %1642 = vmatpush1.msra.mxu0 %v271
    %1643 = vmatprep.subr.mxu0 0.0
    %1644 = vmatpush1.msra.mxu0 %v272
    %1645 = vmatprep.subr.mxu0 0.0
    %1646 = vmatpush1.msra.mxu0 %v273
    %1647 = vmatprep.subr.mxu0 0.0
    %1648 = vmatpush1.msra.mxu0 %v274
    %1649 = vmatprep.mubr.f32.mxu0 %v1366
    %1650 = vmatmul.mubr.f32.gmra.mrb[0].mxu0 %v1365
    %v1651 = vpop.f32.mrb[0].mxu0
    %v1652 = vadd.f32 %v1582, %v1651
    %v1653 = vpop.f32.mrb[0].mxu0
    %1654 = vdwg.mxu0
    %1655 = vmatprep.subr.mxu0 0.0
    %1656 = vmatpush1.msra.mxu0 %v275
    %1657 = vmatprep.subr.mxu0 0.0
    %1658 = vmatpush1.msra.mxu0 %v276
    %1659 = vmatprep.subr.mxu0 0.0
    %1660 = vmatpush1.msra.mxu0 %v277
    %1661 = vmatprep.subr.mxu0 0.0
    %1662 = vmatpush1.msra.mxu0 %v278
    %1663 = vmatprep.subr.mxu0 0.0
    %1664 = vmatpush1.msra.mxu0 %v279
    %1665 = vmatprep.subr.mxu0 0.0
    %1666 = vmatpush1.msra.mxu0 %v280
    %1667 = vmatprep.subr.mxu0 0.0
    %1668 = vmatpush1.msra.mxu0 %v281
    %1669 = vmatprep.subr.mxu0 0.0
    %1670 = vmatpush1.msra.mxu0 %v282
    %1671 = vmatprep.subr.mxu0 0.0
    %1672 = vmatpush1.msra.mxu0 %v283
    %1673 = vmatprep.subr.mxu0 0.0
    %1674 = vmatpush1.msra.mxu0 %v284
    %1675 = vmatprep.subr.mxu0 0.0
    %1676 = vmatpush1.msra.mxu0 %v285
    %1677 = vmatprep.subr.mxu0 0.0
    %1678 = vmatpush1.msra.mxu0 %v286
    %1679 = vmatprep.subr.mxu0 0.0
    %1680 = vmatpush1.msra.mxu0 %v287
    %1681 = vmatprep.subr.mxu0 0.0
    %1682 = vmatpush1.msra.mxu0 %v288
    %1683 = vmatprep.subr.mxu0 0.0
    %1684 = vmatpush1.msra.mxu0 %v289
    %1685 = vmatprep.subr.mxu0 0.0
    %1686 = vmatpush1.msra.mxu0 %v290
    %1687 = vmatprep.subr.mxu0 0.0
    %1688 = vmatpush1.msra.mxu0 %v291
    %1689 = vmatprep.subr.mxu0 0.0
    %1690 = vmatpush1.msra.mxu0 %v292
    %1691 = vmatprep.subr.mxu0 0.0
    %1692 = vmatpush1.msra.mxu0 %v293
    %1693 = vmatprep.subr.mxu0 0.0
    %1694 = vmatpush1.msra.mxu0 %v294
    %1695 = vmatprep.subr.mxu0 0.0
    %1696 = vmatpush1.msra.mxu0 %v295
    %1697 = vmatprep.subr.mxu0 0.0
    %1698 = vmatpush1.msra.mxu0 %v296
    %1699 = vmatprep.subr.mxu0 0.0
    %1700 = vmatpush1.msra.mxu0 %v297
    %1701 = vmatprep.subr.mxu0 0.0
    %1702 = vmatpush1.msra.mxu0 %v298
    %1703 = vmatprep.subr.mxu0 0.0
    %1704 = vmatpush1.msra.mxu0 %v299
    %1705 = vmatprep.subr.mxu0 0.0
    %1706 = vmatpush1.msra.mxu0 %v300
    %1707 = vmatprep.subr.mxu0 0.0
    %1708 = vmatpush1.msra.mxu0 %v301
    %1709 = vmatprep.subr.mxu0 0.0
    %1710 = vmatpush1.msra.mxu0 %v302
    %1711 = vmatprep.subr.mxu0 0.0
    %1712 = vmatpush1.msra.mxu0 %v303
    %1713 = vmatprep.subr.mxu0 0.0
    %1714 = vmatpush1.msra.mxu0 %v304
    %1715 = vmatprep.subr.mxu0 0.0
    %1716 = vmatpush1.msra.mxu0 %v305
    %1717 = vmatprep.subr.mxu0 0.0
    %1718 = vmatpush1.msra.mxu0 %v306
    %1719 = vmatprep.mubr.f32.mxu0 %v1368
    %1720 = vmatmul.mubr.f32.gmra.mrb[0].mxu0 %v1367
    %v1721 = vpop.f32.mrb[0].mxu0
    %v1722 = vadd.f32 %v1652, %v1721
    %v1723 = vpop.f32.mrb[0].mxu0
    %1724 = vdwg.mxu0
    %1725 = vmatprep.subr.mxu0 0.0
    %1726 = vmatpush1.msra.mxu0 %v307
    %1727 = vmatprep.subr.mxu0 0.0
    %1728 = vmatpush1.msra.mxu0 %v308
    %1729 = vmatprep.subr.mxu0 0.0
    %1730 = vmatpush1.msra.mxu0 %v309
    %1731 = vmatprep.subr.mxu0 0.0
    %1732 = vmatpush1.msra.mxu0 %v310
    %1733 = vmatprep.subr.mxu0 0.0
    %1734 = vmatpush1.msra.mxu0 %v311
    %1735 = vmatprep.subr.mxu0 0.0
    %1736 = vmatpush1.msra.mxu0 %v312
    %1737 = vmatprep.subr.mxu0 0.0
    %1738 = vmatpush1.msra.mxu0 %v313
    %1739 = vmatprep.subr.mxu0 0.0
    %1740 = vmatpush1.msra.mxu0 %v314
    %1741 = vmatprep.subr.mxu0 0.0
    %1742 = vmatpush1.msra.mxu0 %v315
    %1743 = vmatprep.subr.mxu0 0.0
    %1744 = vmatpush1.msra.mxu0 %v316
    %1745 = vmatprep.subr.mxu0 0.0
    %1746 = vmatpush1.msra.mxu0 %v317
    %1747 = vmatprep.subr.mxu0 0.0
    %1748 = vmatpush1.msra.mxu0 %v318
    %1749 = vmatprep.subr.mxu0 0.0
    %1750 = vmatpush1.msra.mxu0 %v319
    %1751 = vmatprep.subr.mxu0 0.0
    %1752 = vmatpush1.msra.mxu0 %v320
    %1753 = vmatprep.subr.mxu0 0.0
    %1754 = vmatpush1.msra.mxu0 %v321
    %1755 = vmatprep.subr.mxu0 0.0
    %1756 = vmatpush1.msra.mxu0 %v322
    %1757 = vmatprep.subr.mxu0 0.0
    %1758 = vmatpush1.msra.mxu0 %v323
    %1759 = vmatprep.subr.mxu0 0.0
    %1760 = vmatpush1.msra.mxu0 %v324
    %1761 = vmatprep.subr.mxu0 0.0
    %1762 = vmatpush1.msra.mxu0 %v325
    %1763 = vmatprep.subr.mxu0 0.0
    %1764 = vmatpush1.msra.mxu0 %v326
    %1765 = vmatprep.subr.mxu0 0.0
    %1766 = vmatpush1.msra.mxu0 %v327
    %1767 = vmatprep.subr.mxu0 0.0
    %1768 = vmatpush1.msra.mxu0 %v328
    %1769 = vmatprep.subr.mxu0 0.0
    %1770 = vmatpush1.msra.mxu0 %v329
    %1771 = vmatprep.subr.mxu0 0.0
    %1772 = vmatpush1.msra.mxu0 %v330
    %1773 = vmatprep.subr.mxu0 0.0
    %1774 = vmatpush1.msra.mxu0 %v331
    %1775 = vmatprep.subr.mxu0 0.0
    %1776 = vmatpush1.msra.mxu0 %v332
    %1777 = vmatprep.subr.mxu0 0.0
    %1778 = vmatpush1.msra.mxu0 %v333
    %1779 = vmatprep.subr.mxu0 0.0
    %1780 = vmatpush1.msra.mxu0 %v334
    %1781 = vmatprep.subr.mxu0 0.0
    %1782 = vmatpush1.msra.mxu0 %v335
    %1783 = vmatprep.subr.mxu0 0.0
    %1784 = vmatpush1.msra.mxu0 %v336
    %1785 = vmatprep.subr.mxu0 0.0
    %1786 = vmatpush1.msra.mxu0 %v337
    %1787 = vmatprep.subr.mxu0 0.0
    %1788 = vmatpush1.msra.mxu0 %v338
    %1789 = vmatprep.mubr.f32.mxu0 %v1370
    %1790 = vmatmul.mubr.f32.gmra.mrb[0].mxu0 %v1369
    %v1791 = vpop.f32.mrb[0].mxu0
    %v1792 = vadd.f32 %v1722, %v1791
    %v1793 = vpop.f32.mrb[0].mxu0
    %1794 = vdwg.mxu0
    %1795 = vmatprep.subr.mxu0 0.0
    %1796 = vmatpush1.msra.mxu0 %v339
    %1797 = vmatprep.subr.mxu0 0.0
    %1798 = vmatpush1.msra.mxu0 %v340
    %1799 = vmatprep.subr.mxu0 0.0
    %1800 = vmatpush1.msra.mxu0 %v341
    %1801 = vmatprep.subr.mxu0 0.0
    %1802 = vmatpush1.msra.mxu0 %v342
    %1803 = vmatprep.subr.mxu0 0.0
    %1804 = vmatpush1.msra.mxu0 %v343
    %1805 = vmatprep.subr.mxu0 0.0
    %1806 = vmatpush1.msra.mxu0 %v344
    %1807 = vmatprep.subr.mxu0 0.0
    %1808 = vmatpush1.msra.mxu0 %v345
    %1809 = vmatprep.subr.mxu0 0.0
    %1810 = vmatpush1.msra.mxu0 %v346
    %1811 = vmatprep.subr.mxu0 0.0
    %1812 = vmatpush1.msra.mxu0 %v347
    %1813 = vmatprep.subr.mxu0 0.0
    %1814 = vmatpush1.msra.mxu0 %v348
    %1815 = vmatprep.subr.mxu0 0.0
    %1816 = vmatpush1.msra.mxu0 %v349
    %1817 = vmatprep.subr.mxu0 0.0
    %1818 = vmatpush1.msra.mxu0 %v350
    %1819 = vmatprep.subr.mxu0 0.0
    %1820 = vmatpush1.msra.mxu0 %v351
    %1821 = vmatprep.subr.mxu0 0.0
    %1822 = vmatpush1.msra.mxu0 %v352
    %1823 = vmatprep.subr.mxu0 0.0
    %1824 = vmatpush1.msra.mxu0 %v353
    %1825 = vmatprep.subr.mxu0 0.0
    %1826 = vmatpush1.msra.mxu0 %v354
    %1827 = vmatprep.subr.mxu0 0.0
    %1828 = vmatpush1.msra.mxu0 %v355
    %1829 = vmatprep.subr.mxu0 0.0
    %1830 = vmatpush1.msra.mxu0 %v356
    %1831 = vmatprep.subr.mxu0 0.0
    %1832 = vmatpush1.msra.mxu0 %v357
    %1833 = vmatprep.subr.mxu0 0.0
    %1834 = vmatpush1.msra.mxu0 %v358
    %1835 = vmatprep.subr.mxu0 0.0
    %1836 = vmatpush1.msra.mxu0 %v359
    %1837 = vmatprep.subr.mxu0 0.0
    %1838 = vmatpush1.msra.mxu0 %v360
    %1839 = vmatprep.subr.mxu0 0.0
    %1840 = vmatpush1.msra.mxu0 %v361
    %1841 = vmatprep.subr.mxu0 0.0
    %1842 = vmatpush1.msra.mxu0 %v362
    %1843 = vmatprep.subr.mxu0 0.0
    %1844 = vmatpush1.msra.mxu0 %v363
    %1845 = vmatprep.subr.mxu0 0.0
    %1846 = vmatpush1.msra.mxu0 %v364
    %1847 = vmatprep.subr.mxu0 0.0
    %1848 = vmatpush1.msra.mxu0 %v365
    %1849 = vmatprep.subr.mxu0 0.0
    %1850 = vmatpush1.msra.mxu0 %v366
    %1851 = vmatprep.subr.mxu0 0.0
    %1852 = vmatpush1.msra.mxu0 %v367
    %1853 = vmatprep.subr.mxu0 0.0
    %1854 = vmatpush1.msra.mxu0 %v368
    %1855 = vmatprep.subr.mxu0 0.0
    %1856 = vmatpush1.msra.mxu0 %v369
    %1857 = vmatprep.subr.mxu0 0.0
    %1858 = vmatpush1.msra.mxu0 %v370
    %1859 = vmatprep.mubr.f32.mxu0 %v1372
    %1860 = vmatmul.mubr.f32.gmra.mrb[0].mxu0 %v1371
    %v1861 = vpop.f32.mrb[0].mxu0
    %v1862 = vadd.f32 %v1792, %v1861
    %v1863 = vpop.f32.mrb[0].mxu0
    %1864 = vdwg.mxu0
    %1865 = vmatprep.subr.mxu0 0.0
    %1866 = vmatpush1.msra.mxu0 %v371
    %1867 = vmatprep.subr.mxu0 0.0
    %1868 = vmatpush1.msra.mxu0 %v372
    %1869 = vmatprep.subr.mxu0 0.0
    %1870 = vmatpush1.msra.mxu0 %v373
    %1871 = vmatprep.subr.mxu0 0.0
    %1872 = vmatpush1.msra.mxu0 %v374
    %1873 = vmatprep.subr.mxu0 0.0
    %1874 = vmatpush1.msra.mxu0 %v375
    %1875 = vmatprep.subr.mxu0 0.0
    %1876 = vmatpush1.msra.mxu0 %v376
    %1877 = vmatprep.subr.mxu0 0.0
    %1878 = vmatpush1.msra.mxu0 %v377
    %1879 = vmatprep.subr.mxu0 0.0
    %1880 = vmatpush1.msra.mxu0 %v378
    %1881 = vmatprep.subr.mxu0 0.0
    %1882 = vmatpush1.msra.mxu0 %v379
    %1883 = vmatprep.subr.mxu0 0.0
    %1884 = vmatpush1.msra.mxu0 %v380
    %1885 = vmatprep.subr.mxu0 0.0
    %1886 = vmatpush1.msra.mxu0 %v381
    %1887 = vmatprep.subr.mxu0 0.0
    %1888 = vmatpush1.msra.mxu0 %v382
    %1889 = vmatprep.subr.mxu0 0.0
    %1890 = vmatpush1.msra.mxu0 %v383
    %1891 = vmatprep.subr.mxu0 0.0
    %1892 = vmatpush1.msra.mxu0 %v384
    %1893 = vmatprep.subr.mxu0 0.0
    %1894 = vmatpush1.msra.mxu0 %v385
    %1895 = vmatprep.subr.mxu0 0.0
    %1896 = vmatpush1.msra.mxu0 %v386
    %1897 = vmatprep.subr.mxu0 0.0
    %1898 = vmatpush1.msra.mxu0 %v387
    %1899 = vmatprep.subr.mxu0 0.0
    %1900 = vmatpush1.msra.mxu0 %v388
    %1901 = vmatprep.subr.mxu0 0.0
    %1902 = vmatpush1.msra.mxu0 %v389
    %1903 = vmatprep.subr.mxu0 0.0
    %1904 = vmatpush1.msra.mxu0 %v390
    %1905 = vmatprep.subr.mxu0 0.0
    %1906 = vmatpush1.msra.mxu0 %v391
    %1907 = vmatprep.subr.mxu0 0.0
    %1908 = vmatpush1.msra.mxu0 %v392
    %1909 = vmatprep.subr.mxu0 0.0
    %1910 = vmatpush1.msra.mxu0 %v393
    %1911 = vmatprep.subr.mxu0 0.0
    %1912 = vmatpush1.msra.mxu0 %v394
    %1913 = vmatprep.subr.mxu0 0.0
    %1914 = vmatpush1.msra.mxu0 %v395
    %1915 = vmatprep.subr.mxu0 0.0
    %1916 = vmatpush1.msra.mxu0 %v396
    %1917 = vmatprep.subr.mxu0 0.0
    %1918 = vmatpush1.msra.mxu0 %v397
    %1919 = vmatprep.subr.mxu0 0.0
    %1920 = vmatpush1.msra.mxu0 %v398
    %1921 = vmatprep.subr.mxu0 0.0
    %1922 = vmatpush1.msra.mxu0 %v399
    %1923 = vmatprep.subr.mxu0 0.0
    %1924 = vmatpush1.msra.mxu0 %v400
    %1925 = vmatprep.subr.mxu0 0.0
    %1926 = vmatpush1.msra.mxu0 %v401
    %1927 = vmatprep.subr.mxu0 0.0
    %1928 = vmatpush1.msra.mxu0 %v402
    %1929 = vmatprep.mubr.f32.mxu0 %v1374
    %1930 = vmatmul.mubr.f32.gmra.mrb[0].mxu0 %v1373
    %v1931 = vpop.f32.mrb[0].mxu0
    %v1932 = vadd.f32 %v1862, %v1931
    %v1933 = vpop.f32.mrb[0].mxu0
    %1934 = vdwg.mxu0
    %vm1935 = vcmask 523264
    %1936 = vst.msk [vmem:[#allocation4] sm:$0xff] %vm1935, %v1932
    %v1937 = vsel %vm1935, %v1932, -inf
    %1938 = vmax.xlane.f32.xlu0 %v1937
    %v1939 = vpop.xlane.xlu0 %1938
    %v1940 = vsub.f32 %v1932, %v1939
    %v1941 = vmul.f32 %v1940, 1.442695
    %v1942 = vpow.pop %v1941
    %v1943 = vsel %vm1935, %v1942, 0.0
    %1944 = vadd.xlane.f32.xlu0 %v1943
    %v1945 = vpop.xlane.xlu0 %1944
    %v1946 = vrcp.pop %v1945
    %v1947 = vmul.f32 %v1942, %v1946
    %v1949 = vsel %vm1935, %v1947, 0
    %1951 = vmatprep.subr.mxu0 %v404
    %1952 = vmatpush1.msra.mxu0 %v403
    %1953 = vmatprep.subr.mxu0 %v420
    %1954 = vmatpush1.msra.mxu0 %v419
    %1955 = vmatprep.subr.mxu0 %v436
    %1956 = vmatpush1.msra.mxu0 %v435
    %1957 = vmatprep.subr.mxu0 %v452
    %1958 = vmatpush1.msra.mxu0 %v451
    %1959 = vmatprep.subr.mxu0 %v468
    %1960 = vmatpush1.msra.mxu0 %v467
    %1961 = vmatprep.subr.mxu0 %v484
    %1962 = vmatpush1.msra.mxu0 %v483
    %1963 = vmatprep.subr.mxu0 %v500
    %1964 = vmatpush1.msra.mxu0 %v499
    %1965 = vmatprep.subr.mxu0 %v516
    %1966 = vmatpush1.msra.mxu0 %v515
    %1967 = vmatprep.subr.mxu0 0.0
    %1968 = vmatpush1.msra.mxu0 0.0
    %1969 = vmatprep.subr.mxu0 0.0
    %1970 = vmatpush1.msra.mxu0 0.0
    %1971 = vmatprep.subr.mxu0 0.0
    %1972 = vmatpush1.msra.mxu0 0.0
    %1973 = vmatprep.subr.mxu0 0.0
    %1974 = vmatpush1.msra.mxu0 0.0
    %1975 = vmatprep.subr.mxu0 0.0
    %1976 = vmatpush1.msra.mxu0 0.0
    %1977 = vmatprep.subr.mxu0 0.0
    %1978 = vmatpush1.msra.mxu0 0.0
    %1979 = vmatprep.subr.mxu0 0.0
    %1980 = vmatpush1.msra.mxu0 0.0
    %1981 = vmatprep.subr.mxu0 0.0
    %1982 = vmatpush1.msra.mxu0 0.0
    %1983 = vmatprep.subr.mxu0 0.0
    %1984 = vmatpush1.msra.mxu0 0.0
    %1985 = vmatprep.subr.mxu0 0.0
    %1986 = vmatpush1.msra.mxu0 0.0
    %1987 = vmatprep.subr.mxu0 0.0
    %1988 = vmatpush1.msra.mxu0 0.0
    %1989 = vmatprep.subr.mxu0 0.0
    %1990 = vmatpush1.msra.mxu0 0.0
    %1991 = vmatprep.subr.mxu0 0.0
    %1992 = vmatpush1.msra.mxu0 0.0
    %1993 = vmatprep.subr.mxu0 0.0
    %1994 = vmatpush1.msra.mxu0 0.0
    %1995 = vmatprep.subr.mxu0 0.0
    %1996 = vmatpush1.msra.mxu0 0.0
    %1997 = vmatprep.subr.mxu0 0.0
    %1998 = vmatpush1.msra.mxu0 0.0
    %1999 = vmatprep.subr.mxu0 0.0
    %2000 = vmatpush1.msra.mxu0 0.0
    %2001 = vmatprep.subr.mxu0 0.0
    %2002 = vmatpush1.msra.mxu0 0.0
    %2003 = vmatprep.subr.mxu0 0.0
    %2004 = vmatpush1.msra.mxu0 0.0
    %2005 = vmatprep.subr.mxu0 0.0
    %2006 = vmatpush1.msra.mxu0 0.0
    %2007 = vmatprep.subr.mxu0 0.0
    %2008 = vmatpush1.msra.mxu0 0.0
    %2009 = vmatprep.subr.mxu0 0.0
    %2010 = vmatpush1.msra.mxu0 0.0
    %2011 = vmatprep.subr.mxu0 0.0
    %2012 = vmatpush1.msra.mxu0 0.0
    %2013 = vmatprep.subr.mxu0 0.0
    %2014 = vmatpush1.msra.mxu0 0.0
    %2015 = vmatprep.mubr.f32.mxu0 0.0
    %2016 = vmatmul.mubr.f32.gmra.mrb[0].mxu0 %v1949
    %v2017 = vpop.f32.mrb[0].mxu0
    %v2018 = vadd.f32 0.0, %v2017
    %v2019 = vpop.f32.mrb[0].mxu0
    %v2020 = vadd.f32 0.0, %v2019
    %2021 = vdwg.mxu0
    %2022 = vmatprep.subr.mxu0 %v406
    %2023 = vmatpush1.msra.mxu0 %v405
    %2024 = vmatprep.subr.mxu0 %v422
    %2025 = vmatpush1.msra.mxu0 %v421
    %2026 = vmatprep.subr.mxu0 %v438
    %2027 = vmatpush1.msra.mxu0 %v437
    %2028 = vmatprep.subr.mxu0 %v454
    %2029 = vmatpush1.msra.mxu0 %v453
    %2030 = vmatprep.subr.mxu0 %v470
    %2031 = vmatpush1.msra.mxu0 %v469
    %2032 = vmatprep.subr.mxu0 %v486
    %2033 = vmatpush1.msra.mxu0 %v485
    %2034 = vmatprep.subr.mxu0 %v502
    %2035 = vmatpush1.msra.mxu0 %v501
    %2036 = vmatprep.subr.mxu0 %v518
    %2037 = vmatpush1.msra.mxu0 %v517
    %2038 = vmatprep.subr.mxu0 0.0
    %2039 = vmatpush1.msra.mxu0 0.0
    %2040 = vmatprep.subr.mxu0 0.0
    %2041 = vmatpush1.msra.mxu0 0.0
    %2042 = vmatprep.subr.mxu0 0.0
    %2043 = vmatpush1.msra.mxu0 0.0
    %2044 = vmatprep.subr.mxu0 0.0
    %2045 = vmatpush1.msra.mxu0 0.0
    %2046 = vmatprep.subr.mxu0 0.0
    %2047 = vmatpush1.msra.mxu0 0.0
    %2048 = vmatprep.subr.mxu0 0.0
    %2049 = vmatpush1.msra.mxu0 0.0
    %2050 = vmatprep.subr.mxu0 0.0
    %2051 = vmatpush1.msra.mxu0 0.0
    %2052 = vmatprep.subr.mxu0 0.0
    %2053 = vmatpush1.msra.mxu0 0.0
    %2054 = vmatprep.subr.mxu0 0.0
    %2055 = vmatpush1.msra.mxu0 0.0
    %2056 = vmatprep.subr.mxu0 0.0
    %2057 = vmatpush1.msra.mxu0 0.0
    %2058 = vmatprep.subr.mxu0 0.0
    %2059 = vmatpush1.msra.mxu0 0.0
    %2060 = vmatprep.subr.mxu0 0.0
    %2061 = vmatpush1.msra.mxu0 0.0
    %2062 = vmatprep.subr.mxu0 0.0
    %2063 = vmatpush1.msra.mxu0 0.0
    %2064 = vmatprep.subr.mxu0 0.0
    %2065 = vmatpush1.msra.mxu0 0.0
    %2066 = vmatprep.subr.mxu0 0.0
    %2067 = vmatpush1.msra.mxu0 0.0
    %2068 = vmatprep.subr.mxu0 0.0
    %2069 = vmatpush1.msra.mxu0 0.0
    %2070 = vmatprep.subr.mxu0 0.0
    %2071 = vmatpush1.msra.mxu0 0.0
    %2072 = vmatprep.subr.mxu0 0.0
    %2073 = vmatpush1.msra.mxu0 0.0
    %2074 = vmatprep.subr.mxu0 0.0
    %2075 = vmatpush1.msra.mxu0 0.0
    %2076 = vmatprep.subr.mxu0 0.0
    %2077 = vmatpush1.msra.mxu0 0.0
    %2078 = vmatprep.subr.mxu0 0.0
    %2079 = vmatpush1.msra.mxu0 0.0
    %2080 = vmatprep.subr.mxu0 0.0
    %2081 = vmatpush1.msra.mxu0 0.0
    %2082 = vmatprep.subr.mxu0 0.0
    %2083 = vmatpush1.msra.mxu0 0.0
    %2084 = vmatprep.subr.mxu0 0.0
    %2085 = vmatpush1.msra.mxu0 0.0
    %2086 = vmatprep.mubr.f32.mxu0 0.0
    %2087 = vmatmul.mubr.f32.gmra.mrb[0].mxu0 %v1949
    %v2088 = vpop.f32.mrb[0].mxu0
    %v2089 = vadd.f32 0.0, %v2088
    %v2090 = vpop.f32.mrb[0].mxu0
    %v2091 = vadd.f32 0.0, %v2090
    %2092 = vdwg.mxu0
    %2093 = vmatprep.subr.mxu0 %v408
    %2094 = vmatpush1.msra.mxu0 %v407
    %2095 = vmatprep.subr.mxu0 %v424
    %2096 = vmatpush1.msra.mxu0 %v423
    %2097 = vmatprep.subr.mxu0 %v440
    %2098 = vmatpush1.msra.mxu0 %v439
    %2099 = vmatprep.subr.mxu0 %v456
    %2100 = vmatpush1.msra.mxu0 %v455
    %2101 = vmatprep.subr.mxu0 %v472
    %2102 = vmatpush1.msra.mxu0 %v471
    %2103 = vmatprep.subr.mxu0 %v488
    %2104 = vmatpush1.msra.mxu0 %v487
    %2105 = vmatprep.subr.mxu0 %v504
    %2106 = vmatpush1.msra.mxu0 %v503
    %2107 = vmatprep.subr.mxu0 %v520
    %2108 = vmatpush1.msra.mxu0 %v519
    %2109 = vmatprep.subr.mxu0 0.0
    %2110 = vmatpush1.msra.mxu0 0.0
    %2111 = vmatprep.subr.mxu0 0.0
    %2112 = vmatpush1.msra.mxu0 0.0
    %2113 = vmatprep.subr.mxu0 0.0
    %2114 = vmatpush1.msra.mxu0 0.0
    %2115 = vmatprep.subr.mxu0 0.0
    %2116 = vmatpush1.msra.mxu0 0.0
    %2117 = vmatprep.subr.mxu0 0.0
    %2118 = vmatpush1.msra.mxu0 0.0
    %2119 = vmatprep.subr.mxu0 0.0
    %2120 = vmatpush1.msra.mxu0 0.0
    %2121 = vmatprep.subr.mxu0 0.0
    %2122 = vmatpush1.msra.mxu0 0.0
    %2123 = vmatprep.subr.mxu0 0.0
    %2124 = vmatpush1.msra.mxu0 0.0
    %2125 = vmatprep.subr.mxu0 0.0
    %2126 = vmatpush1.msra.mxu0 0.0
    %2127 = vmatprep.subr.mxu0 0.0
    %2128 = vmatpush1.msra.mxu0 0.0
    %2129 = vmatprep.subr.mxu0 0.0
    %2130 = vmatpush1.msra.mxu0 0.0
    %2131 = vmatprep.subr.mxu0 0.0
    %2132 = vmatpush1.msra.mxu0 0.0
    %2133 = vmatprep.subr.mxu0 0.0
    %2134 = vmatpush1.msra.mxu0 0.0
    %2135 = vmatprep.subr.mxu0 0.0
    %2136 = vmatpush1.msra.mxu0 0.0
    %2137 = vmatprep.subr.mxu0 0.0
    %2138 = vmatpush1.msra.mxu0 0.0
    %2139 = vmatprep.subr.mxu0 0.0
    %2140 = vmatpush1.msra.mxu0 0.0
    %2141 = vmatprep.subr.mxu0 0.0
    %2142 = vmatpush1.msra.mxu0 0.0
    %2143 = vmatprep.subr.mxu0 0.0
    %2144 = vmatpush1.msra.mxu0 0.0
    %2145 = vmatprep.subr.mxu0 0.0
    %2146 = vmatpush1.msra.mxu0 0.0
    %2147 = vmatprep.subr.mxu0 0.0
    %2148 = vmatpush1.msra.mxu0 0.0
    %2149 = vmatprep.subr.mxu0 0.0
    %2150 = vmatpush1.msra.mxu0 0.0
    %2151 = vmatprep.subr.mxu0 0.0
    %2152 = vmatpush1.msra.mxu0 0.0
    %2153 = vmatprep.subr.mxu0 0.0
    %2154 = vmatpush1.msra.mxu0 0.0
    %2155 = vmatprep.subr.mxu0 0.0
    %2156 = vmatpush1.msra.mxu0 0.0
    %2157 = vmatprep.mubr.f32.mxu0 0.0
    %2158 = vmatmul.mubr.f32.gmra.mrb[0].mxu0 %v1949
    %v2159 = vpop.f32.mrb[0].mxu0
    %v2160 = vadd.f32 0.0, %v2159
    %v2161 = vpop.f32.mrb[0].mxu0
    %v2162 = vadd.f32 0.0, %v2161
    %2163 = vdwg.mxu0
    %2164 = vmatprep.subr.mxu0 %v410
    %2165 = vmatpush1.msra.mxu0 %v409
    %2166 = vmatprep.subr.mxu0 %v426
    %2167 = vmatpush1.msra.mxu0 %v425
    %2168 = vmatprep.subr.mxu0 %v442
    %2169 = vmatpush1.msra.mxu0 %v441
    %2170 = vmatprep.subr.mxu0 %v458
    %2171 = vmatpush1.msra.mxu0 %v457
    %2172 = vmatprep.subr.mxu0 %v474
    %2173 = vmatpush1.msra.mxu0 %v473
    %2174 = vmatprep.subr.mxu0 %v490
    %2175 = vmatpush1.msra.mxu0 %v489
    %2176 = vmatprep.subr.mxu0 %v506
    %2177 = vmatpush1.msra.mxu0 %v505
    %2178 = vmatprep.subr.mxu0 %v522
    %2179 = vmatpush1.msra.mxu0 %v521
    %2180 = vmatprep.subr.mxu0 0.0
    %2181 = vmatpush1.msra.mxu0 0.0
    %2182 = vmatprep.subr.mxu0 0.0
    %2183 = vmatpush1.msra.mxu0 0.0
    %2184 = vmatprep.subr.mxu0 0.0
    %2185 = vmatpush1.msra.mxu0 0.0
    %2186 = vmatprep.subr.mxu0 0.0
    %2187 = vmatpush1.msra.mxu0 0.0
    %2188 = vmatprep.subr.mxu0 0.0
    %2189 = vmatpush1.msra.mxu0 0.0
    %2190 = vmatprep.subr.mxu0 0.0
    %2191 = vmatpush1.msra.mxu0 0.0
    %2192 = vmatprep.subr.mxu0 0.0
    %2193 = vmatpush1.msra.mxu0 0.0
    %2194 = vmatprep.subr.mxu0 0.0
    %2195 = vmatpush1.msra.mxu0 0.0
    %2196 = vmatprep.subr.mxu0 0.0
    %2197 = vmatpush1.msra.mxu0 0.0
    %2198 = vmatprep.subr.mxu0 0.0
    %2199 = vmatpush1.msra.mxu0 0.0
    %2200 = vmatprep.subr.mxu0 0.0
    %2201 = vmatpush1.msra.mxu0 0.0
    %2202 = vmatprep.subr.mxu0 0.0
    %2203 = vmatpush1.msra.mxu0 0.0
    %2204 = vmatprep.subr.mxu0 0.0
    %2205 = vmatpush1.msra.mxu0 0.0
    %2206 = vmatprep.subr.mxu0 0.0
    %2207 = vmatpush1.msra.mxu0 0.0
    %2208 = vmatprep.subr.mxu0 0.0
    %2209 = vmatpush1.msra.mxu0 0.0
    %2210 = vmatprep.subr.mxu0 0.0
    %2211 = vmatpush1.msra.mxu0 0.0
    %2212 = vmatprep.subr.mxu0 0.0
    %2213 = vmatpush1.msra.mxu0 0.0
    %2214 = vmatprep.subr.mxu0 0.0
    %2215 = vmatpush1.msra.mxu0 0.0
    %2216 = vmatprep.subr.mxu0 0.0
    %2217 = vmatpush1.msra.mxu0 0.0
    %2218 = vmatprep.subr.mxu0 0.0
    %2219 = vmatpush1.msra.mxu0 0.0
    %2220 = vmatprep.subr.mxu0 0.0
    %2221 = vmatpush1.msra.mxu0 0.0
    %2222 = vmatprep.subr.mxu0 0.0
    %2223 = vmatpush1.msra.mxu0 0.0
    %2224 = vmatprep.subr.mxu0 0.0
    %2225 = vmatpush1.msra.mxu0 0.0
    %2226 = vmatprep.subr.mxu0 0.0
    %2227 = vmatpush1.msra.mxu0 0.0
    %2228 = vmatprep.mubr.f32.mxu0 0.0
    %2229 = vmatmul.mubr.f32.gmra.mrb[0].mxu0 %v1949
    %v2230 = vpop.f32.mrb[0].mxu0
    %v2231 = vadd.f32 0.0, %v2230
    %v2232 = vpop.f32.mrb[0].mxu0
    %v2233 = vadd.f32 0.0, %v2232
    %2234 = vdwg.mxu0
    %2235 = vmatprep.subr.mxu0 %v412
    %2236 = vmatpush1.msra.mxu0 %v411
    %2237 = vmatprep.subr.mxu0 %v428
    %2238 = vmatpush1.msra.mxu0 %v427
    %2239 = vmatprep.subr.mxu0 %v444
    %2240 = vmatpush1.msra.mxu0 %v443
    %2241 = vmatprep.subr.mxu0 %v460
    %2242 = vmatpush1.msra.mxu0 %v459
    %2243 = vmatprep.subr.mxu0 %v476
    %2244 = vmatpush1.msra.mxu0 %v475
    %2245 = vmatprep.subr.mxu0 %v492
    %2246 = vmatpush1.msra.mxu0 %v491
    %2247 = vmatprep.subr.mxu0 %v508
    %2248 = vmatpush1.msra.mxu0 %v507
    %2249 = vmatprep.subr.mxu0 %v524
    %2250 = vmatpush1.msra.mxu0 %v523
    %2251 = vmatprep.subr.mxu0 0.0
    %2252 = vmatpush1.msra.mxu0 0.0
    %2253 = vmatprep.subr.mxu0 0.0
    %2254 = vmatpush1.msra.mxu0 0.0
    %2255 = vmatprep.subr.mxu0 0.0
    %2256 = vmatpush1.msra.mxu0 0.0
    %2257 = vmatprep.subr.mxu0 0.0
    %2258 = vmatpush1.msra.mxu0 0.0
    %2259 = vmatprep.subr.mxu0 0.0
    %2260 = vmatpush1.msra.mxu0 0.0
    %2261 = vmatprep.subr.mxu0 0.0
    %2262 = vmatpush1.msra.mxu0 0.0
    %2263 = vmatprep.subr.mxu0 0.0
    %2264 = vmatpush1.msra.mxu0 0.0
    %2265 = vmatprep.subr.mxu0 0.0
    %2266 = vmatpush1.msra.mxu0 0.0
    %2267 = vmatprep.subr.mxu0 0.0
    %2268 = vmatpush1.msra.mxu0 0.0
    %2269 = vmatprep.subr.mxu0 0.0
    %2270 = vmatpush1.msra.mxu0 0.0
    %2271 = vmatprep.subr.mxu0 0.0
    %2272 = vmatpush1.msra.mxu0 0.0
    %2273 = vmatprep.subr.mxu0 0.0
    %2274 = vmatpush1.msra.mxu0 0.0
    %2275 = vmatprep.subr.mxu0 0.0
    %2276 = vmatpush1.msra.mxu0 0.0
    %2277 = vmatprep.subr.mxu0 0.0
    %2278 = vmatpush1.msra.mxu0 0.0
    %2279 = vmatprep.subr.mxu0 0.0
    %2280 = vmatpush1.msra.mxu0 0.0
    %2281 = vmatprep.subr.mxu0 0.0
    %2282 = vmatpush1.msra.mxu0 0.0
    %2283 = vmatprep.subr.mxu0 0.0
    %2284 = vmatpush1.msra.mxu0 0.0
    %2285 = vmatprep.subr.mxu0 0.0
    %2286 = vmatpush1.msra.mxu0 0.0
    %2287 = vmatprep.subr.mxu0 0.0
    %2288 = vmatpush1.msra.mxu0 0.0
    %2289 = vmatprep.subr.mxu0 0.0
    %2290 = vmatpush1.msra.mxu0 0.0
    %2291 = vmatprep.subr.mxu0 0.0
    %2292 = vmatpush1.msra.mxu0 0.0
    %2293 = vmatprep.subr.mxu0 0.0
    %2294 = vmatpush1.msra.mxu0 0.0
    %2295 = vmatprep.subr.mxu0 0.0
    %2296 = vmatpush1.msra.mxu0 0.0
    %2297 = vmatprep.subr.mxu0 0.0
    %2298 = vmatpush1.msra.mxu0 0.0
    %2299 = vmatprep.mubr.f32.mxu0 0.0
    %2300 = vmatmul.mubr.f32.gmra.mrb[0].mxu0 %v1949
    %v2301 = vpop.f32.mrb[0].mxu0
    %v2302 = vadd.f32 0.0, %v2301
    %v2303 = vpop.f32.mrb[0].mxu0
    %v2304 = vadd.f32 0.0, %v2303
    %2305 = vdwg.mxu0
    %2306 = vmatprep.subr.mxu0 %v414
    %2307 = vmatpush1.msra.mxu0 %v413
    %2308 = vmatprep.subr.mxu0 %v430
    %2309 = vmatpush1.msra.mxu0 %v429
    %2310 = vmatprep.subr.mxu0 %v446
    %2311 = vmatpush1.msra.mxu0 %v445
    %2312 = vmatprep.subr.mxu0 %v462
    %2313 = vmatpush1.msra.mxu0 %v461
    %2314 = vmatprep.subr.mxu0 %v478
    %2315 = vmatpush1.msra.mxu0 %v477
    %2316 = vmatprep.subr.mxu0 %v494
    %2317 = vmatpush1.msra.mxu0 %v493
    %2318 = vmatprep.subr.mxu0 %v510
    %2319 = vmatpush1.msra.mxu0 %v509
    %2320 = vmatprep.subr.mxu0 %v526
    %2321 = vmatpush1.msra.mxu0 %v525
    %2322 = vmatprep.subr.mxu0 0.0
    %2323 = vmatpush1.msra.mxu0 0.0
    %2324 = vmatprep.subr.mxu0 0.0
    %2325 = vmatpush1.msra.mxu0 0.0
    %2326 = vmatprep.subr.mxu0 0.0
    %2327 = vmatpush1.msra.mxu0 0.0
    %2328 = vmatprep.subr.mxu0 0.0
    %2329 = vmatpush1.msra.mxu0 0.0
    %2330 = vmatprep.subr.mxu0 0.0
    %2331 = vmatpush1.msra.mxu0 0.0
    %2332 = vmatprep.subr.mxu0 0.0
    %2333 = vmatpush1.msra.mxu0 0.0
    %2334 = vmatprep.subr.mxu0 0.0
    %2335 = vmatpush1.msra.mxu0 0.0
    %2336 = vmatprep.subr.mxu0 0.0
    %2337 = vmatpush1.msra.mxu0 0.0
    %2338 = vmatprep.subr.mxu0 0.0
    %2339 = vmatpush1.msra.mxu0 0.0
    %2340 = vmatprep.subr.mxu0 0.0
    %2341 = vmatpush1.msra.mxu0 0.0
    %2342 = vmatprep.subr.mxu0 0.0
    %2343 = vmatpush1.msra.mxu0 0.0
    %2344 = vmatprep.subr.mxu0 0.0
    %2345 = vmatpush1.msra.mxu0 0.0
    %2346 = vmatprep.subr.mxu0 0.0
    %2347 = vmatpush1.msra.mxu0 0.0
    %2348 = vmatprep.subr.mxu0 0.0
    %2349 = vmatpush1.msra.mxu0 0.0
    %2350 = vmatprep.subr.mxu0 0.0
    %2351 = vmatpush1.msra.mxu0 0.0
    %2352 = vmatprep.subr.mxu0 0.0
    %2353 = vmatpush1.msra.mxu0 0.0
    %2354 = vmatprep.subr.mxu0 0.0
    %2355 = vmatpush1.msra.mxu0 0.0
    %2356 = vmatprep.subr.mxu0 0.0
    %2357 = vmatpush1.msra.mxu0 0.0
    %2358 = vmatprep.subr.mxu0 0.0
    %2359 = vmatpush1.msra.mxu0 0.0
    %2360 = vmatprep.subr.mxu0 0.0
    %2361 = vmatpush1.msra.mxu0 0.0
    %2362 = vmatprep.subr.mxu0 0.0
    %2363 = vmatpush1.msra.mxu0 0.0
    %2364 = vmatprep.subr.mxu0 0.0
    %2365 = vmatpush1.msra.mxu0 0.0
    %2366 = vmatprep.subr.mxu0 0.0
    %2367 = vmatpush1.msra.mxu0 0.0
    %2368 = vmatprep.subr.mxu0 0.0
    %2369 = vmatpush1.msra.mxu0 0.0
    %2370 = vmatprep.mubr.f32.mxu0 0.0
    %2371 = vmatmul.mubr.f32.gmra.mrb[0].mxu0 %v1949
    %v2372 = vpop.f32.mrb[0].mxu0
    %v2373 = vadd.f32 0.0, %v2372
    %v2374 = vpop.f32.mrb[0].mxu0
    %v2375 = vadd.f32 0.0, %v2374
    %2376 = vdwg.mxu0
    %2377 = vmatprep.subr.mxu0 %v416
    %2378 = vmatpush1.msra.mxu0 %v415
    %2379 = vmatprep.subr.mxu0 %v432
    %2380 = vmatpush1.msra.mxu0 %v431
    %2381 = vmatprep.subr.mxu0 %v448
    %2382 = vmatpush1.msra.mxu0 %v447
    %2383 = vmatprep.subr.mxu0 %v464
    %2384 = vmatpush1.msra.mxu0 %v463
    %2385 = vmatprep.subr.mxu0 %v480
    %2386 = vmatpush1.msra.mxu0 %v479
    %2387 = vmatprep.subr.mxu0 %v496
    %2388 = vmatpush1.msra.mxu0 %v495
    %2389 = vmatprep.subr.mxu0 %v512
    %2390 = vmatpush1.msra.mxu0 %v511
    %2391 = vmatprep.subr.mxu0 %v528
    %2392 = vmatpush1.msra.mxu0 %v527
    %2393 = vmatprep.subr.mxu0 0.0
    %2394 = vmatpush1.msra.mxu0 0.0
    %2395 = vmatprep.subr.mxu0 0.0
    %2396 = vmatpush1.msra.mxu0 0.0
    %2397 = vmatprep.subr.mxu0 0.0
    %2398 = vmatpush1.msra.mxu0 0.0
    %2399 = vmatprep.subr.mxu0 0.0
    %2400 = vmatpush1.msra.mxu0 0.0
    %2401 = vmatprep.subr.mxu0 0.0
    %2402 = vmatpush1.msra.mxu0 0.0
    %2403 = vmatprep.subr.mxu0 0.0
    %2404 = vmatpush1.msra.mxu0 0.0
    %2405 = vmatprep.subr.mxu0 0.0
    %2406 = vmatpush1.msra.mxu0 0.0
    %2407 = vmatprep.subr.mxu0 0.0
    %2408 = vmatpush1.msra.mxu0 0.0
    %2409 = vmatprep.subr.mxu0 0.0
    %2410 = vmatpush1.msra.mxu0 0.0
    %2411 = vmatprep.subr.mxu0 0.0
    %2412 = vmatpush1.msra.mxu0 0.0
    %2413 = vmatprep.subr.mxu0 0.0
    %2414 = vmatpush1.msra.mxu0 0.0
    %2415 = vmatprep.subr.mxu0 0.0
    %2416 = vmatpush1.msra.mxu0 0.0
    %2417 = vmatprep.subr.mxu0 0.0
    %2418 = vmatpush1.msra.mxu0 0.0
    %2419 = vmatprep.subr.mxu0 0.0
    %2420 = vmatpush1.msra.mxu0 0.0
    %2421 = vmatprep.subr.mxu0 0.0
    %2422 = vmatpush1.msra.mxu0 0.0
    %2423 = vmatprep.subr.mxu0 0.0
    %2424 = vmatpush1.msra.mxu0 0.0
    %2425 = vmatprep.subr.mxu0 0.0
    %2426 = vmatpush1.msra.mxu0 0.0
    %2427 = vmatprep.subr.mxu0 0.0
    %2428 = vmatpush1.msra.mxu0 0.0
    %2429 = vmatprep.subr.mxu0 0.0
    %2430 = vmatpush1.msra.mxu0 0.0
    %2431 = vmatprep.subr.mxu0 0.0
    %2432 = vmatpush1.msra.mxu0 0.0
    %2433 = vmatprep.subr.mxu0 0.0
    %2434 = vmatpush1.msra.mxu0 0.0
    %2435 = vmatprep.subr.mxu0 0.0
    %2436 = vmatpush1.msra.mxu0 0.0
    %2437 = vmatprep.subr.mxu0 0.0
    %2438 = vmatpush1.msra.mxu0 0.0
    %2439 = vmatprep.subr.mxu0 0.0
    %2440 = vmatpush1.msra.mxu0 0.0
    %2441 = vmatprep.mubr.f32.mxu0 0.0
    %2442 = vmatmul.mubr.f32.gmra.mrb[0].mxu0 %v1949
    %v2443 = vpop.f32.mrb[0].mxu0
    %v2444 = vadd.f32 0.0, %v2443
    %v2445 = vpop.f32.mrb[0].mxu0
    %v2446 = vadd.f32 0.0, %v2445
    %2447 = vdwg.mxu0
    %2448 = vmatprep.subr.mxu0 %v418
    %2449 = vmatpush1.msra.mxu0 %v417
    %2450 = vmatprep.subr.mxu0 %v434
    %2451 = vmatpush1.msra.mxu0 %v433
    %2452 = vmatprep.subr.mxu0 %v450
    %2453 = vmatpush1.msra.mxu0 %v449
    %2454 = vmatprep.subr.mxu0 %v466
    %2455 = vmatpush1.msra.mxu0 %v465
    %2456 = vmatprep.subr.mxu0 %v482
    %2457 = vmatpush1.msra.mxu0 %v481
    %2458 = vmatprep.subr.mxu0 %v498
    %2459 = vmatpush1.msra.mxu0 %v497
    %2460 = vmatprep.subr.mxu0 %v514
    %2461 = vmatpush1.msra.mxu0 %v513
    %2462 = vmatprep.subr.mxu0 %v530
    %2463 = vmatpush1.msra.mxu0 %v529
    %2464 = vmatprep.subr.mxu0 0.0
    %2465 = vmatpush1.msra.mxu0 0.0
    %2466 = vmatprep.subr.mxu0 0.0
    %2467 = vmatpush1.msra.mxu0 0.0
    %2468 = vmatprep.subr.mxu0 0.0
    %2469 = vmatpush1.msra.mxu0 0.0
    %2470 = vmatprep.subr.mxu0 0.0
    %2471 = vmatpush1.msra.mxu0 0.0
    %2472 = vmatprep.subr.mxu0 0.0
    %2473 = vmatpush1.msra.mxu0 0.0
    %2474 = vmatprep.subr.mxu0 0.0
    %2475 = vmatpush1.msra.mxu0 0.0
    %2476 = vmatprep.subr.mxu0 0.0
    %2477 = vmatpush1.msra.mxu0 0.0
    %2478 = vmatprep.subr.mxu0 0.0
    %2479 = vmatpush1.msra.mxu0 0.0
    %2480 = vmatprep.subr.mxu0 0.0
    %2481 = vmatpush1.msra.mxu0 0.0
    %2482 = vmatprep.subr.mxu0 0.0
    %2483 = vmatpush1.msra.mxu0 0.0
    %2484 = vmatprep.subr.mxu0 0.0
    %2485 = vmatpush1.msra.mxu0 0.0
    %2486 = vmatprep.subr.mxu0 0.0
    %2487 = vmatpush1.msra.mxu0 0.0
    %2488 = vmatprep.subr.mxu0 0.0
    %2489 = vmatpush1.msra.mxu0 0.0
    %2490 = vmatprep.subr.mxu0 0.0
    %2491 = vmatpush1.msra.mxu0 0.0
    %2492 = vmatprep.subr.mxu0 0.0
    %2493 = vmatpush1.msra.mxu0 0.0
    %2494 = vmatprep.subr.mxu0 0.0
    %2495 = vmatpush1.msra.mxu0 0.0
    %2496 = vmatprep.subr.mxu0 0.0
    %2497 = vmatpush1.msra.mxu0 0.0
    %2498 = vmatprep.subr.mxu0 0.0
    %2499 = vmatpush1.msra.mxu0 0.0
    %2500 = vmatprep.subr.mxu0 0.0
    %2501 = vmatpush1.msra.mxu0 0.0
    %2502 = vmatprep.subr.mxu0 0.0
    %2503 = vmatpush1.msra.mxu0 0.0
    %2504 = vmatprep.subr.mxu0 0.0
    %2505 = vmatpush1.msra.mxu0 0.0
    %2506 = vmatprep.subr.mxu0 0.0
    %2507 = vmatpush1.msra.mxu0 0.0
    %2508 = vmatprep.subr.mxu0 0.0
    %2509 = vmatpush1.msra.mxu0 0.0
    %2510 = vmatprep.subr.mxu0 0.0
    %2511 = vmatpush1.msra.mxu0 0.0
    %2512 = vmatprep.mubr.f32.mxu0 0.0
    %2513 = vmatmul.mubr.f32.gmra.mrb[0].mxu0 %v1949
    %v2514 = vpop.f32.mrb[0].mxu0
    %v2515 = vadd.f32 0.0, %v2514
    %v2516 = vpop.f32.mrb[0].mxu0
    %v2517 = vadd.f32 0.0, %v2516
    %2518 = vdwg.mxu0
    %v2519 = vmul.f32 %v2018, %v67
    %v2520 = vmul.f32 %v2020, %v68
    %v2521 = vmul.f32 %v2089, %v69
    %v2522 = vmul.f32 %v2091, %v70
    %v2523 = vmul.f32 %v2160, %v71
    %v2524 = vmul.f32 %v2162, %v72
    %v2525 = vmul.f32 %v2231, %v73
    %v2526 = vmul.f32 %v2233, %v74
    %v2527 = vmul.f32 %v2302, %v75
    %v2528 = vmul.f32 %v2304, %v76
    %v2529 = vmul.f32 %v2373, %v77
    %v2530 = vmul.f32 %v2375, %v78
    %v2531 = vmul.f32 %v2444, %v79
    %v2532 = vmul.f32 %v2446, %v80
    %v2533 = vmul.f32 %v2515, %v81
    %v2534 = vmul.f32 %v2517, %v82
    %2535 = vmatprep.subr.mxu0 0.0
    %2536 = vmatpush1.msra.mxu0 %v531
    %2537 = vmatprep.subr.mxu0 0.0
    %2538 = vmatpush1.msra.mxu0 %v532
    %2539 = vmatprep.subr.mxu0 0.0
    %2540 = vmatpush1.msra.mxu0 %v533
    %2541 = vmatprep.subr.mxu0 0.0
    %2542 = vmatpush1.msra.mxu0 %v534
    %2543 = vmatprep.subr.mxu0 0.0
    %2544 = vmatpush1.msra.mxu0 %v535
    %2545 = vmatprep.subr.mxu0 0.0
    %2546 = vmatpush1.msra.mxu0 %v536
    %2547 = vmatprep.subr.mxu0 0.0
    %2548 = vmatpush1.msra.mxu0 %v537
    %2549 = vmatprep.subr.mxu0 0.0
    %2550 = vmatpush1.msra.mxu0 %v538
    %2551 = vmatprep.subr.mxu0 0.0
    %2552 = vmatpush1.msra.mxu0 %v539
    %2553 = vmatprep.subr.mxu0 0.0
    %2554 = vmatpush1.msra.mxu0 %v540
    %2555 = vmatprep.subr.mxu0 0.0
    %2556 = vmatpush1.msra.mxu0 %v541
    %2557 = vmatprep.subr.mxu0 0.0
    %2558 = vmatpush1.msra.mxu0 %v542
    %2559 = vmatprep.subr.mxu0 0.0
    %2560 = vmatpush1.msra.mxu0 %v543
    %2561 = vmatprep.subr.mxu0 0.0
    %2562 = vmatpush1.msra.mxu0 %v544
    %2563 = vmatprep.subr.mxu0 0.0
    %2564 = vmatpush1.msra.mxu0 %v545
    %2565 = vmatprep.subr.mxu0 0.0
    %2566 = vmatpush1.msra.mxu0 %v546
    %2567 = vmatprep.subr.mxu0 0.0
    %2568 = vmatpush1.msra.mxu0 %v547
    %2569 = vmatprep.subr.mxu0 0.0
    %2570 = vmatpush1.msra.mxu0 %v548
    %2571 = vmatprep.subr.mxu0 0.0
    %2572 = vmatpush1.msra.mxu0 %v549
    %2573 = vmatprep.subr.mxu0 0.0
    %2574 = vmatpush1.msra.mxu0 %v550
    %2575 = vmatprep.subr.mxu0 0.0
    %2576 = vmatpush1.msra.mxu0 %v551
    %2577 = vmatprep.subr.mxu0 0.0
    %2578 = vmatpush1.msra.mxu0 %v552
    %2579 = vmatprep.subr.mxu0 0.0
    %2580 = vmatpush1.msra.mxu0 %v553
    %2581 = vmatprep.subr.mxu0 0.0
    %2582 = vmatpush1.msra.mxu0 %v554
    %2583 = vmatprep.subr.mxu0 0.0
    %2584 = vmatpush1.msra.mxu0 %v555
    %2585 = vmatprep.subr.mxu0 0.0
    %2586 = vmatpush1.msra.mxu0 %v556
    %2587 = vmatprep.subr.mxu0 0.0
    %2588 = vmatpush1.msra.mxu0 %v557
    %2589 = vmatprep.subr.mxu0 0.0
    %2590 = vmatpush1.msra.mxu0 %v558
    %2591 = vmatprep.subr.mxu0 0.0
    %2592 = vmatpush1.msra.mxu0 %v559
    %2593 = vmatprep.subr.mxu0 0.0
    %2594 = vmatpush1.msra.mxu0 %v560
    %2595 = vmatprep.subr.mxu0 0.0
    %2596 = vmatpush1.msra.mxu0 %v561
    %2597 = vmatprep.subr.mxu0 0.0
    %2598 = vmatpush1.msra.mxu0 %v562
    %2599 = vmatprep.mubr.f32.mxu0 %v2520
    %2600 = vmatmul.mubr.f32.gmra.mrb[0].mxu0 %v2519
    %v2601 = vpop.f32.mrb[0].mxu0
    %v2602 = vadd.f32 0.0, %v2601
    %v2603 = vpop.f32.mrb[0].mxu0
    %2604 = vdwg.mxu0
    %2605 = vmatprep.subr.mxu0 0.0
    %2606 = vmatpush1.msra.mxu0 %v563
    %2607 = vmatprep.subr.mxu0 0.0
    %2608 = vmatpush1.msra.mxu0 %v564
    %2609 = vmatprep.subr.mxu0 0.0
    %2610 = vmatpush1.msra.mxu0 %v565
    %2611 = vmatprep.subr.mxu0 0.0
    %2612 = vmatpush1.msra.mxu0 %v566
    %2613 = vmatprep.subr.mxu0 0.0
    %2614 = vmatpush1.msra.mxu0 %v567
    %2615 = vmatprep.subr.mxu0 0.0
    %2616 = vmatpush1.msra.mxu0 %v568
    %2617 = vmatprep.subr.mxu0 0.0
    %2618 = vmatpush1.msra.mxu0 %v569
    %2619 = vmatprep.subr.mxu0 0.0
    %2620 = vmatpush1.msra.mxu0 %v570
    %2621 = vmatprep.subr.mxu0 0.0
    %2622 = vmatpush1.msra.mxu0 %v571
    %2623 = vmatprep.subr.mxu0 0.0
    %2624 = vmatpush1.msra.mxu0 %v572
    %2625 = vmatprep.subr.mxu0 0.0
    %2626 = vmatpush1.msra.mxu0 %v573
    %2627 = vmatprep.subr.mxu0 0.0
    %2628 = vmatpush1.msra.mxu0 %v574
    %2629 = vmatprep.subr.mxu0 0.0
    %2630 = vmatpush1.msra.mxu0 %v575
    %2631 = vmatprep.subr.mxu0 0.0
    %2632 = vmatpush1.msra.mxu0 %v576
    %2633 = vmatprep.subr.mxu0 0.0
    %2634 = vmatpush1.msra.mxu0 %v577
    %2635 = vmatprep.subr.mxu0 0.0
    %2636 = vmatpush1.msra.mxu0 %v578
    %2637 = vmatprep.subr.mxu0 0.0
    %2638 = vmatpush1.msra.mxu0 %v579
    %2639 = vmatprep.subr.mxu0 0.0
    %2640 = vmatpush1.msra.mxu0 %v580
    %2641 = vmatprep.subr.mxu0 0.0
    %2642 = vmatpush1.msra.mxu0 %v581
    %2643 = vmatprep.subr.mxu0 0.0
    %2644 = vmatpush1.msra.mxu0 %v582
    %2645 = vmatprep.subr.mxu0 0.0
    %2646 = vmatpush1.msra.mxu0 %v583
    %2647 = vmatprep.subr.mxu0 0.0
    %2648 = vmatpush1.msra.mxu0 %v584
    %2649 = vmatprep.subr.mxu0 0.0
    %2650 = vmatpush1.msra.mxu0 %v585
    %2651 = vmatprep.subr.mxu0 0.0
    %2652 = vmatpush1.msra.mxu0 %v586
    %2653 = vmatprep.subr.mxu0 0.0
    %2654 = vmatpush1.msra.mxu0 %v587
    %2655 = vmatprep.subr.mxu0 0.0
    %2656 = vmatpush1.msra.mxu0 %v588
    %2657 = vmatprep.subr.mxu0 0.0
    %2658 = vmatpush1.msra.mxu0 %v589
    %2659 = vmatprep.subr.mxu0 0.0
    %2660 = vmatpush1.msra.mxu0 %v590
    %2661 = vmatprep.subr.mxu0 0.0
    %2662 = vmatpush1.msra.mxu0 %v591
    %2663 = vmatprep.subr.mxu0 0.0
    %2664 = vmatpush1.msra.mxu0 %v592
    %2665 = vmatprep.subr.mxu0 0.0
    %2666 = vmatpush1.msra.mxu0 %v593
    %2667 = vmatprep.subr.mxu0 0.0
    %2668 = vmatpush1.msra.mxu0 %v594
    %2669 = vmatprep.mubr.f32.mxu0 %v2522
    %2670 = vmatmul.mubr.f32.gmra.mrb[0].mxu0 %v2521
    %v2671 = vpop.f32.mrb[0].mxu0
    %v2672 = vadd.f32 %v2602, %v2671
    %v2673 = vpop.f32.mrb[0].mxu0
    %2674 = vdwg.mxu0
    %2675 = vmatprep.subr.mxu0 0.0
    %2676 = vmatpush1.msra.mxu0 %v595
    %2677 = vmatprep.subr.mxu0 0.0
    %2678 = vmatpush1.msra.mxu0 %v596
    %2679 = vmatprep.subr.mxu0 0.0
    %2680 = vmatpush1.msra.mxu0 %v597
    %2681 = vmatprep.subr.mxu0 0.0
    %2682 = vmatpush1.msra.mxu0 %v598
    %2683 = vmatprep.subr.mxu0 0.0
    %2684 = vmatpush1.msra.mxu0 %v599
    %2685 = vmatprep.subr.mxu0 0.0
    %2686 = vmatpush1.msra.mxu0 %v600
    %2687 = vmatprep.subr.mxu0 0.0
    %2688 = vmatpush1.msra.mxu0 %v601
    %2689 = vmatprep.subr.mxu0 0.0
    %2690 = vmatpush1.msra.mxu0 %v602
    %2691 = vmatprep.subr.mxu0 0.0
    %2692 = vmatpush1.msra.mxu0 %v603
    %2693 = vmatprep.subr.mxu0 0.0
    %2694 = vmatpush1.msra.mxu0 %v604
    %2695 = vmatprep.subr.mxu0 0.0
    %2696 = vmatpush1.msra.mxu0 %v605
    %2697 = vmatprep.subr.mxu0 0.0
    %2698 = vmatpush1.msra.mxu0 %v606
    %2699 = vmatprep.subr.mxu0 0.0
    %2700 = vmatpush1.msra.mxu0 %v607
    %2701 = vmatprep.subr.mxu0 0.0
    %2702 = vmatpush1.msra.mxu0 %v608
    %2703 = vmatprep.subr.mxu0 0.0
    %2704 = vmatpush1.msra.mxu0 %v609
    %2705 = vmatprep.subr.mxu0 0.0
    %2706 = vmatpush1.msra.mxu0 %v610
    %2707 = vmatprep.subr.mxu0 0.0
    %2708 = vmatpush1.msra.mxu0 %v611
    %2709 = vmatprep.subr.mxu0 0.0
    %2710 = vmatpush1.msra.mxu0 %v612
    %2711 = vmatprep.subr.mxu0 0.0
    %2712 = vmatpush1.msra.mxu0 %v613
    %2713 = vmatprep.subr.mxu0 0.0
    %2714 = vmatpush1.msra.mxu0 %v614
    %2715 = vmatprep.subr.mxu0 0.0
    %2716 = vmatpush1.msra.mxu0 %v615
    %2717 = vmatprep.subr.mxu0 0.0
    %2718 = vmatpush1.msra.mxu0 %v616
    %2719 = vmatprep.subr.mxu0 0.0
    %2720 = vmatpush1.msra.mxu0 %v617
    %2721 = vmatprep.subr.mxu0 0.0
    %2722 = vmatpush1.msra.mxu0 %v618
    %2723 = vmatprep.subr.mxu0 0.0
    %2724 = vmatpush1.msra.mxu0 %v619
    %2725 = vmatprep.subr.mxu0 0.0
    %2726 = vmatpush1.msra.mxu0 %v620
    %2727 = vmatprep.subr.mxu0 0.0
    %2728 = vmatpush1.msra.mxu0 %v621
    %2729 = vmatprep.subr.mxu0 0.0
    %2730 = vmatpush1.msra.mxu0 %v622
    %2731 = vmatprep.subr.mxu0 0.0
    %2732 = vmatpush1.msra.mxu0 %v623
    %2733 = vmatprep.subr.mxu0 0.0
    %2734 = vmatpush1.msra.mxu0 %v624
    %2735 = vmatprep.subr.mxu0 0.0
    %2736 = vmatpush1.msra.mxu0 %v625
    %2737 = vmatprep.subr.mxu0 0.0
    %2738 = vmatpush1.msra.mxu0 %v626
    %2739 = vmatprep.mubr.f32.mxu0 %v2524
    %2740 = vmatmul.mubr.f32.gmra.mrb[0].mxu0 %v2523
    %v2741 = vpop.f32.mrb[0].mxu0
    %v2742 = vadd.f32 %v2672, %v2741
    %v2743 = vpop.f32.mrb[0].mxu0
    %2744 = vdwg.mxu0
    %2745 = vmatprep.subr.mxu0 0.0
    %2746 = vmatpush1.msra.mxu0 %v627
    %2747 = vmatprep.subr.mxu0 0.0
    %2748 = vmatpush1.msra.mxu0 %v628
    %2749 = vmatprep.subr.mxu0 0.0
    %2750 = vmatpush1.msra.mxu0 %v629
    %2751 = vmatprep.subr.mxu0 0.0
    %2752 = vmatpush1.msra.mxu0 %v630
    %2753 = vmatprep.subr.mxu0 0.0
    %2754 = vmatpush1.msra.mxu0 %v631
    %2755 = vmatprep.subr.mxu0 0.0
    %2756 = vmatpush1.msra.mxu0 %v632
    %2757 = vmatprep.subr.mxu0 0.0
    %2758 = vmatpush1.msra.mxu0 %v633
    %2759 = vmatprep.subr.mxu0 0.0
    %2760 = vmatpush1.msra.mxu0 %v634
    %2761 = vmatprep.subr.mxu0 0.0
    %2762 = vmatpush1.msra.mxu0 %v635
    %2763 = vmatprep.subr.mxu0 0.0
    %2764 = vmatpush1.msra.mxu0 %v636
    %2765 = vmatprep.subr.mxu0 0.0
    %2766 = vmatpush1.msra.mxu0 %v637
    %2767 = vmatprep.subr.mxu0 0.0
    %2768 = vmatpush1.msra.mxu0 %v638
    %2769 = vmatprep.subr.mxu0 0.0
    %2770 = vmatpush1.msra.mxu0 %v639
    %2771 = vmatprep.subr.mxu0 0.0
    %2772 = vmatpush1.msra.mxu0 %v640
    %2773 = vmatprep.subr.mxu0 0.0
    %2774 = vmatpush1.msra.mxu0 %v641
    %2775 = vmatprep.subr.mxu0 0.0
    %2776 = vmatpush1.msra.mxu0 %v642
    %2777 = vmatprep.subr.mxu0 0.0
    %2778 = vmatpush1.msra.mxu0 %v643
    %2779 = vmatprep.subr.mxu0 0.0
    %2780 = vmatpush1.msra.mxu0 %v644
    %2781 = vmatprep.subr.mxu0 0.0
    %2782 = vmatpush1.msra.mxu0 %v645
    %2783 = vmatprep.subr.mxu0 0.0
    %2784 = vmatpush1.msra.mxu0 %v646
    %2785 = vmatprep.subr.mxu0 0.0
    %2786 = vmatpush1.msra.mxu0 %v647
    %2787 = vmatprep.subr.mxu0 0.0
    %2788 = vmatpush1.msra.mxu0 %v648
    %2789 = vmatprep.subr.mxu0 0.0
    %2790 = vmatpush1.msra.mxu0 %v649
    %2791 = vmatprep.subr.mxu0 0.0
    %2792 = vmatpush1.msra.mxu0 %v650
    %2793 = vmatprep.subr.mxu0 0.0
    %2794 = vmatpush1.msra.mxu0 %v651
    %2795 = vmatprep.subr.mxu0 0.0
    %2796 = vmatpush1.msra.mxu0 %v652
    %2797 = vmatprep.subr.mxu0 0.0
    %2798 = vmatpush1.msra.mxu0 %v653
    %2799 = vmatprep.subr.mxu0 0.0
    %2800 = vmatpush1.msra.mxu0 %v654
    %2801 = vmatprep.subr.mxu0 0.0
    %2802 = vmatpush1.msra.mxu0 %v655
    %2803 = vmatprep.subr.mxu0 0.0
    %2804 = vmatpush1.msra.mxu0 %v656
    %2805 = vmatprep.subr.mxu0 0.0
    %2806 = vmatpush1.msra.mxu0 %v657
    %2807 = vmatprep.subr.mxu0 0.0
    %2808 = vmatpush1.msra.mxu0 %v658
    %2809 = vmatprep.mubr.f32.mxu0 %v2526
    %2810 = vmatmul.mubr.f32.gmra.mrb[0].mxu0 %v2525
    %v2811 = vpop.f32.mrb[0].mxu0
    %v2812 = vadd.f32 %v2742, %v2811
    %v2813 = vpop.f32.mrb[0].mxu0
    %2814 = vdwg.mxu0
    %2815 = vmatprep.subr.mxu0 0.0
    %2816 = vmatpush1.msra.mxu0 %v659
    %2817 = vmatprep.subr.mxu0 0.0
    %2818 = vmatpush1.msra.mxu0 %v660
    %2819 = vmatprep.subr.mxu0 0.0
    %2820 = vmatpush1.msra.mxu0 %v661
    %2821 = vmatprep.subr.mxu0 0.0
    %2822 = vmatpush1.msra.mxu0 %v662
    %2823 = vmatprep.subr.mxu0 0.0
    %2824 = vmatpush1.msra.mxu0 %v663
    %2825 = vmatprep.subr.mxu0 0.0
    %2826 = vmatpush1.msra.mxu0 %v664
    %2827 = vmatprep.subr.mxu0 0.0
    %2828 = vmatpush1.msra.mxu0 %v665
    %2829 = vmatprep.subr.mxu0 0.0
    %2830 = vmatpush1.msra.mxu0 %v666
    %2831 = vmatprep.subr.mxu0 0.0
    %2832 = vmatpush1.msra.mxu0 %v667
    %2833 = vmatprep.subr.mxu0 0.0
    %2834 = vmatpush1.msra.mxu0 %v668
    %2835 = vmatprep.subr.mxu0 0.0
    %2836 = vmatpush1.msra.mxu0 %v669
    %2837 = vmatprep.subr.mxu0 0.0
    %2838 = vmatpush1.msra.mxu0 %v670
    %2839 = vmatprep.subr.mxu0 0.0
    %2840 = vmatpush1.msra.mxu0 %v671
    %2841 = vmatprep.subr.mxu0 0.0
    %2842 = vmatpush1.msra.mxu0 %v672
    %2843 = vmatprep.subr.mxu0 0.0
    %2844 = vmatpush1.msra.mxu0 %v673
    %2845 = vmatprep.subr.mxu0 0.0
    %2846 = vmatpush1.msra.mxu0 %v674
    %2847 = vmatprep.subr.mxu0 0.0
    %2848 = vmatpush1.msra.mxu0 %v675
    %2849 = vmatprep.subr.mxu0 0.0
    %2850 = vmatpush1.msra.mxu0 %v676
    %2851 = vmatprep.subr.mxu0 0.0
    %2852 = vmatpush1.msra.mxu0 %v677
    %2853 = vmatprep.subr.mxu0 0.0
    %2854 = vmatpush1.msra.mxu0 %v678
    %2855 = vmatprep.subr.mxu0 0.0
    %2856 = vmatpush1.msra.mxu0 %v679
    %2857 = vmatprep.subr.mxu0 0.0
    %2858 = vmatpush1.msra.mxu0 %v680
    %2859 = vmatprep.subr.mxu0 0.0
    %2860 = vmatpush1.msra.mxu0 %v681
    %2861 = vmatprep.subr.mxu0 0.0
    %2862 = vmatpush1.msra.mxu0 %v682
    %2863 = vmatprep.subr.mxu0 0.0
    %2864 = vmatpush1.msra.mxu0 %v683
    %2865 = vmatprep.subr.mxu0 0.0
    %2866 = vmatpush1.msra.mxu0 %v684
    %2867 = vmatprep.subr.mxu0 0.0
    %2868 = vmatpush1.msra.mxu0 %v685
    %2869 = vmatprep.subr.mxu0 0.0
    %2870 = vmatpush1.msra.mxu0 %v686
    %2871 = vmatprep.subr.mxu0 0.0
    %2872 = vmatpush1.msra.mxu0 %v687
    %2873 = vmatprep.subr.mxu0 0.0
    %2874 = vmatpush1.msra.mxu0 %v688
    %2875 = vmatprep.subr.mxu0 0.0
    %2876 = vmatpush1.msra.mxu0 %v689
    %2877 = vmatprep.subr.mxu0 0.0
    %2878 = vmatpush1.msra.mxu0 %v690
    %2879 = vmatprep.mubr.f32.mxu0 %v2528
    %2880 = vmatmul.mubr.f32.gmra.mrb[0].mxu0 %v2527
    %v2881 = vpop.f32.mrb[0].mxu0
    %v2882 = vadd.f32 %v2812, %v2881
    %v2883 = vpop.f32.mrb[0].mxu0
    %2884 = vdwg.mxu0
    %2885 = vmatprep.subr.mxu0 0.0
    %2886 = vmatpush1.msra.mxu0 %v691
    %2887 = vmatprep.subr.mxu0 0.0
    %2888 = vmatpush1.msra.mxu0 %v692
    %2889 = vmatprep.subr.mxu0 0.0
    %2890 = vmatpush1.msra.mxu0 %v693
    %2891 = vmatprep.subr.mxu0 0.0
    %2892 = vmatpush1.msra.mxu0 %v694
    %2893 = vmatprep.subr.mxu0 0.0
    %2894 = vmatpush1.msra.mxu0 %v695
    %2895 = vmatprep.subr.mxu0 0.0
    %2896 = vmatpush1.msra.mxu0 %v696
    %2897 = vmatprep.subr.mxu0 0.0
    %2898 = vmatpush1.msra.mxu0 %v697
    %2899 = vmatprep.subr.mxu0 0.0
    %2900 = vmatpush1.msra.mxu0 %v698
    %2901 = vmatprep.subr.mxu0 0.0
    %2902 = vmatpush1.msra.mxu0 %v699
    %2903 = vmatprep.subr.mxu0 0.0
    %2904 = vmatpush1.msra.mxu0 %v700
    %2905 = vmatprep.subr.mxu0 0.0
    %2906 = vmatpush1.msra.mxu0 %v701
    %2907 = vmatprep.subr.mxu0 0.0
    %2908 = vmatpush1.msra.mxu0 %v702
    %2909 = vmatprep.subr.mxu0 0.0
    %2910 = vmatpush1.msra.mxu0 %v703
    %2911 = vmatprep.subr.mxu0 0.0
    %2912 = vmatpush1.msra.mxu0 %v704
    %2913 = vmatprep.subr.mxu0 0.0
    %2914 = vmatpush1.msra.mxu0 %v705
    %2915 = vmatprep.subr.mxu0 0.0
    %2916 = vmatpush1.msra.mxu0 %v706
    %2917 = vmatprep.subr.mxu0 0.0
    %2918 = vmatpush1.msra.mxu0 %v707
    %2919 = vmatprep.subr.mxu0 0.0
    %2920 = vmatpush1.msra.mxu0 %v708
    %2921 = vmatprep.subr.mxu0 0.0
    %2922 = vmatpush1.msra.mxu0 %v709
    %2923 = vmatprep.subr.mxu0 0.0
    %2924 = vmatpush1.msra.mxu0 %v710
    %2925 = vmatprep.subr.mxu0 0.0
    %2926 = vmatpush1.msra.mxu0 %v711
    %2927 = vmatprep.subr.mxu0 0.0
    %2928 = vmatpush1.msra.mxu0 %v712
    %2929 = vmatprep.subr.mxu0 0.0
    %2930 = vmatpush1.msra.mxu0 %v713
    %2931 = vmatprep.subr.mxu0 0.0
    %2932 = vmatpush1.msra.mxu0 %v714
    %2933 = vmatprep.subr.mxu0 0.0
    %2934 = vmatpush1.msra.mxu0 %v715
    %2935 = vmatprep.subr.mxu0 0.0
    %2936 = vmatpush1.msra.mxu0 %v716
    %2937 = vmatprep.subr.mxu0 0.0
    %2938 = vmatpush1.msra.mxu0 %v717
    %2939 = vmatprep.subr.mxu0 0.0
    %2940 = vmatpush1.msra.mxu0 %v718
    %2941 = vmatprep.subr.mxu0 0.0
    %2942 = vmatpush1.msra.mxu0 %v719
    %2943 = vmatprep.subr.mxu0 0.0
    %2944 = vmatpush1.msra.mxu0 %v720
    %2945 = vmatprep.subr.mxu0 0.0
    %2946 = vmatpush1.msra.mxu0 %v721
    %2947 = vmatprep.subr.mxu0 0.0
    %2948 = vmatpush1.msra.mxu0 %v722
    %2949 = vmatprep.mubr.f32.mxu0 %v2530
    %2950 = vmatmul.mubr.f32.gmra.mrb[0].mxu0 %v2529
    %v2951 = vpop.f32.mrb[0].mxu0
    %v2952 = vadd.f32 %v2882, %v2951
    %v2953 = vpop.f32.mrb[0].mxu0
    %2954 = vdwg.mxu0
    %2955 = vmatprep.subr.mxu0 0.0
    %2956 = vmatpush1.msra.mxu0 %v723
    %2957 = vmatprep.subr.mxu0 0.0
    %2958 = vmatpush1.msra.mxu0 %v724
    %2959 = vmatprep.subr.mxu0 0.0
    %2960 = vmatpush1.msra.mxu0 %v725
    %2961 = vmatprep.subr.mxu0 0.0
    %2962 = vmatpush1.msra.mxu0 %v726
    %2963 = vmatprep.subr.mxu0 0.0
    %2964 = vmatpush1.msra.mxu0 %v727
    %2965 = vmatprep.subr.mxu0 0.0
    %2966 = vmatpush1.msra.mxu0 %v728
    %2967 = vmatprep.subr.mxu0 0.0
    %2968 = vmatpush1.msra.mxu0 %v729
    %2969 = vmatprep.subr.mxu0 0.0
    %2970 = vmatpush1.msra.mxu0 %v730
    %2971 = vmatprep.subr.mxu0 0.0
    %2972 = vmatpush1.msra.mxu0 %v731
    %2973 = vmatprep.subr.mxu0 0.0
    %2974 = vmatpush1.msra.mxu0 %v732
    %2975 = vmatprep.subr.mxu0 0.0
    %2976 = vmatpush1.msra.mxu0 %v733
    %2977 = vmatprep.subr.mxu0 0.0
    %2978 = vmatpush1.msra.mxu0 %v734
    %2979 = vmatprep.subr.mxu0 0.0
    %2980 = vmatpush1.msra.mxu0 %v735
    %2981 = vmatprep.subr.mxu0 0.0
    %2982 = vmatpush1.msra.mxu0 %v736
    %2983 = vmatprep.subr.mxu0 0.0
    %2984 = vmatpush1.msra.mxu0 %v737
    %2985 = vmatprep.subr.mxu0 0.0
    %2986 = vmatpush1.msra.mxu0 %v738
    %2987 = vmatprep.subr.mxu0 0.0
    %2988 = vmatpush1.msra.mxu0 %v739
    %2989 = vmatprep.subr.mxu0 0.0
    %2990 = vmatpush1.msra.mxu0 %v740
    %2991 = vmatprep.subr.mxu0 0.0
    %2992 = vmatpush1.msra.mxu0 %v741
    %2993 = vmatprep.subr.mxu0 0.0
    %2994 = vmatpush1.msra.mxu0 %v742
    %2995 = vmatprep.subr.mxu0 0.0
    %2996 = vmatpush1.msra.mxu0 %v743
    %2997 = vmatprep.subr.mxu0 0.0
    %2998 = vmatpush1.msra.mxu0 %v744
    %2999 = vmatprep.subr.mxu0 0.0
    %3000 = vmatpush1.msra.mxu0 %v745
    %3001 = vmatprep.subr.mxu0 0.0
    %3002 = vmatpush1.msra.mxu0 %v746
    %3003 = vmatprep.subr.mxu0 0.0
    %3004 = vmatpush1.msra.mxu0 %v747
    %3005 = vmatprep.subr.mxu0 0.0
    %3006 = vmatpush1.msra.mxu0 %v748
    %3007 = vmatprep.subr.mxu0 0.0
    %3008 = vmatpush1.msra.mxu0 %v749
    %3009 = vmatprep.subr.mxu0 0.0
    %3010 = vmatpush1.msra.mxu0 %v750
    %3011 = vmatprep.subr.mxu0 0.0
    %3012 = vmatpush1.msra.mxu0 %v751
    %3013 = vmatprep.subr.mxu0 0.0
    %3014 = vmatpush1.msra.mxu0 %v752
    %3015 = vmatprep.subr.mxu0 0.0
    %3016 = vmatpush1.msra.mxu0 %v753
    %3017 = vmatprep.subr.mxu0 0.0
    %3018 = vmatpush1.msra.mxu0 %v754
    %3019 = vmatprep.mubr.f32.mxu0 %v2532
    %3020 = vmatmul.mubr.f32.gmra.mrb[0].mxu0 %v2531
    %v3021 = vpop.f32.mrb[0].mxu0
    %v3022 = vadd.f32 %v2952, %v3021
    %v3023 = vpop.f32.mrb[0].mxu0
    %3024 = vdwg.mxu0
    %3025 = vmatprep.subr.mxu0 0.0
    %3026 = vmatpush1.msra.mxu0 %v755
    %3027 = vmatprep.subr.mxu0 0.0
    %3028 = vmatpush1.msra.mxu0 %v756
    %3029 = vmatprep.subr.mxu0 0.0
    %3030 = vmatpush1.msra.mxu0 %v757
    %3031 = vmatprep.subr.mxu0 0.0
    %3032 = vmatpush1.msra.mxu0 %v758
    %3033 = vmatprep.subr.mxu0 0.0
    %3034 = vmatpush1.msra.mxu0 %v759
    %3035 = vmatprep.subr.mxu0 0.0
    %3036 = vmatpush1.msra.mxu0 %v760
    %3037 = vmatprep.subr.mxu0 0.0
    %3038 = vmatpush1.msra.mxu0 %v761
    %3039 = vmatprep.subr.mxu0 0.0
    %3040 = vmatpush1.msra.mxu0 %v762
    %3041 = vmatprep.subr.mxu0 0.0
    %3042 = vmatpush1.msra.mxu0 %v763
    %3043 = vmatprep.subr.mxu0 0.0
    %3044 = vmatpush1.msra.mxu0 %v764
    %3045 = vmatprep.subr.mxu0 0.0
    %3046 = vmatpush1.msra.mxu0 %v765
    %3047 = vmatprep.subr.mxu0 0.0
    %3048 = vmatpush1.msra.mxu0 %v766
    %3049 = vmatprep.subr.mxu0 0.0
    %3050 = vmatpush1.msra.mxu0 %v767
    %3051 = vmatprep.subr.mxu0 0.0
    %3052 = vmatpush1.msra.mxu0 %v768
    %3053 = vmatprep.subr.mxu0 0.0
    %3054 = vmatpush1.msra.mxu0 %v769
    %3055 = vmatprep.subr.mxu0 0.0
    %3056 = vmatpush1.msra.mxu0 %v770
    %3057 = vmatprep.subr.mxu0 0.0
    %3058 = vmatpush1.msra.mxu0 %v771
    %3059 = vmatprep.subr.mxu0 0.0
    %3060 = vmatpush1.msra.mxu0 %v772
    %3061 = vmatprep.subr.mxu0 0.0
    %3062 = vmatpush1.msra.mxu0 %v773
    %3063 = vmatprep.subr.mxu0 0.0
    %3064 = vmatpush1.msra.mxu0 %v774
    %3065 = vmatprep.subr.mxu0 0.0
    %3066 = vmatpush1.msra.mxu0 %v775
    %3067 = vmatprep.subr.mxu0 0.0
    %3068 = vmatpush1.msra.mxu0 %v776
    %3069 = vmatprep.subr.mxu0 0.0
    %3070 = vmatpush1.msra.mxu0 %v777
    %3071 = vmatprep.subr.mxu0 0.0
    %3072 = vmatpush1.msra.mxu0 %v778
    %3073 = vmatprep.subr.mxu0 0.0
    %3074 = vmatpush1.msra.mxu0 %v779
    %3075 = vmatprep.subr.mxu0 0.0
    %3076 = vmatpush1.msra.mxu0 %v780
    %3077 = vmatprep.subr.mxu0 0.0
    %3078 = vmatpush1.msra.mxu0 %v781
    %3079 = vmatprep.subr.mxu0 0.0
    %3080 = vmatpush1.msra.mxu0 %v782
    %3081 = vmatprep.subr.mxu0 0.0
    %3082 = vmatpush1.msra.mxu0 %v783
    %3083 = vmatprep.subr.mxu0 0.0
    %3084 = vmatpush1.msra.mxu0 %v784
    %3085 = vmatprep.subr.mxu0 0.0
    %3086 = vmatpush1.msra.mxu0 %v785
    %3087 = vmatprep.subr.mxu0 0.0
    %3088 = vmatpush1.msra.mxu0 %v786
    %3089 = vmatprep.mubr.f32.mxu0 %v2534
    %3090 = vmatmul.mubr.f32.gmra.mrb[0].mxu0 %v2533
    %v3091 = vpop.f32.mrb[0].mxu0
    %v3092 = vadd.f32 %v3022, %v3091
    %v3093 = vpop.f32.mrb[0].mxu0
    %3094 = vdwg.mxu0
    %v3095 = vmul.f32 %v51, %v858
    %v3096 = vmul.f32 %v52, %v860
    %v3097 = vmul.f32 %v53, %v929
    %v3098 = vmul.f32 %v54, %v931
    %v3099 = vmul.f32 %v55, %v1000
    %v3100 = vmul.f32 %v56, %v1002
    %v3101 = vmul.f32 %v57, %v1071
    %v3102 = vmul.f32 %v58, %v1073
    %v3103 = vmul.f32 %v59, %v1142
    %v3104 = vmul.f32 %v60, %v1144
    %v3105 = vmul.f32 %v61, %v1213
    %v3106 = vmul.f32 %v62, %v1215
    %v3107 = vmul.f32 %v63, %v1284
    %v3108 = vmul.f32 %v64, %v1286
    %v3109 = vmul.f32 %v65, %v1355
    %v3110 = vmul.f32 %v66, %v1357
    %3111 = vmatprep.subr.mxu0 0.0
    %3112 = vmatpush1.msra.mxu0 %v147
    %3113 = vmatprep.subr.mxu0 0.0
    %3114 = vmatpush1.msra.mxu0 %v148
    %3115 = vmatprep.subr.mxu0 0.0
    %3116 = vmatpush1.msra.mxu0 %v149
    %3117 = vmatprep.subr.mxu0 0.0
    %3118 = vmatpush1.msra.mxu0 %v150
    %3119 = vmatprep.subr.mxu0 0.0
    %3120 = vmatpush1.msra.mxu0 %v151
    %3121 = vmatprep.subr.mxu0 0.0
    %3122 = vmatpush1.msra.mxu0 %v152
    %3123 = vmatprep.subr.mxu0 0.0
    %3124 = vmatpush1.msra.mxu0 %v153
    %3125 = vmatprep.subr.mxu0 0.0
    %3126 = vmatpush1.msra.mxu0 %v154
    %3127 = vmatprep.subr.mxu0 0.0
    %3128 = vmatpush1.msra.mxu0 %v155
    %3129 = vmatprep.subr.mxu0 0.0
    %3130 = vmatpush1.msra.mxu0 %v156
    %3131 = vmatprep.subr.mxu0 0.0
    %3132 = vmatpush1.msra.mxu0 %v157
    %3133 = vmatprep.subr.mxu0 0.0
    %3134 = vmatpush1.msra.mxu0 %v158
    %3135 = vmatprep.subr.mxu0 0.0
    %3136 = vmatpush1.msra.mxu0 %v159
    %3137 = vmatprep.subr.mxu0 0.0
    %3138 = vmatpush1.msra.mxu0 %v160
    %3139 = vmatprep.subr.mxu0 0.0
    %3140 = vmatpush1.msra.mxu0 %v161
    %3141 = vmatprep.subr.mxu0 0.0
    %3142 = vmatpush1.msra.mxu0 %v162
    %3143 = vmatprep.subr.mxu0 0.0
    %3144 = vmatpush1.msra.mxu0 %v163
    %3145 = vmatprep.subr.mxu0 0.0
    %3146 = vmatpush1.msra.mxu0 %v164
    %3147 = vmatprep.subr.mxu0 0.0
    %3148 = vmatpush1.msra.mxu0 %v165
    %3149 = vmatprep.subr.mxu0 0.0
    %3150 = vmatpush1.msra.mxu0 %v166
    %3151 = vmatprep.subr.mxu0 0.0
    %3152 = vmatpush1.msra.mxu0 %v167
    %3153 = vmatprep.subr.mxu0 0.0
    %3154 = vmatpush1.msra.mxu0 %v168
    %3155 = vmatprep.subr.mxu0 0.0
    %3156 = vmatpush1.msra.mxu0 %v169
    %3157 = vmatprep.subr.mxu0 0.0
    %3158 = vmatpush1.msra.mxu0 %v170
    %3159 = vmatprep.subr.mxu0 0.0
    %3160 = vmatpush1.msra.mxu0 %v171
    %3161 = vmatprep.subr.mxu0 0.0
    %3162 = vmatpush1.msra.mxu0 %v172
    %3163 = vmatprep.subr.mxu0 0.0
    %3164 = vmatpush1.msra.mxu0 %v173
    %3165 = vmatprep.subr.mxu0 0.0
    %3166 = vmatpush1.msra.mxu0 %v174
    %3167 = vmatprep.subr.mxu0 0.0
    %3168 = vmatpush1.msra.mxu0 %v175
    %3169 = vmatprep.subr.mxu0 0.0
    %3170 = vmatpush1.msra.mxu0 %v176
    %3171 = vmatprep.subr.mxu0 0.0
    %3172 = vmatpush1.msra.mxu0 %v177
    %3173 = vmatprep.subr.mxu0 0.0
    %3174 = vmatpush1.msra.mxu0 %v178
    %3175 = vmatprep.mubr.f32.mxu0 %v3096
    %3176 = vmatmul.mubr.f32.gmra.mrb[0].mxu0 %v3095
    %v3177 = vpop.f32.mrb[0].mxu0
    %v3178 = vadd.f32 0.0, %v3177
    %v3179 = vpop.f32.mrb[0].mxu0
    %3180 = vdwg.mxu0
    %3181 = vmatprep.subr.mxu0 0.0
    %3182 = vmatpush1.msra.mxu0 %v179
    %3183 = vmatprep.subr.mxu0 0.0
    %3184 = vmatpush1.msra.mxu0 %v180
    %3185 = vmatprep.subr.mxu0 0.0
    %3186 = vmatpush1.msra.mxu0 %v181
    %3187 = vmatprep.subr.mxu0 0.0
    %3188 = vmatpush1.msra.mxu0 %v182
    %3189 = vmatprep.subr.mxu0 0.0
    %3190 = vmatpush1.msra.mxu0 %v183
    %3191 = vmatprep.subr.mxu0 0.0
    %3192 = vmatpush1.msra.mxu0 %v184
    %3193 = vmatprep.subr.mxu0 0.0
    %3194 = vmatpush1.msra.mxu0 %v185
    %3195 = vmatprep.subr.mxu0 0.0
    %3196 = vmatpush1.msra.mxu0 %v186
    %3197 = vmatprep.subr.mxu0 0.0
    %3198 = vmatpush1.msra.mxu0 %v187
    %3199 = vmatprep.subr.mxu0 0.0
    %3200 = vmatpush1.msra.mxu0 %v188
    %3201 = vmatprep.subr.mxu0 0.0
    %3202 = vmatpush1.msra.mxu0 %v189
    %3203 = vmatprep.subr.mxu0 0.0
    %3204 = vmatpush1.msra.mxu0 %v190
    %3205 = vmatprep.subr.mxu0 0.0
    %3206 = vmatpush1.msra.mxu0 %v191
    %3207 = vmatprep.subr.mxu0 0.0
    %3208 = vmatpush1.msra.mxu0 %v192
    %3209 = vmatprep.subr.mxu0 0.0
    %3210 = vmatpush1.msra.mxu0 %v193
    %3211 = vmatprep.subr.mxu0 0.0
    %3212 = vmatpush1.msra.mxu0 %v194
    %3213 = vmatprep.subr.mxu0 0.0
    %3214 = vmatpush1.msra.mxu0 %v195
    %3215 = vmatprep.subr.mxu0 0.0
    %3216 = vmatpush1.msra.mxu0 %v196
    %3217 = vmatprep.subr.mxu0 0.0
    %3218 = vmatpush1.msra.mxu0 %v197
    %3219 = vmatprep.subr.mxu0 0.0
    %3220 = vmatpush1.msra.mxu0 %v198
    %3221 = vmatprep.subr.mxu0 0.0
    %3222 = vmatpush1.msra.mxu0 %v199
    %3223 = vmatprep.subr.mxu0 0.0
    %3224 = vmatpush1.msra.mxu0 %v200
    %3225 = vmatprep.subr.mxu0 0.0
    %3226 = vmatpush1.msra.mxu0 %v201
    %3227 = vmatprep.subr.mxu0 0.0
    %3228 = vmatpush1.msra.mxu0 %v202
    %3229 = vmatprep.subr.mxu0 0.0
    %3230 = vmatpush1.msra.mxu0 %v203
    %3231 = vmatprep.subr.mxu0 0.0
    %3232 = vmatpush1.msra.mxu0 %v204
    %3233 = vmatprep.subr.mxu0 0.0
    %3234 = vmatpush1.msra.mxu0 %v205
    %3235 = vmatprep.subr.mxu0 0.0
    %3236 = vmatpush1.msra.mxu0 %v206
    %3237 = vmatprep.subr.mxu0 0.0
    %3238 = vmatpush1.msra.mxu0 %v207
    %3239 = vmatprep.subr.mxu0 0.0
    %3240 = vmatpush1.msra.mxu0 %v208
    %3241 = vmatprep.subr.mxu0 0.0
    %3242 = vmatpush1.msra.mxu0 %v209
    %3243 = vmatprep.subr.mxu0 0.0
    %3244 = vmatpush1.msra.mxu0 %v210
    %3245 = vmatprep.mubr.f32.mxu0 %v3098
    %3246 = vmatmul.mubr.f32.gmra.mrb[0].mxu0 %v3097
    %v3247 = vpop.f32.mrb[0].mxu0
    %v3248 = vadd.f32 %v3178, %v3247
    %v3249 = vpop.f32.mrb[0].mxu0
    %3250 = vdwg.mxu0
    %3251 = vmatprep.subr.mxu0 0.0
    %3252 = vmatpush1.msra.mxu0 %v211
    %3253 = vmatprep.subr.mxu0 0.0
    %3254 = vmatpush1.msra.mxu0 %v212
    %3255 = vmatprep.subr.mxu0 0.0
    %3256 = vmatpush1.msra.mxu0 %v213
    %3257 = vmatprep.subr.mxu0 0.0
    %3258 = vmatpush1.msra.mxu0 %v214
    %3259 = vmatprep.subr.mxu0 0.0
    %3260 = vmatpush1.msra.mxu0 %v215
    %3261 = vmatprep.subr.mxu0 0.0
    %3262 = vmatpush1.msra.mxu0 %v216
    %3263 = vmatprep.subr.mxu0 0.0
    %3264 = vmatpush1.msra.mxu0 %v217
    %3265 = vmatprep.subr.mxu0 0.0
    %3266 = vmatpush1.msra.mxu0 %v218
    %3267 = vmatprep.subr.mxu0 0.0
    %3268 = vmatpush1.msra.mxu0 %v219
    %3269 = vmatprep.subr.mxu0 0.0
    %3270 = vmatpush1.msra.mxu0 %v220
    %3271 = vmatprep.subr.mxu0 0.0
    %3272 = vmatpush1.msra.mxu0 %v221
    %3273 = vmatprep.subr.mxu0 0.0
    %3274 = vmatpush1.msra.mxu0 %v222
    %3275 = vmatprep.subr.mxu0 0.0
    %3276 = vmatpush1.msra.mxu0 %v223
    %3277 = vmatprep.subr.mxu0 0.0
    %3278 = vmatpush1.msra.mxu0 %v224
    %3279 = vmatprep.subr.mxu0 0.0
    %3280 = vmatpush1.msra.mxu0 %v225
    %3281 = vmatprep.subr.mxu0 0.0
    %3282 = vmatpush1.msra.mxu0 %v226
    %3283 = vmatprep.subr.mxu0 0.0
    %3284 = vmatpush1.msra.mxu0 %v227
    %3285 = vmatprep.subr.mxu0 0.0
    %3286 = vmatpush1.msra.mxu0 %v228
    %3287 = vmatprep.subr.mxu0 0.0
    %3288 = vmatpush1.msra.mxu0 %v229
    %3289 = vmatprep.subr.mxu0 0.0
    %3290 = vmatpush1.msra.mxu0 %v230
    %3291 = vmatprep.subr.mxu0 0.0
    %3292 = vmatpush1.msra.mxu0 %v231
    %3293 = vmatprep.subr.mxu0 0.0
    %3294 = vmatpush1.msra.mxu0 %v232
    %3295 = vmatprep.subr.mxu0 0.0
    %3296 = vmatpush1.msra.mxu0 %v233
    %3297 = vmatprep.subr.mxu0 0.0
    %3298 = vmatpush1.msra.mxu0 %v234
    %3299 = vmatprep.subr.mxu0 0.0
    %3300 = vmatpush1.msra.mxu0 %v235
    %3301 = vmatprep.subr.mxu0 0.0
    %3302 = vmatpush1.msra.mxu0 %v236
    %3303 = vmatprep.subr.mxu0 0.0
    %3304 = vmatpush1.msra.mxu0 %v237
    %3305 = vmatprep.subr.mxu0 0.0
    %3306 = vmatpush1.msra.mxu0 %v238
    %3307 = vmatprep.subr.mxu0 0.0
    %3308 = vmatpush1.msra.mxu0 %v239
    %3309 = vmatprep.subr.mxu0 0.0
    %3310 = vmatpush1.msra.mxu0 %v240
    %3311 = vmatprep.subr.mxu0 0.0
    %3312 = vmatpush1.msra.mxu0 %v241
    %3313 = vmatprep.subr.mxu0 0.0
    %3314 = vmatpush1.msra.mxu0 %v242
    %3315 = vmatprep.mubr.f32.mxu0 %v3100
    %3316 = vmatmul.mubr.f32.gmra.mrb[0].mxu0 %v3099
    %v3317 = vpop.f32.mrb[0].mxu0
    %v3318 = vadd.f32 %v3248, %v3317
    %v3319 = vpop.f32.mrb[0].mxu0
    %3320 = vdwg.mxu0
    %3321 = vmatprep.subr.mxu0 0.0
    %3322 = vmatpush1.msra.mxu0 %v243
    %3323 = vmatprep.subr.mxu0 0.0
    %3324 = vmatpush1.msra.mxu0 %v244
    %3325 = vmatprep.subr.mxu0 0.0
    %3326 = vmatpush1.msra.mxu0 %v245
    %3327 = vmatprep.subr.mxu0 0.0
    %3328 = vmatpush1.msra.mxu0 %v246
    %3329 = vmatprep.subr.mxu0 0.0
    %3330 = vmatpush1.msra.mxu0 %v247
    %3331 = vmatprep.subr.mxu0 0.0
    %3332 = vmatpush1.msra.mxu0 %v248
    %3333 = vmatprep.subr.mxu0 0.0
    %3334 = vmatpush1.msra.mxu0 %v249
    %3335 = vmatprep.subr.mxu0 0.0
    %3336 = vmatpush1.msra.mxu0 %v250
    %3337 = vmatprep.subr.mxu0 0.0
    %3338 = vmatpush1.msra.mxu0 %v251
    %3339 = vmatprep.subr.mxu0 0.0
    %3340 = vmatpush1.msra.mxu0 %v252
    %3341 = vmatprep.subr.mxu0 0.0
    %3342 = vmatpush1.msra.mxu0 %v253
    %3343 = vmatprep.subr.mxu0 0.0
    %3344 = vmatpush1.msra.mxu0 %v254
    %3345 = vmatprep.subr.mxu0 0.0
    %3346 = vmatpush1.msra.mxu0 %v255
    %3347 = vmatprep.subr.mxu0 0.0
    %3348 = vmatpush1.msra.mxu0 %v256
    %3349 = vmatprep.subr.mxu0 0.0
    %3350 = vmatpush1.msra.mxu0 %v257
    %3351 = vmatprep.subr.mxu0 0.0
    %3352 = vmatpush1.msra.mxu0 %v258
    %3353 = vmatprep.subr.mxu0 0.0
    %3354 = vmatpush1.msra.mxu0 %v259
    %3355 = vmatprep.subr.mxu0 0.0
    %3356 = vmatpush1.msra.mxu0 %v260
    %3357 = vmatprep.subr.mxu0 0.0
    %3358 = vmatpush1.msra.mxu0 %v261
    %3359 = vmatprep.subr.mxu0 0.0
    %3360 = vmatpush1.msra.mxu0 %v262
    %3361 = vmatprep.subr.mxu0 0.0
    %3362 = vmatpush1.msra.mxu0 %v263
    %3363 = vmatprep.subr.mxu0 0.0
    %3364 = vmatpush1.msra.mxu0 %v264
    %3365 = vmatprep.subr.mxu0 0.0
    %3366 = vmatpush1.msra.mxu0 %v265
    %3367 = vmatprep.subr.mxu0 0.0
    %3368 = vmatpush1.msra.mxu0 %v266
    %3369 = vmatprep.subr.mxu0 0.0
    %3370 = vmatpush1.msra.mxu0 %v267
    %3371 = vmatprep.subr.mxu0 0.0
    %3372 = vmatpush1.msra.mxu0 %v268
    %3373 = vmatprep.subr.mxu0 0.0
    %3374 = vmatpush1.msra.mxu0 %v269
    %3375 = vmatprep.subr.mxu0 0.0
    %3376 = vmatpush1.msra.mxu0 %v270
    %3377 = vmatprep.subr.mxu0 0.0
    %3378 = vmatpush1.msra.mxu0 %v271
    %3379 = vmatprep.subr.mxu0 0.0
    %3380 = vmatpush1.msra.mxu0 %v272
    %3381 = vmatprep.subr.mxu0 0.0
    %3382 = vmatpush1.msra.mxu0 %v273
    %3383 = vmatprep.subr.mxu0 0.0
    %3384 = vmatpush1.msra.mxu0 %v274
    %3385 = vmatprep.mubr.f32.mxu0 %v3102
    %3386 = vmatmul.mubr.f32.gmra.mrb[0].mxu0 %v3101
    %v3387 = vpop.f32.mrb[0].mxu0
    %v3388 = vadd.f32 %v3318, %v3387
    %v3389 = vpop.f32.mrb[0].mxu0
    %3390 = vdwg.mxu0
    %3391 = vmatprep.subr.mxu0 0.0
    %3392 = vmatpush1.msra.mxu0 %v275
    %3393 = vmatprep.subr.mxu0 0.0
    %3394 = vmatpush1.msra.mxu0 %v276
    %3395 = vmatprep.subr.mxu0 0.0
    %3396 = vmatpush1.msra.mxu0 %v277
    %3397 = vmatprep.subr.mxu0 0.0
    %3398 = vmatpush1.msra.mxu0 %v278
    %3399 = vmatprep.subr.mxu0 0.0
    %3400 = vmatpush1.msra.mxu0 %v279
    %3401 = vmatprep.subr.mxu0 0.0
    %3402 = vmatpush1.msra.mxu0 %v280
    %3403 = vmatprep.subr.mxu0 0.0
    %3404 = vmatpush1.msra.mxu0 %v281
    %3405 = vmatprep.subr.mxu0 0.0
    %3406 = vmatpush1.msra.mxu0 %v282
    %3407 = vmatprep.subr.mxu0 0.0
    %3408 = vmatpush1.msra.mxu0 %v283
    %3409 = vmatprep.subr.mxu0 0.0
    %3410 = vmatpush1.msra.mxu0 %v284
    %3411 = vmatprep.subr.mxu0 0.0
    %3412 = vmatpush1.msra.mxu0 %v285
    %3413 = vmatprep.subr.mxu0 0.0
    %3414 = vmatpush1.msra.mxu0 %v286
    %3415 = vmatprep.subr.mxu0 0.0
    %3416 = vmatpush1.msra.mxu0 %v287
    %3417 = vmatprep.subr.mxu0 0.0
    %3418 = vmatpush1.msra.mxu0 %v288
    %3419 = vmatprep.subr.mxu0 0.0
    %3420 = vmatpush1.msra.mxu0 %v289
    %3421 = vmatprep.subr.mxu0 0.0
    %3422 = vmatpush1.msra.mxu0 %v290
    %3423 = vmatprep.subr.mxu0 0.0
    %3424 = vmatpush1.msra.mxu0 %v291
    %3425 = vmatprep.subr.mxu0 0.0
    %3426 = vmatpush1.msra.mxu0 %v292
    %3427 = vmatprep.subr.mxu0 0.0
    %3428 = vmatpush1.msra.mxu0 %v293
    %3429 = vmatprep.subr.mxu0 0.0
    %3430 = vmatpush1.msra.mxu0 %v294
    %3431 = vmatprep.subr.mxu0 0.0
    %3432 = vmatpush1.msra.mxu0 %v295
    %3433 = vmatprep.subr.mxu0 0.0
    %3434 = vmatpush1.msra.mxu0 %v296
    %3435 = vmatprep.subr.mxu0 0.0
    %3436 = vmatpush1.msra.mxu0 %v297
    %3437 = vmatprep.subr.mxu0 0.0
    %3438 = vmatpush1.msra.mxu0 %v298
    %3439 = vmatprep.subr.mxu0 0.0
    %3440 = vmatpush1.msra.mxu0 %v299
    %3441 = vmatprep.subr.mxu0 0.0
    %3442 = vmatpush1.msra.mxu0 %v300
    %3443 = vmatprep.subr.mxu0 0.0
    %3444 = vmatpush1.msra.mxu0 %v301
    %3445 = vmatprep.subr.mxu0 0.0
    %3446 = vmatpush1.msra.mxu0 %v302
    %3447 = vmatprep.subr.mxu0 0.0
    %3448 = vmatpush1.msra.mxu0 %v303
    %3449 = vmatprep.subr.mxu0 0.0
    %3450 = vmatpush1.msra.mxu0 %v304
    %3451 = vmatprep.subr.mxu0 0.0
    %3452 = vmatpush1.msra.mxu0 %v305
    %3453 = vmatprep.subr.mxu0 0.0
    %3454 = vmatpush1.msra.mxu0 %v306
    %3455 = vmatprep.mubr.f32.mxu0 %v3104
    %3456 = vmatmul.mubr.f32.gmra.mrb[0].mxu0 %v3103
    %v3457 = vpop.f32.mrb[0].mxu0
    %v3458 = vadd.f32 %v3388, %v3457
    %v3459 = vpop.f32.mrb[0].mxu0
    %3460 = vdwg.mxu0
    %3461 = vmatprep.subr.mxu0 0.0
    %3462 = vmatpush1.msra.mxu0 %v307
    %3463 = vmatprep.subr.mxu0 0.0
    %3464 = vmatpush1.msra.mxu0 %v308
    %3465 = vmatprep.subr.mxu0 0.0
    %3466 = vmatpush1.msra.mxu0 %v309
    %3467 = vmatprep.subr.mxu0 0.0
    %3468 = vmatpush1.msra.mxu0 %v310
    %3469 = vmatprep.subr.mxu0 0.0
    %3470 = vmatpush1.msra.mxu0 %v311
    %3471 = vmatprep.subr.mxu0 0.0
    %3472 = vmatpush1.msra.mxu0 %v312
    %3473 = vmatprep.subr.mxu0 0.0
    %3474 = vmatpush1.msra.mxu0 %v313
    %3475 = vmatprep.subr.mxu0 0.0
    %3476 = vmatpush1.msra.mxu0 %v314
    %3477 = vmatprep.subr.mxu0 0.0
    %3478 = vmatpush1.msra.mxu0 %v315
    %3479 = vmatprep.subr.mxu0 0.0
    %3480 = vmatpush1.msra.mxu0 %v316
    %3481 = vmatprep.subr.mxu0 0.0
    %3482 = vmatpush1.msra.mxu0 %v317
    %3483 = vmatprep.subr.mxu0 0.0
    %3484 = vmatpush1.msra.mxu0 %v318
    %3485 = vmatprep.subr.mxu0 0.0
    %3486 = vmatpush1.msra.mxu0 %v319
    %3487 = vmatprep.subr.mxu0 0.0
    %3488 = vmatpush1.msra.mxu0 %v320
    %3489 = vmatprep.subr.mxu0 0.0
    %3490 = vmatpush1.msra.mxu0 %v321
    %3491 = vmatprep.subr.mxu0 0.0
    %3492 = vmatpush1.msra.mxu0 %v322
    %3493 = vmatprep.subr.mxu0 0.0
    %3494 = vmatpush1.msra.mxu0 %v323
    %3495 = vmatprep.subr.mxu0 0.0
    %3496 = vmatpush1.msra.mxu0 %v324
    %3497 = vmatprep.subr.mxu0 0.0
    %3498 = vmatpush1.msra.mxu0 %v325
    %3499 = vmatprep.subr.mxu0 0.0
    %3500 = vmatpush1.msra.mxu0 %v326
    %3501 = vmatprep.subr.mxu0 0.0
    %3502 = vmatpush1.msra.mxu0 %v327
    %3503 = vmatprep.subr.mxu0 0.0
    %3504 = vmatpush1.msra.mxu0 %v328
    %3505 = vmatprep.subr.mxu0 0.0
    %3506 = vmatpush1.msra.mxu0 %v329
    %3507 = vmatprep.subr.mxu0 0.0
    %3508 = vmatpush1.msra.mxu0 %v330
    %3509 = vmatprep.subr.mxu0 0.0
    %3510 = vmatpush1.msra.mxu0 %v331
    %3511 = vmatprep.subr.mxu0 0.0
    %3512 = vmatpush1.msra.mxu0 %v332
    %3513 = vmatprep.subr.mxu0 0.0
    %3514 = vmatpush1.msra.mxu0 %v333
    %3515 = vmatprep.subr.mxu0 0.0
    %3516 = vmatpush1.msra.mxu0 %v334
    %3517 = vmatprep.subr.mxu0 0.0
    %3518 = vmatpush1.msra.mxu0 %v335
    %3519 = vmatprep.subr.mxu0 0.0
    %3520 = vmatpush1.msra.mxu0 %v336
    %3521 = vmatprep.subr.mxu0 0.0
    %3522 = vmatpush1.msra.mxu0 %v337
    %3523 = vmatprep.subr.mxu0 0.0
    %3524 = vmatpush1.msra.mxu0 %v338
    %3525 = vmatprep.mubr.f32.mxu0 %v3106
    %3526 = vmatmul.mubr.f32.gmra.mrb[0].mxu0 %v3105
    %v3527 = vpop.f32.mrb[0].mxu0
    %v3528 = vadd.f32 %v3458, %v3527
    %v3529 = vpop.f32.mrb[0].mxu0
    %3530 = vdwg.mxu0
    %3531 = vmatprep.subr.mxu0 0.0
    %3532 = vmatpush1.msra.mxu0 %v339
    %3533 = vmatprep.subr.mxu0 0.0
    %3534 = vmatpush1.msra.mxu0 %v340
    %3535 = vmatprep.subr.mxu0 0.0
    %3536 = vmatpush1.msra.mxu0 %v341
    %3537 = vmatprep.subr.mxu0 0.0
    %3538 = vmatpush1.msra.mxu0 %v342
    %3539 = vmatprep.subr.mxu0 0.0
    %3540 = vmatpush1.msra.mxu0 %v343
    %3541 = vmatprep.subr.mxu0 0.0
    %3542 = vmatpush1.msra.mxu0 %v344
    %3543 = vmatprep.subr.mxu0 0.0
    %3544 = vmatpush1.msra.mxu0 %v345
    %3545 = vmatprep.subr.mxu0 0.0
    %3546 = vmatpush1.msra.mxu0 %v346
    %3547 = vmatprep.subr.mxu0 0.0
    %3548 = vmatpush1.msra.mxu0 %v347
    %3549 = vmatprep.subr.mxu0 0.0
    %3550 = vmatpush1.msra.mxu0 %v348
    %3551 = vmatprep.subr.mxu0 0.0
    %3552 = vmatpush1.msra.mxu0 %v349
    %3553 = vmatprep.subr.mxu0 0.0
    %3554 = vmatpush1.msra.mxu0 %v350
    %3555 = vmatprep.subr.mxu0 0.0
    %3556 = vmatpush1.msra.mxu0 %v351
    %3557 = vmatprep.subr.mxu0 0.0
    %3558 = vmatpush1.msra.mxu0 %v352
    %3559 = vmatprep.subr.mxu0 0.0
    %3560 = vmatpush1.msra.mxu0 %v353
    %3561 = vmatprep.subr.mxu0 0.0
    %3562 = vmatpush1.msra.mxu0 %v354
    %3563 = vmatprep.subr.mxu0 0.0
    %3564 = vmatpush1.msra.mxu0 %v355
    %3565 = vmatprep.subr.mxu0 0.0
    %3566 = vmatpush1.msra.mxu0 %v356
    %3567 = vmatprep.subr.mxu0 0.0
    %3568 = vmatpush1.msra.mxu0 %v357
    %3569 = vmatprep.subr.mxu0 0.0
    %3570 = vmatpush1.msra.mxu0 %v358
    %3571 = vmatprep.subr.mxu0 0.0
    %3572 = vmatpush1.msra.mxu0 %v359
    %3573 = vmatprep.subr.mxu0 0.0
    %3574 = vmatpush1.msra.mxu0 %v360
    %3575 = vmatprep.subr.mxu0 0.0
    %3576 = vmatpush1.msra.mxu0 %v361
    %3577 = vmatprep.subr.mxu0 0.0
    %3578 = vmatpush1.msra.mxu0 %v362
    %3579 = vmatprep.subr.mxu0 0.0
    %3580 = vmatpush1.msra.mxu0 %v363
    %3581 = vmatprep.subr.mxu0 0.0
    %3582 = vmatpush1.msra.mxu0 %v364
    %3583 = vmatprep.subr.mxu0 0.0
    %3584 = vmatpush1.msra.mxu0 %v365
    %3585 = vmatprep.subr.mxu0 0.0
    %3586 = vmatpush1.msra.mxu0 %v366
    %3587 = vmatprep.subr.mxu0 0.0
    %3588 = vmatpush1.msra.mxu0 %v367
    %3589 = vmatprep.subr.mxu0 0.0
    %3590 = vmatpush1.msra.mxu0 %v368
    %3591 = vmatprep.subr.mxu0 0.0
    %3592 = vmatpush1.msra.mxu0 %v369
    %3593 = vmatprep.subr.mxu0 0.0
    %3594 = vmatpush1.msra.mxu0 %v370
    %3595 = vmatprep.mubr.f32.mxu0 %v3108
    %3596 = vmatmul.mubr.f32.gmra.mrb[0].mxu0 %v3107
    %v3597 = vpop.f32.mrb[0].mxu0
    %v3598 = vadd.f32 %v3528, %v3597
    %v3599 = vpop.f32.mrb[0].mxu0
    %3600 = vdwg.mxu0
    %3601 = vmatprep.subr.mxu0 0.0
    %3602 = vmatpush1.msra.mxu0 %v371
    %3603 = vmatprep.subr.mxu0 0.0
    %3604 = vmatpush1.msra.mxu0 %v372
    %3605 = vmatprep.subr.mxu0 0.0
    %3606 = vmatpush1.msra.mxu0 %v373
    %3607 = vmatprep.subr.mxu0 0.0
    %3608 = vmatpush1.msra.mxu0 %v374
    %3609 = vmatprep.subr.mxu0 0.0
    %3610 = vmatpush1.msra.mxu0 %v375
    %3611 = vmatprep.subr.mxu0 0.0
    %3612 = vmatpush1.msra.mxu0 %v376
    %3613 = vmatprep.subr.mxu0 0.0
    %3614 = vmatpush1.msra.mxu0 %v377
    %3615 = vmatprep.subr.mxu0 0.0
    %3616 = vmatpush1.msra.mxu0 %v378
    %3617 = vmatprep.subr.mxu0 0.0
    %3618 = vmatpush1.msra.mxu0 %v379
    %3619 = vmatprep.subr.mxu0 0.0
    %3620 = vmatpush1.msra.mxu0 %v380
    %3621 = vmatprep.subr.mxu0 0.0
    %3622 = vmatpush1.msra.mxu0 %v381
    %3623 = vmatprep.subr.mxu0 0.0
    %3624 = vmatpush1.msra.mxu0 %v382
    %3625 = vmatprep.subr.mxu0 0.0
    %3626 = vmatpush1.msra.mxu0 %v383
    %3627 = vmatprep.subr.mxu0 0.0
    %3628 = vmatpush1.msra.mxu0 %v384
    %3629 = vmatprep.subr.mxu0 0.0
    %3630 = vmatpush1.msra.mxu0 %v385
    %3631 = vmatprep.subr.mxu0 0.0
    %3632 = vmatpush1.msra.mxu0 %v386
    %3633 = vmatprep.subr.mxu0 0.0
    %3634 = vmatpush1.msra.mxu0 %v387
    %3635 = vmatprep.subr.mxu0 0.0
    %3636 = vmatpush1.msra.mxu0 %v388
    %3637 = vmatprep.subr.mxu0 0.0
    %3638 = vmatpush1.msra.mxu0 %v389
    %3639 = vmatprep.subr.mxu0 0.0
    %3640 = vmatpush1.msra.mxu0 %v390
    %3641 = vmatprep.subr.mxu0 0.0
    %3642 = vmatpush1.msra.mxu0 %v391
    %3643 = vmatprep.subr.mxu0 0.0
    %3644 = vmatpush1.msra.mxu0 %v392
    %3645 = vmatprep.subr.mxu0 0.0
    %3646 = vmatpush1.msra.mxu0 %v393
    %3647 = vmatprep.subr.mxu0 0.0
    %3648 = vmatpush1.msra.mxu0 %v394
    %3649 = vmatprep.subr.mxu0 0.0
    %3650 = vmatpush1.msra.mxu0 %v395
    %3651 = vmatprep.subr.mxu0 0.0
    %3652 = vmatpush1.msra.mxu0 %v396
    %3653 = vmatprep.subr.mxu0 0.0
    %3654 = vmatpush1.msra.mxu0 %v397
    %3655 = vmatprep.subr.mxu0 0.0
    %3656 = vmatpush1.msra.mxu0 %v398
    %3657 = vmatprep.subr.mxu0 0.0
    %3658 = vmatpush1.msra.mxu0 %v399
    %3659 = vmatprep.subr.mxu0 0.0
    %3660 = vmatpush1.msra.mxu0 %v400
    %3661 = vmatprep.subr.mxu0 0.0
    %3662 = vmatpush1.msra.mxu0 %v401
    %3663 = vmatprep.subr.mxu0 0.0
    %3664 = vmatpush1.msra.mxu0 %v402
    %3665 = vmatprep.mubr.f32.mxu0 %v3110
    %3666 = vmatmul.mubr.f32.gmra.mrb[0].mxu0 %v3109
    %v3667 = vpop.f32.mrb[0].mxu0
    %v3668 = vadd.f32 %v3598, %v3667
    %v3669 = vpop.f32.mrb[0].mxu0
    %3670 = vdwg.mxu0
    %v3671 = vsub.f32 0.0, %v3668
    %v3672 = vmul.f32 %v3671, 1.442695
    %v3673 = vpow.pop %v3672
    %v3674 = vadd.f32 %v3673, 1.0
    %v3675 = vrcp.pop %v3674
    %v3677 = vsel %vm1935, %v3675, 0
    %3679 = vmatprep.subr.mxu0 %v404
    %3680 = vmatpush1.msra.mxu0 %v403
    %3681 = vmatprep.subr.mxu0 %v420
    %3682 = vmatpush1.msra.mxu0 %v419
    %3683 = vmatprep.subr.mxu0 %v436
    %3684 = vmatpush1.msra.mxu0 %v435
    %3685 = vmatprep.subr.mxu0 %v452
    %3686 = vmatpush1.msra.mxu0 %v451
    %3687 = vmatprep.subr.mxu0 %v468
    %3688 = vmatpush1.msra.mxu0 %v467
    %3689 = vmatprep.subr.mxu0 %v484
    %3690 = vmatpush1.msra.mxu0 %v483
    %3691 = vmatprep.subr.mxu0 %v500
    %3692 = vmatpush1.msra.mxu0 %v499
    %3693 = vmatprep.subr.mxu0 %v516
    %3694 = vmatpush1.msra.mxu0 %v515
    %3695 = vmatprep.subr.mxu0 0.0
    %3696 = vmatpush1.msra.mxu0 0.0
    %3697 = vmatprep.subr.mxu0 0.0
    %3698 = vmatpush1.msra.mxu0 0.0
    %3699 = vmatprep.subr.mxu0 0.0
    %3700 = vmatpush1.msra.mxu0 0.0
    %3701 = vmatprep.subr.mxu0 0.0
    %3702 = vmatpush1.msra.mxu0 0.0
    %3703 = vmatprep.subr.mxu0 0.0
    %3704 = vmatpush1.msra.mxu0 0.0
    %3705 = vmatprep.subr.mxu0 0.0
    %3706 = vmatpush1.msra.mxu0 0.0
    %3707 = vmatprep.subr.mxu0 0.0
    %3708 = vmatpush1.msra.mxu0 0.0
    %3709 = vmatprep.subr.mxu0 0.0
    %3710 = vmatpush1.msra.mxu0 0.0
    %3711 = vmatprep.subr.mxu0 0.0
    %3712 = vmatpush1.msra.mxu0 0.0
    %3713 = vmatprep.subr.mxu0 0.0
    %3714 = vmatpush1.msra.mxu0 0.0
    %3715 = vmatprep.subr.mxu0 0.0
    %3716 = vmatpush1.msra.mxu0 0.0
    %3717 = vmatprep.subr.mxu0 0.0
    %3718 = vmatpush1.msra.mxu0 0.0
    %3719 = vmatprep.subr.mxu0 0.0
    %3720 = vmatpush1.msra.mxu0 0.0
    %3721 = vmatprep.subr.mxu0 0.0
    %3722 = vmatpush1.msra.mxu0 0.0
    %3723 = vmatprep.subr.mxu0 0.0
    %3724 = vmatpush1.msra.mxu0 0.0
    %3725 = vmatprep.subr.mxu0 0.0
    %3726 = vmatpush1.msra.mxu0 0.0
    %3727 = vmatprep.subr.mxu0 0.0
    %3728 = vmatpush1.msra.mxu0 0.0
    %3729 = vmatprep.subr.mxu0 0.0
    %3730 = vmatpush1.msra.mxu0 0.0
    %3731 = vmatprep.subr.mxu0 0.0
    %3732 = vmatpush1.msra.mxu0 0.0
    %3733 = vmatprep.subr.mxu0 0.0
    %3734 = vmatpush1.msra.mxu0 0.0
    %3735 = vmatprep.subr.mxu0 0.0
    %3736 = vmatpush1.msra.mxu0 0.0
    %3737 = vmatprep.subr.mxu0 0.0
    %3738 = vmatpush1.msra.mxu0 0.0
    %3739 = vmatprep.subr.mxu0 0.0
    %3740 = vmatpush1.msra.mxu0 0.0
    %3741 = vmatprep.subr.mxu0 0.0
    %3742 = vmatpush1.msra.mxu0 0.0
    %3743 = vmatprep.mubr.f32.mxu0 0.0
    %3744 = vmatmul.mubr.f32.gmra.mrb[0].mxu0 %v3677
    %v3745 = vpop.f32.mrb[0].mxu0
    %v3746 = vadd.f32 0.0, %v3745
    %v3747 = vpop.f32.mrb[0].mxu0
    %v3748 = vadd.f32 0.0, %v3747
    %3749 = vdwg.mxu0
    %3750 = vmatprep.subr.mxu0 %v406
    %3751 = vmatpush1.msra.mxu0 %v405
    %3752 = vmatprep.subr.mxu0 %v422
    %3753 = vmatpush1.msra.mxu0 %v421
    %3754 = vmatprep.subr.mxu0 %v438
    %3755 = vmatpush1.msra.mxu0 %v437
    %3756 = vmatprep.subr.mxu0 %v454
    %3757 = vmatpush1.msra.mxu0 %v453
    %3758 = vmatprep.subr.mxu0 %v470
    %3759 = vmatpush1.msra.mxu0 %v469
    %3760 = vmatprep.subr.mxu0 %v486
    %3761 = vmatpush1.msra.mxu0 %v485
    %3762 = vmatprep.subr.mxu0 %v502
    %3763 = vmatpush1.msra.mxu0 %v501
    %3764 = vmatprep.subr.mxu0 %v518
    %3765 = vmatpush1.msra.mxu0 %v517
    %3766 = vmatprep.subr.mxu0 0.0
    %3767 = vmatpush1.msra.mxu0 0.0
    %3768 = vmatprep.subr.mxu0 0.0
    %3769 = vmatpush1.msra.mxu0 0.0
    %3770 = vmatprep.subr.mxu0 0.0
    %3771 = vmatpush1.msra.mxu0 0.0
    %3772 = vmatprep.subr.mxu0 0.0
    %3773 = vmatpush1.msra.mxu0 0.0
    %3774 = vmatprep.subr.mxu0 0.0
    %3775 = vmatpush1.msra.mxu0 0.0
    %3776 = vmatprep.subr.mxu0 0.0
    %3777 = vmatpush1.msra.mxu0 0.0
    %3778 = vmatprep.subr.mxu0 0.0
    %3779 = vmatpush1.msra.mxu0 0.0
    %3780 = vmatprep.subr.mxu0 0.0
    %3781 = vmatpush1.msra.mxu0 0.0
    %3782 = vmatprep.subr.mxu0 0.0
    %3783 = vmatpush1.msra.mxu0 0.0
    %3784 = vmatprep.subr.mxu0 0.0
    %3785 = vmatpush1.msra.mxu0 0.0
    %3786 = vmatprep.subr.mxu0 0.0
    %3787 = vmatpush1.msra.mxu0 0.0
    %3788 = vmatprep.subr.mxu0 0.0
    %3789 = vmatpush1.msra.mxu0 0.0
    %3790 = vmatprep.subr.mxu0 0.0
    %3791 = vmatpush1.msra.mxu0 0.0
    %3792 = vmatprep.subr.mxu0 0.0
    %3793 = vmatpush1.msra.mxu0 0.0
    %3794 = vmatprep.subr.mxu0 0.0
    %3795 = vmatpush1.msra.mxu0 0.0
    %3796 = vmatprep.subr.mxu0 0.0
    %3797 = vmatpush1.msra.mxu0 0.0
    %3798 = vmatprep.subr.mxu0 0.0
    %3799 = vmatpush1.msra.mxu0 0.0
    %3800 = vmatprep.subr.mxu0 0.0
    %3801 = vmatpush1.msra.mxu0 0.0
    %3802 = vmatprep.subr.mxu0 0.0
    %3803 = vmatpush1.msra.mxu0 0.0
    %3804 = vmatprep.subr.mxu0 0.0
    %3805 = vmatpush1.msra.mxu0 0.0
    %3806 = vmatprep.subr.mxu0 0.0
    %3807 = vmatpush1.msra.mxu0 0.0
    %3808 = vmatprep.subr.mxu0 0.0
    %3809 = vmatpush1.msra.mxu0 0.0
    %3810 = vmatprep.subr.mxu0 0.0
    %3811 = vmatpush1.msra.mxu0 0.0
    %3812 = vmatprep.subr.mxu0 0.0
    %3813 = vmatpush1.msra.mxu0 0.0
    %3814 = vmatprep.mubr.f32.mxu0 0.0
    %3815 = vmatmul.mubr.f32.gmra.mrb[0].mxu0 %v3677
    %v3816 = vpop.f32.mrb[0].mxu0
    %v3817 = vadd.f32 0.0, %v3816
    %v3818 = vpop.f32.mrb[0].mxu0
    %v3819 = vadd.f32 0.0, %v3818
    %3820 = vdwg.mxu0
    %3821 = vmatprep.subr.mxu0 %v408
    %3822 = vmatpush1.msra.mxu0 %v407
    %3823 = vmatprep.subr.mxu0 %v424
    %3824 = vmatpush1.msra.mxu0 %v423
    %3825 = vmatprep.subr.mxu0 %v440
    %3826 = vmatpush1.msra.mxu0 %v439
    %3827 = vmatprep.subr.mxu0 %v456
    %3828 = vmatpush1.msra.mxu0 %v455
    %3829 = vmatprep.subr.mxu0 %v472
    %3830 = vmatpush1.msra.mxu0 %v471
    %3831 = vmatprep.subr.mxu0 %v488
    %3832 = vmatpush1.msra.mxu0 %v487
    %3833 = vmatprep.subr.mxu0 %v504
    %3834 = vmatpush1.msra.mxu0 %v503
    %3835 = vmatprep.subr.mxu0 %v520
    %3836 = vmatpush1.msra.mxu0 %v519
    %3837 = vmatprep.subr.mxu0 0.0
    %3838 = vmatpush1.msra.mxu0 0.0
    %3839 = vmatprep.subr.mxu0 0.0
    %3840 = vmatpush1.msra.mxu0 0.0
    %3841 = vmatprep.subr.mxu0 0.0
    %3842 = vmatpush1.msra.mxu0 0.0
    %3843 = vmatprep.subr.mxu0 0.0
    %3844 = vmatpush1.msra.mxu0 0.0
    %3845 = vmatprep.subr.mxu0 0.0
    %3846 = vmatpush1.msra.mxu0 0.0
    %3847 = vmatprep.subr.mxu0 0.0
    %3848 = vmatpush1.msra.mxu0 0.0
    %3849 = vmatprep.subr.mxu0 0.0
    %3850 = vmatpush1.msra.mxu0 0.0
    %3851 = vmatprep.subr.mxu0 0.0
    %3852 = vmatpush1.msra.mxu0 0.0
    %3853 = vmatprep.subr.mxu0 0.0
    %3854 = vmatpush1.msra.mxu0 0.0
    %3855 = vmatprep.subr.mxu0 0.0
    %3856 = vmatpush1.msra.mxu0 0.0
    %3857 = vmatprep.subr.mxu0 0.0
    %3858 = vmatpush1.msra.mxu0 0.0
    %3859 = vmatprep.subr.mxu0 0.0
    %3860 = vmatpush1.msra.mxu0 0.0
    %3861 = vmatprep.subr.mxu0 0.0
    %3862 = vmatpush1.msra.mxu0 0.0
    %3863 = vmatprep.subr.mxu0 0.0
    %3864 = vmatpush1.msra.mxu0 0.0
    %3865 = vmatprep.subr.mxu0 0.0
    %3866 = vmatpush1.msra.mxu0 0.0
    %3867 = vmatprep.subr.mxu0 0.0
    %3868 = vmatpush1.msra.mxu0 0.0
    %3869 = vmatprep.subr.mxu0 0.0
    %3870 = vmatpush1.msra.mxu0 0.0
    %3871 = vmatprep.subr.mxu0 0.0
    %3872 = vmatpush1.msra.mxu0 0.0
    %3873 = vmatprep.subr.mxu0 0.0
    %3874 = vmatpush1.msra.mxu0 0.0
    %3875 = vmatprep.subr.mxu0 0.0
    %3876 = vmatpush1.msra.mxu0 0.0
    %3877 = vmatprep.subr.mxu0 0.0
    %3878 = vmatpush1.msra.mxu0 0.0
    %3879 = vmatprep.subr.mxu0 0.0
    %3880 = vmatpush1.msra.mxu0 0.0
    %3881 = vmatprep.subr.mxu0 0.0
    %3882 = vmatpush1.msra.mxu0 0.0
    %3883 = vmatprep.subr.mxu0 0.0
    %3884 = vmatpush1.msra.mxu0 0.0
    %3885 = vmatprep.mubr.f32.mxu0 0.0
    %3886 = vmatmul.mubr.f32.gmra.mrb[0].mxu0 %v3677
    %v3887 = vpop.f32.mrb[0].mxu0
    %v3888 = vadd.f32 0.0, %v3887
    %v3889 = vpop.f32.mrb[0].mxu0
    %v3890 = vadd.f32 0.0, %v3889
    %3891 = vdwg.mxu0
    %3892 = vmatprep.subr.mxu0 %v410
    %3893 = vmatpush1.msra.mxu0 %v409
    %3894 = vmatprep.subr.mxu0 %v426
    %3895 = vmatpush1.msra.mxu0 %v425
    %3896 = vmatprep.subr.mxu0 %v442
    %3897 = vmatpush1.msra.mxu0 %v441
    %3898 = vmatprep.subr.mxu0 %v458
    %3899 = vmatpush1.msra.mxu0 %v457
    %3900 = vmatprep.subr.mxu0 %v474
    %3901 = vmatpush1.msra.mxu0 %v473
    %3902 = vmatprep.subr.mxu0 %v490
    %3903 = vmatpush1.msra.mxu0 %v489
    %3904 = vmatprep.subr.mxu0 %v506
    %3905 = vmatpush1.msra.mxu0 %v505
    %3906 = vmatprep.subr.mxu0 %v522
    %3907 = vmatpush1.msra.mxu0 %v521
    %3908 = vmatprep.subr.mxu0 0.0
    %3909 = vmatpush1.msra.mxu0 0.0
    %3910 = vmatprep.subr.mxu0 0.0
    %3911 = vmatpush1.msra.mxu0 0.0
    %3912 = vmatprep.subr.mxu0 0.0
    %3913 = vmatpush1.msra.mxu0 0.0
    %3914 = vmatprep.subr.mxu0 0.0
    %3915 = vmatpush1.msra.mxu0 0.0
    %3916 = vmatprep.subr.mxu0 0.0
    %3917 = vmatpush1.msra.mxu0 0.0
    %3918 = vmatprep.subr.mxu0 0.0
    %3919 = vmatpush1.msra.mxu0 0.0
    %3920 = vmatprep.subr.mxu0 0.0
    %3921 = vmatpush1.msra.mxu0 0.0
    %3922 = vmatprep.subr.mxu0 0.0
    %3923 = vmatpush1.msra.mxu0 0.0
    %3924 = vmatprep.subr.mxu0 0.0
    %3925 = vmatpush1.msra.mxu0 0.0
    %3926 = vmatprep.subr.mxu0 0.0
    %3927 = vmatpush1.msra.mxu0 0.0
    %3928 = vmatprep.subr.mxu0 0.0
    %3929 = vmatpush1.msra.mxu0 0.0
    %3930 = vmatprep.subr.mxu0 0.0
    %3931 = vmatpush1.msra.mxu0 0.0
    %3932 = vmatprep.subr.mxu0 0.0
    %3933 = vmatpush1.msra.mxu0 0.0
    %3934 = vmatprep.subr.mxu0 0.0
    %3935 = vmatpush1.msra.mxu0 0.0
    %3936 = vmatprep.subr.mxu0 0.0
    %3937 = vmatpush1.msra.mxu0 0.0
    %3938 = vmatprep.subr.mxu0 0.0
    %3939 = vmatpush1.msra.mxu0 0.0
    %3940 = vmatprep.subr.mxu0 0.0
    %3941 = vmatpush1.msra.mxu0 0.0
    %3942 = vmatprep.subr.mxu0 0.0
    %3943 = vmatpush1.msra.mxu0 0.0
    %3944 = vmatprep.subr.mxu0 0.0
    %3945 = vmatpush1.msra.mxu0 0.0
    %3946 = vmatprep.subr.mxu0 0.0
    %3947 = vmatpush1.msra.mxu0 0.0
    %3948 = vmatprep.subr.mxu0 0.0
    %3949 = vmatpush1.msra.mxu0 0.0
    %3950 = vmatprep.subr.mxu0 0.0
    %3951 = vmatpush1.msra.mxu0 0.0
    %3952 = vmatprep.subr.mxu0 0.0
    %3953 = vmatpush1.msra.mxu0 0.0
    %3954 = vmatprep.subr.mxu0 0.0
    %3955 = vmatpush1.msra.mxu0 0.0
    %3956 = vmatprep.mubr.f32.mxu0 0.0
    %3957 = vmatmul.mubr.f32.gmra.mrb[0].mxu0 %v3677
    %v3958 = vpop.f32.mrb[0].mxu0
    %v3959 = vadd.f32 0.0, %v3958
    %v3960 = vpop.f32.mrb[0].mxu0
    %v3961 = vadd.f32 0.0, %v3960
    %3962 = vdwg.mxu0
    %3963 = vmatprep.subr.mxu0 %v412
    %3964 = vmatpush1.msra.mxu0 %v411
    %3965 = vmatprep.subr.mxu0 %v428
    %3966 = vmatpush1.msra.mxu0 %v427
    %3967 = vmatprep.subr.mxu0 %v444
    %3968 = vmatpush1.msra.mxu0 %v443
    %3969 = vmatprep.subr.mxu0 %v460
    %3970 = vmatpush1.msra.mxu0 %v459
    %3971 = vmatprep.subr.mxu0 %v476
    %3972 = vmatpush1.msra.mxu0 %v475
    %3973 = vmatprep.subr.mxu0 %v492
    %3974 = vmatpush1.msra.mxu0 %v491
    %3975 = vmatprep.subr.mxu0 %v508
    %3976 = vmatpush1.msra.mxu0 %v507
    %3977 = vmatprep.subr.mxu0 %v524
    %3978 = vmatpush1.msra.mxu0 %v523
    %3979 = vmatprep.subr.mxu0 0.0
    %3980 = vmatpush1.msra.mxu0 0.0
    %3981 = vmatprep.subr.mxu0 0.0
    %3982 = vmatpush1.msra.mxu0 0.0
    %3983 = vmatprep.subr.mxu0 0.0
    %3984 = vmatpush1.msra.mxu0 0.0
    %3985 = vmatprep.subr.mxu0 0.0
    %3986 = vmatpush1.msra.mxu0 0.0
    %3987 = vmatprep.subr.mxu0 0.0
    %3988 = vmatpush1.msra.mxu0 0.0
    %3989 = vmatprep.subr.mxu0 0.0
    %3990 = vmatpush1.msra.mxu0 0.0
    %3991 = vmatprep.subr.mxu0 0.0
    %3992 = vmatpush1.msra.mxu0 0.0
    %3993 = vmatprep.subr.mxu0 0.0
    %3994 = vmatpush1.msra.mxu0 0.0
    %3995 = vmatprep.subr.mxu0 0.0
    %3996 = vmatpush1.msra.mxu0 0.0
    %3997 = vmatprep.subr.mxu0 0.0
    %3998 = vmatpush1.msra.mxu0 0.0
    %3999 = vmatprep.subr.mxu0 0.0
    %4000 = vmatpush1.msra.mxu0 0.0
    %4001 = vmatprep.subr.mxu0 0.0
    %4002 = vmatpush1.msra.mxu0 0.0
    %4003 = vmatprep.subr.mxu0 0.0
    %4004 = vmatpush1.msra.mxu0 0.0
    %4005 = vmatprep.subr.mxu0 0.0
    %4006 = vmatpush1.msra.mxu0 0.0
    %4007 = vmatprep.subr.mxu0 0.0
    %4008 = vmatpush1.msra.mxu0 0.0
    %4009 = vmatprep.subr.mxu0 0.0
    %4010 = vmatpush1.msra.mxu0 0.0
    %4011 = vmatprep.subr.mxu0 0.0
    %4012 = vmatpush1.msra.mxu0 0.0
    %4013 = vmatprep.subr.mxu0 0.0
    %4014 = vmatpush1.msra.mxu0 0.0
    %4015 = vmatprep.subr.mxu0 0.0
    %4016 = vmatpush1.msra.mxu0 0.0
    %4017 = vmatprep.subr.mxu0 0.0
    %4018 = vmatpush1.msra.mxu0 0.0
    %4019 = vmatprep.subr.mxu0 0.0
    %4020 = vmatpush1.msra.mxu0 0.0
    %4021 = vmatprep.subr.mxu0 0.0
    %4022 = vmatpush1.msra.mxu0 0.0
    %4023 = vmatprep.subr.mxu0 0.0
    %4024 = vmatpush1.msra.mxu0 0.0
    %4025 = vmatprep.subr.mxu0 0.0
    %4026 = vmatpush1.msra.mxu0 0.0
    %4027 = vmatprep.mubr.f32.mxu0 0.0
    %4028 = vmatmul.mubr.f32.gmra.mrb[0].mxu0 %v3677
    %v4029 = vpop.f32.mrb[0].mxu0
    %v4030 = vadd.f32 0.0, %v4029
    %v4031 = vpop.f32.mrb[0].mxu0
    %v4032 = vadd.f32 0.0, %v4031
    %4033 = vdwg.mxu0
    %4034 = vmatprep.subr.mxu0 %v414
    %4035 = vmatpush1.msra.mxu0 %v413
    %4036 = vmatprep.subr.mxu0 %v430
    %4037 = vmatpush1.msra.mxu0 %v429
    %4038 = vmatprep.subr.mxu0 %v446
    %4039 = vmatpush1.msra.mxu0 %v445
    %4040 = vmatprep.subr.mxu0 %v462
    %4041 = vmatpush1.msra.mxu0 %v461
    %4042 = vmatprep.subr.mxu0 %v478
    %4043 = vmatpush1.msra.mxu0 %v477
    %4044 = vmatprep.subr.mxu0 %v494
    %4045 = vmatpush1.msra.mxu0 %v493
    %4046 = vmatprep.subr.mxu0 %v510
    %4047 = vmatpush1.msra.mxu0 %v509
    %4048 = vmatprep.subr.mxu0 %v526
    %4049 = vmatpush1.msra.mxu0 %v525
    %4050 = vmatprep.subr.mxu0 0.0
    %4051 = vmatpush1.msra.mxu0 0.0
    %4052 = vmatprep.subr.mxu0 0.0
    %4053 = vmatpush1.msra.mxu0 0.0
    %4054 = vmatprep.subr.mxu0 0.0
    %4055 = vmatpush1.msra.mxu0 0.0
    %4056 = vmatprep.subr.mxu0 0.0
    %4057 = vmatpush1.msra.mxu0 0.0
    %4058 = vmatprep.subr.mxu0 0.0
    %4059 = vmatpush1.msra.mxu0 0.0
    %4060 = vmatprep.subr.mxu0 0.0
    %4061 = vmatpush1.msra.mxu0 0.0
    %4062 = vmatprep.subr.mxu0 0.0
    %4063 = vmatpush1.msra.mxu0 0.0
    %4064 = vmatprep.subr.mxu0 0.0
    %4065 = vmatpush1.msra.mxu0 0.0
    %4066 = vmatprep.subr.mxu0 0.0
    %4067 = vmatpush1.msra.mxu0 0.0
    %4068 = vmatprep.subr.mxu0 0.0
    %4069 = vmatpush1.msra.mxu0 0.0
    %4070 = vmatprep.subr.mxu0 0.0
    %4071 = vmatpush1.msra.mxu0 0.0
    %4072 = vmatprep.subr.mxu0 0.0
    %4073 = vmatpush1.msra.mxu0 0.0
    %4074 = vmatprep.subr.mxu0 0.0
    %4075 = vmatpush1.msra.mxu0 0.0
    %4076 = vmatprep.subr.mxu0 0.0
    %4077 = vmatpush1.msra.mxu0 0.0
    %4078 = vmatprep.subr.mxu0 0.0
    %4079 = vmatpush1.msra.mxu0 0.0
    %4080 = vmatprep.subr.mxu0 0.0
    %4081 = vmatpush1.msra.mxu0 0.0
    %4082 = vmatprep.subr.mxu0 0.0
    %4083 = vmatpush1.msra.mxu0 0.0
    %4084 = vmatprep.subr.mxu0 0.0
    %4085 = vmatpush1.msra.mxu0 0.0
    %4086 = vmatprep.subr.mxu0 0.0
    %4087 = vmatpush1.msra.mxu0 0.0
    %4088 = vmatprep.subr.mxu0 0.0
    %4089 = vmatpush1.msra.mxu0 0.0
    %4090 = vmatprep.subr.mxu0 0.0
    %4091 = vmatpush1.msra.mxu0 0.0
    %4092 = vmatprep.subr.mxu0 0.0
    %4093 = vmatpush1.msra.mxu0 0.0
    %4094 = vmatprep.subr.mxu0 0.0
    %4095 = vmatpush1.msra.mxu0 0.0
    %4096 = vmatprep.subr.mxu0 0.0
    %4097 = vmatpush1.msra.mxu0 0.0
    %4098 = vmatprep.mubr.f32.mxu0 0.0
    %4099 = vmatmul.mubr.f32.gmra.mrb[0].mxu0 %v3677
    %v4100 = vpop.f32.mrb[0].mxu0
    %v4101 = vadd.f32 0.0, %v4100
    %v4102 = vpop.f32.mrb[0].mxu0
    %v4103 = vadd.f32 0.0, %v4102
    %4104 = vdwg.mxu0
    %4105 = vmatprep.subr.mxu0 %v416
    %4106 = vmatpush1.msra.mxu0 %v415
    %4107 = vmatprep.subr.mxu0 %v432
    %4108 = vmatpush1.msra.mxu0 %v431
    %4109 = vmatprep.subr.mxu0 %v448
    %4110 = vmatpush1.msra.mxu0 %v447
    %4111 = vmatprep.subr.mxu0 %v464
    %4112 = vmatpush1.msra.mxu0 %v463
    %4113 = vmatprep.subr.mxu0 %v480
    %4114 = vmatpush1.msra.mxu0 %v479
    %4115 = vmatprep.subr.mxu0 %v496
    %4116 = vmatpush1.msra.mxu0 %v495
    %4117 = vmatprep.subr.mxu0 %v512
    %4118 = vmatpush1.msra.mxu0 %v511
    %4119 = vmatprep.subr.mxu0 %v528
    %4120 = vmatpush1.msra.mxu0 %v527
    %4121 = vmatprep.subr.mxu0 0.0
    %4122 = vmatpush1.msra.mxu0 0.0
    %4123 = vmatprep.subr.mxu0 0.0
    %4124 = vmatpush1.msra.mxu0 0.0
    %4125 = vmatprep.subr.mxu0 0.0
    %4126 = vmatpush1.msra.mxu0 0.0
    %4127 = vmatprep.subr.mxu0 0.0
    %4128 = vmatpush1.msra.mxu0 0.0
    %4129 = vmatprep.subr.mxu0 0.0
    %4130 = vmatpush1.msra.mxu0 0.0
    %4131 = vmatprep.subr.mxu0 0.0
    %4132 = vmatpush1.msra.mxu0 0.0
    %4133 = vmatprep.subr.mxu0 0.0
    %4134 = vmatpush1.msra.mxu0 0.0
    %4135 = vmatprep.subr.mxu0 0.0
    %4136 = vmatpush1.msra.mxu0 0.0
    %4137 = vmatprep.subr.mxu0 0.0
    %4138 = vmatpush1.msra.mxu0 0.0
    %4139 = vmatprep.subr.mxu0 0.0
    %4140 = vmatpush1.msra.mxu0 0.0
    %4141 = vmatprep.subr.mxu0 0.0
    %4142 = vmatpush1.msra.mxu0 0.0
    %4143 = vmatprep.subr.mxu0 0.0
    %4144 = vmatpush1.msra.mxu0 0.0
    %4145 = vmatprep.subr.mxu0 0.0
    %4146 = vmatpush1.msra.mxu0 0.0
    %4147 = vmatprep.subr.mxu0 0.0
    %4148 = vmatpush1.msra.mxu0 0.0
    %4149 = vmatprep.subr.mxu0 0.0
    %4150 = vmatpush1.msra.mxu0 0.0
    %4151 = vmatprep.subr.mxu0 0.0
    %4152 = vmatpush1.msra.mxu0 0.0
    %4153 = vmatprep.subr.mxu0 0.0
    %4154 = vmatpush1.msra.mxu0 0.0
    %4155 = vmatprep.subr.mxu0 0.0
    %4156 = vmatpush1.msra.mxu0 0.0
    %4157 = vmatprep.subr.mxu0 0.0
    %4158 = vmatpush1.msra.mxu0 0.0
    %4159 = vmatprep.subr.mxu0 0.0
    %4160 = vmatpush1.msra.mxu0 0.0
    %4161 = vmatprep.subr.mxu0 0.0
    %4162 = vmatpush1.msra.mxu0 0.0
    %4163 = vmatprep.subr.mxu0 0.0
    %4164 = vmatpush1.msra.mxu0 0.0
    %4165 = vmatprep.subr.mxu0 0.0
    %4166 = vmatpush1.msra.mxu0 0.0
    %4167 = vmatprep.subr.mxu0 0.0
    %4168 = vmatpush1.msra.mxu0 0.0
    %4169 = vmatprep.mubr.f32.mxu0 0.0
    %4170 = vmatmul.mubr.f32.gmra.mrb[0].mxu0 %v3677
    %v4171 = vpop.f32.mrb[0].mxu0
    %v4172 = vadd.f32 0.0, %v4171
    %v4173 = vpop.f32.mrb[0].mxu0
    %v4174 = vadd.f32 0.0, %v4173
    %4175 = vdwg.mxu0
    %4176 = vmatprep.subr.mxu0 %v418
    %4177 = vmatpush1.msra.mxu0 %v417
    %4178 = vmatprep.subr.mxu0 %v434
    %4179 = vmatpush1.msra.mxu0 %v433
    %4180 = vmatprep.subr.mxu0 %v450
    %4181 = vmatpush1.msra.mxu0 %v449
    %4182 = vmatprep.subr.mxu0 %v466
    %4183 = vmatpush1.msra.mxu0 %v465
    %4184 = vmatprep.subr.mxu0 %v482
    %4185 = vmatpush1.msra.mxu0 %v481
    %4186 = vmatprep.subr.mxu0 %v498
    %4187 = vmatpush1.msra.mxu0 %v497
    %4188 = vmatprep.subr.mxu0 %v514
    %4189 = vmatpush1.msra.mxu0 %v513
    %4190 = vmatprep.subr.mxu0 %v530
    %4191 = vmatpush1.msra.mxu0 %v529
    %4192 = vmatprep.subr.mxu0 0.0
    %4193 = vmatpush1.msra.mxu0 0.0
    %4194 = vmatprep.subr.mxu0 0.0
    %4195 = vmatpush1.msra.mxu0 0.0
    %4196 = vmatprep.subr.mxu0 0.0
    %4197 = vmatpush1.msra.mxu0 0.0
    %4198 = vmatprep.subr.mxu0 0.0
    %4199 = vmatpush1.msra.mxu0 0.0
    %4200 = vmatprep.subr.mxu0 0.0
    %4201 = vmatpush1.msra.mxu0 0.0
    %4202 = vmatprep.subr.mxu0 0.0
    %4203 = vmatpush1.msra.mxu0 0.0
    %4204 = vmatprep.subr.mxu0 0.0
    %4205 = vmatpush1.msra.mxu0 0.0
    %4206 = vmatprep.subr.mxu0 0.0
    %4207 = vmatpush1.msra.mxu0 0.0
    %4208 = vmatprep.subr.mxu0 0.0
    %4209 = vmatpush1.msra.mxu0 0.0
    %4210 = vmatprep.subr.mxu0 0.0
    %4211 = vmatpush1.msra.mxu0 0.0
    %4212 = vmatprep.subr.mxu0 0.0
    %4213 = vmatpush1.msra.mxu0 0.0
    %4214 = vmatprep.subr.mxu0 0.0
    %4215 = vmatpush1.msra.mxu0 0.0
    %4216 = vmatprep.subr.mxu0 0.0
    %4217 = vmatpush1.msra.mxu0 0.0
    %4218 = vmatprep.subr.mxu0 0.0
    %4219 = vmatpush1.msra.mxu0 0.0
    %4220 = vmatprep.subr.mxu0 0.0
    %4221 = vmatpush1.msra.mxu0 0.0
    %4222 = vmatprep.subr.mxu0 0.0
    %4223 = vmatpush1.msra.mxu0 0.0
    %4224 = vmatprep.subr.mxu0 0.0
    %4225 = vmatpush1.msra.mxu0 0.0
    %4226 = vmatprep.subr.mxu0 0.0
    %4227 = vmatpush1.msra.mxu0 0.0
    %4228 = vmatprep.subr.mxu0 0.0
    %4229 = vmatpush1.msra.mxu0 0.0
    %4230 = vmatprep.subr.mxu0 0.0
    %4231 = vmatpush1.msra.mxu0 0.0
    %4232 = vmatprep.subr.mxu0 0.0
    %4233 = vmatpush1.msra.mxu0 0.0
    %4234 = vmatprep.subr.mxu0 0.0
    %4235 = vmatpush1.msra.mxu0 0.0
    %4236 = vmatprep.subr.mxu0 0.0
    %4237 = vmatpush1.msra.mxu0 0.0
    %4238 = vmatprep.subr.mxu0 0.0
    %4239 = vmatpush1.msra.mxu0 0.0
    %4240 = vmatprep.mubr.f32.mxu0 0.0
    %4241 = vmatmul.mubr.f32.gmra.mrb[0].mxu0 %v3677
    %v4242 = vpop.f32.mrb[0].mxu0
    %v4243 = vadd.f32 0.0, %v4242
    %v4244 = vpop.f32.mrb[0].mxu0
    %v4245 = vadd.f32 0.0, %v4244
    %4246 = vdwg.mxu0
    %v4248 = vsel %vm787, %v3092, 0
    %4250 = vmatprep.subr.mxu0 %v84
    %4251 = vmatpush1.msra.mxu0 %v83
    %4252 = vmatprep.subr.mxu0 %v100
    %4253 = vmatpush1.msra.mxu0 %v99
    %4254 = vmatprep.subr.mxu0 %v116
    %4255 = vmatpush1.msra.mxu0 %v115
    %4256 = vmatprep.subr.mxu0 %v132
    %4257 = vmatpush1.msra.mxu0 %v131
    %4258 = vmatprep.subr.mxu0 0.0
    %4259 = vmatpush1.msra.mxu0 0.0
    %4260 = vmatprep.subr.mxu0 0.0
    %4261 = vmatpush1.msra.mxu0 0.0
    %4262 = vmatprep.subr.mxu0 0.0
    %4263 = vmatpush1.msra.mxu0 0.0
    %4264 = vmatprep.subr.mxu0 0.0
    %4265 = vmatpush1.msra.mxu0 0.0
    %4266 = vmatprep.subr.mxu0 0.0
    %4267 = vmatpush1.msra.mxu0 0.0
    %4268 = vmatprep.subr.mxu0 0.0
    %4269 = vmatpush1.msra.mxu0 0.0
    %4270 = vmatprep.subr.mxu0 0.0
    %4271 = vmatpush1.msra.mxu0 0.0
    %4272 = vmatprep.subr.mxu0 0.0
    %4273 = vmatpush1.msra.mxu0 0.0
    %4274 = vmatprep.subr.mxu0 0.0
    %4275 = vmatpush1.msra.mxu0 0.0
    %4276 = vmatprep.subr.mxu0 0.0
    %4277 = vmatpush1.msra.mxu0 0.0
    %4278 = vmatprep.subr.mxu0 0.0
    %4279 = vmatpush1.msra.mxu0 0.0
    %4280 = vmatprep.subr.mxu0 0.0
    %4281 = vmatpush1.msra.mxu0 0.0
    %4282 = vmatprep.subr.mxu0 0.0
    %4283 = vmatpush1.msra.mxu0 0.0
    %4284 = vmatprep.subr.mxu0 0.0
    %4285 = vmatpush1.msra.mxu0 0.0
    %4286 = vmatprep.subr.mxu0 0.0
    %4287 = vmatpush1.msra.mxu0 0.0
    %4288 = vmatprep.subr.mxu0 0.0
    %4289 = vmatpush1.msra.mxu0 0.0
    %4290 = vmatprep.subr.mxu0 0.0
    %4291 = vmatpush1.msra.mxu0 0.0
    %4292 = vmatprep.subr.mxu0 0.0
    %4293 = vmatpush1.msra.mxu0 0.0
    %4294 = vmatprep.subr.mxu0 0.0
    %4295 = vmatpush1.msra.mxu0 0.0
    %4296 = vmatprep.subr.mxu0 0.0
    %4297 = vmatpush1.msra.mxu0 0.0
    %4298 = vmatprep.subr.mxu0 0.0
    %4299 = vmatpush1.msra.mxu0 0.0
    %4300 = vmatprep.subr.mxu0 0.0
    %4301 = vmatpush1.msra.mxu0 0.0
    %4302 = vmatprep.subr.mxu0 0.0
    %4303 = vmatpush1.msra.mxu0 0.0
    %4304 = vmatprep.subr.mxu0 0.0
    %4305 = vmatpush1.msra.mxu0 0.0
    %4306 = vmatprep.subr.mxu0 0.0
    %4307 = vmatpush1.msra.mxu0 0.0
    %4308 = vmatprep.subr.mxu0 0.0
    %4309 = vmatpush1.msra.mxu0 0.0
    %4310 = vmatprep.subr.mxu0 0.0
    %4311 = vmatpush1.msra.mxu0 0.0
    %4312 = vmatprep.subr.mxu0 0.0
    %4313 = vmatpush1.msra.mxu0 0.0
    %4314 = vmatprep.mubr.f32.mxu0 0.0
    %4315 = vmatmul.mubr.f32.gmra.mrb[0].mxu0 %v4248
    %v4316 = vpop.f32.mrb[0].mxu0
    %v4317 = vadd.f32 0.0, %v4316
    %v4318 = vpop.f32.mrb[0].mxu0
    %v4319 = vadd.f32 0.0, %v4318
    %4320 = vdwg.mxu0
    %4321 = vmatprep.subr.mxu0 %v86
    %4322 = vmatpush1.msra.mxu0 %v85
    %4323 = vmatprep.subr.mxu0 %v102
    %4324 = vmatpush1.msra.mxu0 %v101
    %4325 = vmatprep.subr.mxu0 %v118
    %4326 = vmatpush1.msra.mxu0 %v117
    %4327 = vmatprep.subr.mxu0 %v134
    %4328 = vmatpush1.msra.mxu0 %v133
    %4329 = vmatprep.subr.mxu0 0.0
    %4330 = vmatpush1.msra.mxu0 0.0
    %4331 = vmatprep.subr.mxu0 0.0
    %4332 = vmatpush1.msra.mxu0 0.0
    %4333 = vmatprep.subr.mxu0 0.0
    %4334 = vmatpush1.msra.mxu0 0.0
    %4335 = vmatprep.subr.mxu0 0.0
    %4336 = vmatpush1.msra.mxu0 0.0
    %4337 = vmatprep.subr.mxu0 0.0
    %4338 = vmatpush1.msra.mxu0 0.0
    %4339 = vmatprep.subr.mxu0 0.0
    %4340 = vmatpush1.msra.mxu0 0.0
    %4341 = vmatprep.subr.mxu0 0.0
    %4342 = vmatpush1.msra.mxu0 0.0
    %4343 = vmatprep.subr.mxu0 0.0
    %4344 = vmatpush1.msra.mxu0 0.0
    %4345 = vmatprep.subr.mxu0 0.0
    %4346 = vmatpush1.msra.mxu0 0.0
    %4347 = vmatprep.subr.mxu0 0.0
    %4348 = vmatpush1.msra.mxu0 0.0
    %4349 = vmatprep.subr.mxu0 0.0
    %4350 = vmatpush1.msra.mxu0 0.0
    %4351 = vmatprep.subr.mxu0 0.0
    %4352 = vmatpush1.msra.mxu0 0.0
    %4353 = vmatprep.subr.mxu0 0.0
    %4354 = vmatpush1.msra.mxu0 0.0
    %4355 = vmatprep.subr.mxu0 0.0
    %4356 = vmatpush1.msra.mxu0 0.0
    %4357 = vmatprep.subr.mxu0 0.0
    %4358 = vmatpush1.msra.mxu0 0.0
    %4359 = vmatprep.subr.mxu0 0.0
    %4360 = vmatpush1.msra.mxu0 0.0
    %4361 = vmatprep.subr.mxu0 0.0
    %4362 = vmatpush1.msra.mxu0 0.0
    %4363 = vmatprep.subr.mxu0 0.0
    %4364 = vmatpush1.msra.mxu0 0.0
    %4365 = vmatprep.subr.mxu0 0.0
    %4366 = vmatpush1.msra.mxu0 0.0
    %4367 = vmatprep.subr.mxu0 0.0
    %4368 = vmatpush1.msra.mxu0 0.0
    %4369 = vmatprep.subr.mxu0 0.0
    %4370 = vmatpush1.msra.mxu0 0.0
    %4371 = vmatprep.subr.mxu0 0.0
    %4372 = vmatpush1.msra.mxu0 0.0
    %4373 = vmatprep.subr.mxu0 0.0
    %4374 = vmatpush1.msra.mxu0 0.0
    %4375 = vmatprep.subr.mxu0 0.0
    %4376 = vmatpush1.msra.mxu0 0.0
    %4377 = vmatprep.subr.mxu0 0.0
    %4378 = vmatpush1.msra.mxu0 0.0
    %4379 = vmatprep.subr.mxu0 0.0
    %4380 = vmatpush1.msra.mxu0 0.0
    %4381 = vmatprep.subr.mxu0 0.0
    %4382 = vmatpush1.msra.mxu0 0.0
    %4383 = vmatprep.subr.mxu0 0.0
    %4384 = vmatpush1.msra.mxu0 0.0
    %4385 = vmatprep.mubr.f32.mxu0 0.0
    %4386 = vmatmul.mubr.f32.gmra.mrb[0].mxu0 %v4248
    %v4387 = vpop.f32.mrb[0].mxu0
    %v4388 = vadd.f32 0.0, %v4387
    %v4389 = vpop.f32.mrb[0].mxu0
    %v4390 = vadd.f32 0.0, %v4389
    %4391 = vdwg.mxu0
    %4392 = vmatprep.subr.mxu0 %v88
    %4393 = vmatpush1.msra.mxu0 %v87
    %4394 = vmatprep.subr.mxu0 %v104
    %4395 = vmatpush1.msra.mxu0 %v103
    %4396 = vmatprep.subr.mxu0 %v120
    %4397 = vmatpush1.msra.mxu0 %v119
    %4398 = vmatprep.subr.mxu0 %v136
    %4399 = vmatpush1.msra.mxu0 %v135
    %4400 = vmatprep.subr.mxu0 0.0
    %4401 = vmatpush1.msra.mxu0 0.0
    %4402 = vmatprep.subr.mxu0 0.0
    %4403 = vmatpush1.msra.mxu0 0.0
    %4404 = vmatprep.subr.mxu0 0.0
    %4405 = vmatpush1.msra.mxu0 0.0
    %4406 = vmatprep.subr.mxu0 0.0
    %4407 = vmatpush1.msra.mxu0 0.0
    %4408 = vmatprep.subr.mxu0 0.0
    %4409 = vmatpush1.msra.mxu0 0.0
    %4410 = vmatprep.subr.mxu0 0.0
    %4411 = vmatpush1.msra.mxu0 0.0
    %4412 = vmatprep.subr.mxu0 0.0
    %4413 = vmatpush1.msra.mxu0 0.0
    %4414 = vmatprep.subr.mxu0 0.0
    %4415 = vmatpush1.msra.mxu0 0.0
    %4416 = vmatprep.subr.mxu0 0.0
    %4417 = vmatpush1.msra.mxu0 0.0
    %4418 = vmatprep.subr.mxu0 0.0
    %4419 = vmatpush1.msra.mxu0 0.0
    %4420 = vmatprep.subr.mxu0 0.0
    %4421 = vmatpush1.msra.mxu0 0.0
    %4422 = vmatprep.subr.mxu0 0.0
    %4423 = vmatpush1.msra.mxu0 0.0
    %4424 = vmatprep.subr.mxu0 0.0
    %4425 = vmatpush1.msra.mxu0 0.0
    %4426 = vmatprep.subr.mxu0 0.0
    %4427 = vmatpush1.msra.mxu0 0.0
    %4428 = vmatprep.subr.mxu0 0.0
    %4429 = vmatpush1.msra.mxu0 0.0
    %4430 = vmatprep.subr.mxu0 0.0
    %4431 = vmatpush1.msra.mxu0 0.0
    %4432 = vmatprep.subr.mxu0 0.0
    %4433 = vmatpush1.msra.mxu0 0.0
    %4434 = vmatprep.subr.mxu0 0.0
    %4435 = vmatpush1.msra.mxu0 0.0
    %4436 = vmatprep.subr.mxu0 0.0
    %4437 = vmatpush1.msra.mxu0 0.0
    %4438 = vmatprep.subr.mxu0 0.0
    %4439 = vmatpush1.msra.mxu0 0.0
    %4440 = vmatprep.subr.mxu0 0.0
    %4441 = vmatpush1.msra.mxu0 0.0
    %4442 = vmatprep.subr.mxu0 0.0
    %4443 = vmatpush1.msra.mxu0 0.0
    %4444 = vmatprep.subr.mxu0 0.0
    %4445 = vmatpush1.msra.mxu0 0.0
    %4446 = vmatprep.subr.mxu0 0.0
    %4447 = vmatpush1.msra.mxu0 0.0
    %4448 = vmatprep.subr.mxu0 0.0
    %4449 = vmatpush1.msra.mxu0 0.0
    %4450 = vmatprep.subr.mxu0 0.0
    %4451 = vmatpush1.msra.mxu0 0.0
    %4452 = vmatprep.subr.mxu0 0.0
    %4453 = vmatpush1.msra.mxu0 0.0
    %4454 = vmatprep.subr.mxu0 0.0
    %4455 = vmatpush1.msra.mxu0 0.0
    %4456 = vmatprep.mubr.f32.mxu0 0.0
    %4457 = vmatmul.mubr.f32.gmra.mrb[0].mxu0 %v4248
    %v4458 = vpop.f32.mrb[0].mxu0
    %v4459 = vadd.f32 0.0, %v4458
    %v4460 = vpop.f32.mrb[0].mxu0
    %v4461 = vadd.f32 0.0, %v4460
    %4462 = vdwg.mxu0
    %4463 = vmatprep.subr.mxu0 %v90
    %4464 = vmatpush1.msra.mxu0 %v89
    %4465 = vmatprep.subr.mxu0 %v106
    %4466 = vmatpush1.msra.mxu0 %v105
    %4467 = vmatprep.subr.mxu0 %v122
    %4468 = vmatpush1.msra.mxu0 %v121
    %4469 = vmatprep.subr.mxu0 %v138
    %4470 = vmatpush1.msra.mxu0 %v137
    %4471 = vmatprep.subr.mxu0 0.0
    %4472 = vmatpush1.msra.mxu0 0.0
    %4473 = vmatprep.subr.mxu0 0.0
    %4474 = vmatpush1.msra.mxu0 0.0
    %4475 = vmatprep.subr.mxu0 0.0
    %4476 = vmatpush1.msra.mxu0 0.0
    %4477 = vmatprep.subr.mxu0 0.0
    %4478 = vmatpush1.msra.mxu0 0.0
    %4479 = vmatprep.subr.mxu0 0.0
    %4480 = vmatpush1.msra.mxu0 0.0
    %4481 = vmatprep.subr.mxu0 0.0
    %4482 = vmatpush1.msra.mxu0 0.0
    %4483 = vmatprep.subr.mxu0 0.0
    %4484 = vmatpush1.msra.mxu0 0.0
    %4485 = vmatprep.subr.mxu0 0.0
    %4486 = vmatpush1.msra.mxu0 0.0
    %4487 = vmatprep.subr.mxu0 0.0
    %4488 = vmatpush1.msra.mxu0 0.0
    %4489 = vmatprep.subr.mxu0 0.0
    %4490 = vmatpush1.msra.mxu0 0.0
    %4491 = vmatprep.subr.mxu0 0.0
    %4492 = vmatpush1.msra.mxu0 0.0
    %4493 = vmatprep.subr.mxu0 0.0
    %4494 = vmatpush1.msra.mxu0 0.0
    %4495 = vmatprep.subr.mxu0 0.0
    %4496 = vmatpush1.msra.mxu0 0.0
    %4497 = vmatprep.subr.mxu0 0.0
    %4498 = vmatpush1.msra.mxu0 0.0
    %4499 = vmatprep.subr.mxu0 0.0
    %4500 = vmatpush1.msra.mxu0 0.0
    %4501 = vmatprep.subr.mxu0 0.0
    %4502 = vmatpush1.msra.mxu0 0.0
    %4503 = vmatprep.subr.mxu0 0.0
    %4504 = vmatpush1.msra.mxu0 0.0
    %4505 = vmatprep.subr.mxu0 0.0
    %4506 = vmatpush1.msra.mxu0 0.0
    %4507 = vmatprep.subr.mxu0 0.0
    %4508 = vmatpush1.msra.mxu0 0.0
    %4509 = vmatprep.subr.mxu0 0.0
    %4510 = vmatpush1.msra.mxu0 0.0
    %4511 = vmatprep.subr.mxu0 0.0
    %4512 = vmatpush1.msra.mxu0 0.0
    %4513 = vmatprep.subr.mxu0 0.0
    %4514 = vmatpush1.msra.mxu0 0.0
    %4515 = vmatprep.subr.mxu0 0.0
    %4516 = vmatpush1.msra.mxu0 0.0
    %4517 = vmatprep.subr.mxu0 0.0
    %4518 = vmatpush1.msra.mxu0 0.0
    %4519 = vmatprep.subr.mxu0 0.0
    %4520 = vmatpush1.msra.mxu0 0.0
    %4521 = vmatprep.subr.mxu0 0.0
    %4522 = vmatpush1.msra.mxu0 0.0
    %4523 = vmatprep.subr.mxu0 0.0
    %4524 = vmatpush1.msra.mxu0 0.0
    %4525 = vmatprep.subr.mxu0 0.0
    %4526 = vmatpush1.msra.mxu0 0.0
    %4527 = vmatprep.mubr.f32.mxu0 0.0
    %4528 = vmatmul.mubr.f32.gmra.mrb[0].mxu0 %v4248
    %v4529 = vpop.f32.mrb[0].mxu0
    %v4530 = vadd.f32 0.0, %v4529
    %v4531 = vpop.f32.mrb[0].mxu0
    %v4532 = vadd.f32 0.0, %v4531
    %4533 = vdwg.mxu0
    %4534 = vmatprep.subr.mxu0 %v92
    %4535 = vmatpush1.msra.mxu0 %v91
    %4536 = vmatprep.subr.mxu0 %v108
    %4537 = vmatpush1.msra.mxu0 %v107
    %4538 = vmatprep.subr.mxu0 %v124
    %4539 = vmatpush1.msra.mxu0 %v123
    %4540 = vmatprep.subr.mxu0 %v140
    %4541 = vmatpush1.msra.mxu0 %v139
    %4542 = vmatprep.subr.mxu0 0.0
    %4543 = vmatpush1.msra.mxu0 0.0
    %4544 = vmatprep.subr.mxu0 0.0
    %4545 = vmatpush1.msra.mxu0 0.0
    %4546 = vmatprep.subr.mxu0 0.0
    %4547 = vmatpush1.msra.mxu0 0.0
    %4548 = vmatprep.subr.mxu0 0.0
    %4549 = vmatpush1.msra.mxu0 0.0
    %4550 = vmatprep.subr.mxu0 0.0
    %4551 = vmatpush1.msra.mxu0 0.0
    %4552 = vmatprep.subr.mxu0 0.0
    %4553 = vmatpush1.msra.mxu0 0.0
    %4554 = vmatprep.subr.mxu0 0.0
    %4555 = vmatpush1.msra.mxu0 0.0
    %4556 = vmatprep.subr.mxu0 0.0
    %4557 = vmatpush1.msra.mxu0 0.0
    %4558 = vmatprep.subr.mxu0 0.0
    %4559 = vmatpush1.msra.mxu0 0.0
    %4560 = vmatprep.subr.mxu0 0.0
    %4561 = vmatpush1.msra.mxu0 0.0
    %4562 = vmatprep.subr.mxu0 0.0
    %4563 = vmatpush1.msra.mxu0 0.0
    %4564 = vmatprep.subr.mxu0 0.0
    %4565 = vmatpush1.msra.mxu0 0.0
    %4566 = vmatprep.subr.mxu0 0.0
    %4567 = vmatpush1.msra.mxu0 0.0
    %4568 = vmatprep.subr.mxu0 0.0
    %4569 = vmatpush1.msra.mxu0 0.0
    %4570 = vmatprep.subr.mxu0 0.0
    %4571 = vmatpush1.msra.mxu0 0.0
    %4572 = vmatprep.subr.mxu0 0.0
    %4573 = vmatpush1.msra.mxu0 0.0
    %4574 = vmatprep.subr.mxu0 0.0
    %4575 = vmatpush1.msra.mxu0 0.0
    %4576 = vmatprep.subr.mxu0 0.0
    %4577 = vmatpush1.msra.mxu0 0.0
    %4578 = vmatprep.subr.mxu0 0.0
    %4579 = vmatpush1.msra.mxu0 0.0
    %4580 = vmatprep.subr.mxu0 0.0
    %4581 = vmatpush1.msra.mxu0 0.0
    %4582 = vmatprep.subr.mxu0 0.0
    %4583 = vmatpush1.msra.mxu0 0.0
    %4584 = vmatprep.subr.mxu0 0.0
    %4585 = vmatpush1.msra.mxu0 0.0
    %4586 = vmatprep.subr.mxu0 0.0
    %4587 = vmatpush1.msra.mxu0 0.0
    %4588 = vmatprep.subr.mxu0 0.0
    %4589 = vmatpush1.msra.mxu0 0.0
    %4590 = vmatprep.subr.mxu0 0.0
    %4591 = vmatpush1.msra.mxu0 0.0
    %4592 = vmatprep.subr.mxu0 0.0
    %4593 = vmatpush1.msra.mxu0 0.0
    %4594 = vmatprep.subr.mxu0 0.0
    %4595 = vmatpush1.msra.mxu0 0.0
    %4596 = vmatprep.subr.mxu0 0.0
    %4597 = vmatpush1.msra.mxu0 0.0
    %4598 = vmatprep.mubr.f32.mxu0 0.0
    %4599 = vmatmul.mubr.f32.gmra.mrb[0].mxu0 %v4248
    %v4600 = vpop.f32.mrb[0].mxu0
    %v4601 = vadd.f32 0.0, %v4600
    %v4602 = vpop.f32.mrb[0].mxu0
    %v4603 = vadd.f32 0.0, %v4602
    %4604 = vdwg.mxu0
    %4605 = vmatprep.subr.mxu0 %v94
    %4606 = vmatpush1.msra.mxu0 %v93
    %4607 = vmatprep.subr.mxu0 %v110
    %4608 = vmatpush1.msra.mxu0 %v109
    %4609 = vmatprep.subr.mxu0 %v126
    %4610 = vmatpush1.msra.mxu0 %v125
    %4611 = vmatprep.subr.mxu0 %v142
    %4612 = vmatpush1.msra.mxu0 %v141
    %4613 = vmatprep.subr.mxu0 0.0
    %4614 = vmatpush1.msra.mxu0 0.0
    %4615 = vmatprep.subr.mxu0 0.0
    %4616 = vmatpush1.msra.mxu0 0.0
    %4617 = vmatprep.subr.mxu0 0.0
    %4618 = vmatpush1.msra.mxu0 0.0
    %4619 = vmatprep.subr.mxu0 0.0
    %4620 = vmatpush1.msra.mxu0 0.0
    %4621 = vmatprep.subr.mxu0 0.0
    %4622 = vmatpush1.msra.mxu0 0.0
    %4623 = vmatprep.subr.mxu0 0.0
    %4624 = vmatpush1.msra.mxu0 0.0
    %4625 = vmatprep.subr.mxu0 0.0
    %4626 = vmatpush1.msra.mxu0 0.0
    %4627 = vmatprep.subr.mxu0 0.0
    %4628 = vmatpush1.msra.mxu0 0.0
    %4629 = vmatprep.subr.mxu0 0.0
    %4630 = vmatpush1.msra.mxu0 0.0
    %4631 = vmatprep.subr.mxu0 0.0
    %4632 = vmatpush1.msra.mxu0 0.0
    %4633 = vmatprep.subr.mxu0 0.0
    %4634 = vmatpush1.msra.mxu0 0.0
    %4635 = vmatprep.subr.mxu0 0.0
    %4636 = vmatpush1.msra.mxu0 0.0
    %4637 = vmatprep.subr.mxu0 0.0
    %4638 = vmatpush1.msra.mxu0 0.0
    %4639 = vmatprep.subr.mxu0 0.0
    %4640 = vmatpush1.msra.mxu0 0.0
    %4641 = vmatprep.subr.mxu0 0.0
    %4642 = vmatpush1.msra.mxu0 0.0
    %4643 = vmatprep.subr.mxu0 0.0
    %4644 = vmatpush1.msra.mxu0 0.0
    %4645 = vmatprep.subr.mxu0 0.0
    %4646 = vmatpush1.msra.mxu0 0.0
    %4647 = vmatprep.subr.mxu0 0.0
    %4648 = vmatpush1.msra.mxu0 0.0
    %4649 = vmatprep.subr.mxu0 0.0
    %4650 = vmatpush1.msra.mxu0 0.0
    %4651 = vmatprep.subr.mxu0 0.0
    %4652 = vmatpush1.msra.mxu0 0.0
    %4653 = vmatprep.subr.mxu0 0.0
    %4654 = vmatpush1.msra.mxu0 0.0
    %4655 = vmatprep.subr.mxu0 0.0
    %4656 = vmatpush1.msra.mxu0 0.0
    %4657 = vmatprep.subr.mxu0 0.0
    %4658 = vmatpush1.msra.mxu0 0.0
    %4659 = vmatprep.subr.mxu0 0.0
    %4660 = vmatpush1.msra.mxu0 0.0
    %4661 = vmatprep.subr.mxu0 0.0
    %4662 = vmatpush1.msra.mxu0 0.0
    %4663 = vmatprep.subr.mxu0 0.0
    %4664 = vmatpush1.msra.mxu0 0.0
    %4665 = vmatprep.subr.mxu0 0.0
    %4666 = vmatpush1.msra.mxu0 0.0
    %4667 = vmatprep.subr.mxu0 0.0
    %4668 = vmatpush1.msra.mxu0 0.0
    %4669 = vmatprep.mubr.f32.mxu0 0.0
    %4670 = vmatmul.mubr.f32.gmra.mrb[0].mxu0 %v4248
    %v4671 = vpop.f32.mrb[0].mxu0
    %v4672 = vadd.f32 0.0, %v4671
    %v4673 = vpop.f32.mrb[0].mxu0
    %v4674 = vadd.f32 0.0, %v4673
    %4675 = vdwg.mxu0
    %4676 = vmatprep.subr.mxu0 %v96
    %4677 = vmatpush1.msra.mxu0 %v95
    %4678 = vmatprep.subr.mxu0 %v112
    %4679 = vmatpush1.msra.mxu0 %v111
    %4680 = vmatprep.subr.mxu0 %v128
    %4681 = vmatpush1.msra.mxu0 %v127
    %4682 = vmatprep.subr.mxu0 %v144
    %4683 = vmatpush1.msra.mxu0 %v143
    %4684 = vmatprep.subr.mxu0 0.0
    %4685 = vmatpush1.msra.mxu0 0.0
    %4686 = vmatprep.subr.mxu0 0.0
    %4687 = vmatpush1.msra.mxu0 0.0
    %4688 = vmatprep.subr.mxu0 0.0
    %4689 = vmatpush1.msra.mxu0 0.0
    %4690 = vmatprep.subr.mxu0 0.0
    %4691 = vmatpush1.msra.mxu0 0.0
    %4692 = vmatprep.subr.mxu0 0.0
    %4693 = vmatpush1.msra.mxu0 0.0
    %4694 = vmatprep.subr.mxu0 0.0
    %4695 = vmatpush1.msra.mxu0 0.0
    %4696 = vmatprep.subr.mxu0 0.0
    %4697 = vmatpush1.msra.mxu0 0.0
    %4698 = vmatprep.subr.mxu0 0.0
    %4699 = vmatpush1.msra.mxu0 0.0
    %4700 = vmatprep.subr.mxu0 0.0
    %4701 = vmatpush1.msra.mxu0 0.0
    %4702 = vmatprep.subr.mxu0 0.0
    %4703 = vmatpush1.msra.mxu0 0.0
    %4704 = vmatprep.subr.mxu0 0.0
    %4705 = vmatpush1.msra.mxu0 0.0
    %4706 = vmatprep.subr.mxu0 0.0
    %4707 = vmatpush1.msra.mxu0 0.0
    %4708 = vmatprep.subr.mxu0 0.0
    %4709 = vmatpush1.msra.mxu0 0.0
    %4710 = vmatprep.subr.mxu0 0.0
    %4711 = vmatpush1.msra.mxu0 0.0
    %4712 = vmatprep.subr.mxu0 0.0
    %4713 = vmatpush1.msra.mxu0 0.0
    %4714 = vmatprep.subr.mxu0 0.0
    %4715 = vmatpush1.msra.mxu0 0.0
    %4716 = vmatprep.subr.mxu0 0.0
    %4717 = vmatpush1.msra.mxu0 0.0
    %4718 = vmatprep.subr.mxu0 0.0
    %4719 = vmatpush1.msra.mxu0 0.0
    %4720 = vmatprep.subr.mxu0 0.0
    %4721 = vmatpush1.msra.mxu0 0.0
    %4722 = vmatprep.subr.mxu0 0.0
    %4723 = vmatpush1.msra.mxu0 0.0
    %4724 = vmatprep.subr.mxu0 0.0
    %4725 = vmatpush1.msra.mxu0 0.0
    %4726 = vmatprep.subr.mxu0 0.0
    %4727 = vmatpush1.msra.mxu0 0.0
    %4728 = vmatprep.subr.mxu0 0.0
    %4729 = vmatpush1.msra.mxu0 0.0
    %4730 = vmatprep.subr.mxu0 0.0
    %4731 = vmatpush1.msra.mxu0 0.0
    %4732 = vmatprep.subr.mxu0 0.0
    %4733 = vmatpush1.msra.mxu0 0.0
    %4734 = vmatprep.subr.mxu0 0.0
    %4735 = vmatpush1.msra.mxu0 0.0
    %4736 = vmatprep.subr.mxu0 0.0
    %4737 = vmatpush1.msra.mxu0 0.0
    %4738 = vmatprep.subr.mxu0 0.0
    %4739 = vmatpush1.msra.mxu0 0.0
    %4740 = vmatprep.mubr.f32.mxu0 0.0
    %4741 = vmatmul.mubr.f32.gmra.mrb[0].mxu0 %v4248
    %v4742 = vpop.f32.mrb[0].mxu0
    %v4743 = vadd.f32 0.0, %v4742
    %v4744 = vpop.f32.mrb[0].mxu0
    %v4745 = vadd.f32 0.0, %v4744
    %4746 = vdwg.mxu0
    %4747 = vmatprep.subr.mxu0 %v98
    %4748 = vmatpush1.msra.mxu0 %v97
    %4749 = vmatprep.subr.mxu0 %v114
    %4750 = vmatpush1.msra.mxu0 %v113
    %4751 = vmatprep.subr.mxu0 %v130
    %4752 = vmatpush1.msra.mxu0 %v129
    %4753 = vmatprep.subr.mxu0 %v146
    %4754 = vmatpush1.msra.mxu0 %v145
    %4755 = vmatprep.subr.mxu0 0.0
    %4756 = vmatpush1.msra.mxu0 0.0
    %4757 = vmatprep.subr.mxu0 0.0
    %4758 = vmatpush1.msra.mxu0 0.0
    %4759 = vmatprep.subr.mxu0 0.0
    %4760 = vmatpush1.msra.mxu0 0.0
    %4761 = vmatprep.subr.mxu0 0.0
    %4762 = vmatpush1.msra.mxu0 0.0
    %4763 = vmatprep.subr.mxu0 0.0
    %4764 = vmatpush1.msra.mxu0 0.0
    %4765 = vmatprep.subr.mxu0 0.0
    %4766 = vmatpush1.msra.mxu0 0.0
    %4767 = vmatprep.subr.mxu0 0.0
    %4768 = vmatpush1.msra.mxu0 0.0
    %4769 = vmatprep.subr.mxu0 0.0
    %4770 = vmatpush1.msra.mxu0 0.0
    %4771 = vmatprep.subr.mxu0 0.0
    %4772 = vmatpush1.msra.mxu0 0.0
    %4773 = vmatprep.subr.mxu0 0.0
    %4774 = vmatpush1.msra.mxu0 0.0
    %4775 = vmatprep.subr.mxu0 0.0
    %4776 = vmatpush1.msra.mxu0 0.0
    %4777 = vmatprep.subr.mxu0 0.0
    %4778 = vmatpush1.msra.mxu0 0.0
    %4779 = vmatprep.subr.mxu0 0.0
    %4780 = vmatpush1.msra.mxu0 0.0
    %4781 = vmatprep.subr.mxu0 0.0
    %4782 = vmatpush1.msra.mxu0 0.0
    %4783 = vmatprep.subr.mxu0 0.0
    %4784 = vmatpush1.msra.mxu0 0.0
    %4785 = vmatprep.subr.mxu0 0.0
    %4786 = vmatpush1.msra.mxu0 0.0
    %4787 = vmatprep.subr.mxu0 0.0
    %4788 = vmatpush1.msra.mxu0 0.0
    %4789 = vmatprep.subr.mxu0 0.0
    %4790 = vmatpush1.msra.mxu0 0.0
    %4791 = vmatprep.subr.mxu0 0.0
    %4792 = vmatpush1.msra.mxu0 0.0
    %4793 = vmatprep.subr.mxu0 0.0
    %4794 = vmatpush1.msra.mxu0 0.0
    %4795 = vmatprep.subr.mxu0 0.0
    %4796 = vmatpush1.msra.mxu0 0.0
    %4797 = vmatprep.subr.mxu0 0.0
    %4798 = vmatpush1.msra.mxu0 0.0
    %4799 = vmatprep.subr.mxu0 0.0
    %4800 = vmatpush1.msra.mxu0 0.0
    %4801 = vmatprep.subr.mxu0 0.0
    %4802 = vmatpush1.msra.mxu0 0.0
    %4803 = vmatprep.subr.mxu0 0.0
    %4804 = vmatpush1.msra.mxu0 0.0
    %4805 = vmatprep.subr.mxu0 0.0
    %4806 = vmatpush1.msra.mxu0 0.0
    %4807 = vmatprep.subr.mxu0 0.0
    %4808 = vmatpush1.msra.mxu0 0.0
    %4809 = vmatprep.subr.mxu0 0.0
    %4810 = vmatpush1.msra.mxu0 0.0
    %4811 = vmatprep.mubr.f32.mxu0 0.0
    %4812 = vmatmul.mubr.f32.gmra.mrb[0].mxu0 %v4248
    %v4813 = vpop.f32.mrb[0].mxu0
    %v4814 = vadd.f32 0.0, %v4813
    %v4815 = vpop.f32.mrb[0].mxu0
    %v4816 = vadd.f32 0.0, %v4815
    %4817 = vdwg.mxu0
    %v4818 = vmul.f32 %v3746, %v4317
    %v4819 = vmul.f32 %v3748, %v4319
    %v4820 = vmul.f32 %v3817, %v4388
    %v4821 = vmul.f32 %v3819, %v4390
    %v4822 = vmul.f32 %v3888, %v4459
    %v4823 = vmul.f32 %v3890, %v4461
    %v4824 = vmul.f32 %v3959, %v4530
    %v4825 = vmul.f32 %v3961, %v4532
    %v4826 = vmul.f32 %v4030, %v4601
    %v4827 = vmul.f32 %v4032, %v4603
    %v4828 = vmul.f32 %v4101, %v4672
    %v4829 = vmul.f32 %v4103, %v4674
    %v4830 = vmul.f32 %v4172, %v4743
    %v4831 = vmul.f32 %v4174, %v4745
    %v4832 = vmul.f32 %v4243, %v4814
    %v4833 = vmul.f32 %v4245, %v4816
    %4834 = vst [vmem:[#allocation2] sm:$0xff] %v4818
    %4835 = vst [vmem:[#allocation2 + $0x8] sm:$0xff] %v4819
    %4836 = vst [vmem:[#allocation2 + $0x10] sm:$0xff] %v4820
    %4837 = vst [vmem:[#allocation2 + $0x18] sm:$0xff] %v4821
    %4838 = vst [vmem:[#allocation2 + $0x20] sm:$0xff] %v4822
    %4839 = vst [vmem:[#allocation2 + $0x28] sm:$0xff] %v4823
    %4840 = vst [vmem:[#allocation2 + $0x30] sm:$0xff] %v4824
    %4841 = vst [vmem:[#allocation2 + $0x38] sm:$0xff] %v4825
    %4842 = vst [vmem:[#allocation2 + $0x40] sm:$0xff] %v4826
    %4843 = vst [vmem:[#allocation2 + $0x48] sm:$0xff] %v4827
    %4844 = vst [vmem:[#allocation2 + $0x50] sm:$0xff] %v4828
    %4845 = vst [vmem:[#allocation2 + $0x58] sm:$0xff] %v4829
    %4846 = vst [vmem:[#allocation2 + $0x60] sm:$0xff] %v4830
    %4847 = vst [vmem:[#allocation2 + $0x68] sm:$0xff] %v4831
    %4848 = vst [vmem:[#allocation2 + $0x70] sm:$0xff] %v4832
    %4849 = vst [vmem:[#allocation2 + $0x78] sm:$0xff] %v4833
    // Predicated region
    $region34: #{tpu_custom_call.1} parent=1 // pred_check
      _
    $region35: #{tpu_custom_call.1} parent=1 // pred_check_branch
      %4851 = sbr.rel (0) target = $region37
    $region36: #{tpu_custom_call.1} parent=1 // pred_region
      %s4853 = ssub.s32 2048, 2048
      %4854 = vsyncadd [#allocation3], %s4853
      %s4856 = sshll.u32 [#allocation2], 4
      %s4857 = int_to_ptr.vmem [resolvable:$true] %s4856
      %4859 = dma.vmem_to_hbm [thread:$0]  %s4857, 2048, %s8, [#allocation3]
    $region37: #{tpu_custom_call.1} parent=1 // pred_fallthru
      _
    // Predicated region
    $region38: #{tpu_custom_call.1} parent=1 // pred_check
      _
    $region39: #{tpu_custom_call.1} parent=1 // pred_check_branch
      %4861 = sbr.rel (0) target = $region41
    $region40: #{tpu_custom_call.1} parent=1 // pred_region
      %s4863 = ssub.s32 128, 128
      %4864 = vsyncadd [#allocation5], %s4863
      %s4866 = sshll.u32 [#allocation4], 4
      %s4867 = int_to_ptr.vmem [resolvable:$true] %s4866
      %4869 = dma.vmem_to_hbm [thread:$0]  %s4867, 128, %s9, [#allocation5]
    $region41: #{tpu_custom_call.1} parent=1 // pred_fallthru
      _
    // Predicated region
    $region42: #{tpu_custom_call.1} parent=1 // pred_check
      _
    $region43: #{tpu_custom_call.1} parent=1 // pred_check_branch
      %4871 = sbr.rel (0) target = $region45
    $region44: #{tpu_custom_call.1} parent=1 // pred_region
      %4872 = dma.done [#allocation3], 2048
    $region45: #{tpu_custom_call.1} parent=1 // pred_fallthru
      _
    // Predicated region
    $region46: #{tpu_custom_call.1} parent=1 // pred_check
      _
    $region47: #{tpu_custom_call.1} parent=1 // pred_check_branch
      %4874 = sbr.rel (0) target = $region49
    $region48: #{tpu_custom_call.1} parent=1 // pred_region
      %4875 = dma.done [#allocation5], 128
    $region49: #{tpu_custom_call.1} parent=1 // pred_fallthru
      _
    %4876 = vsyncpa [#allocation3], 1
    %4877 = vsyncpa [#allocation5], 1

</llo_original>
